<compile_context>
chip_gen: v5e
topology: v5e:2x2
jax: 0.10.0
libtpu: 0.0.40
codegen_flags: <defaults>
</compile_context>

<pallas_src>
import functools

import jax
import jax.numpy as jnp
from jax.experimental import pallas as pl
from jax.experimental.pallas import tpu as pltpu

IN_DIM = 1280
HID_DIM = 640
OUT_DIM = 5
OUT_PAD = 128          # lane-dense padded output width (one full 128-lane vreg row)


def _round_up(n: int, m: int) -> int:
    return ((n + m - 1) // m) * m


def image_head_kernel(x_ref, w1_ref, b1_ref, w2_ref, b2_ref, o_ref):
    # x_ref : (TB, 1280) f32/bf16   w1_ref: (1280, 640) bf16   b1_ref: (1, 640) f32
    # w2_ref: (640, 128) f32 (zero-padded cols)                 b2_ref: (1, 128) f32
    # o_ref : (TB, 128) x.dtype
    xb = x_ref[...].astype(jnp.bfloat16)                       # in-kernel cast (VALU)
    h = jnp.dot(xb, w1_ref[...], preferred_element_type=jnp.float32)
    h = jnp.maximum(h + b1_ref[...], 0.0)                      # bias + ReLU in f32
    y = jnp.dot(h, w2_ref[...], preferred_element_type=jnp.float32)  # tiny, keep f32
    o_ref[...] = (y + b2_ref[...]).astype(o_ref.dtype)


def _resident_spec(shape):
    """Constant index_map -> fetched once and resident in VMEM across the grid.

    Request single-buffering when the installed JAX supports pipeline_mode; fall
    back (narrowly, construction-time only) to default double-buffering otherwise.
    """
    if hasattr(pl, "Buffered"):
        try:
            return pl.BlockSpec(shape, lambda i: (0, 0), pipeline_mode=pl.Buffered(1))
        except TypeError:
            pass
    return pl.BlockSpec(shape, lambda i: (0, 0))


@functools.lru_cache(maxsize=None)
def _build_call(tb: int, b_pad: int, out_dtype: str):
    return pl.pallas_call(
        image_head_kernel,
        out_shape=jax.ShapeDtypeStruct((b_pad, OUT_PAD), jnp.dtype(out_dtype)),
        grid_spec=pltpu.PrefetchScalarGridSpec(
            num_scalar_prefetch=0,
            grid=(b_pad // tb,),
            in_specs=[
                pl.BlockSpec((tb, IN_DIM), lambda i: (i, 0)),   # x tile (pipelined)
                _resident_spec((IN_DIM, HID_DIM)),              # W1 (bf16)
                _resident_spec((1, HID_DIM)),                   # b1 (f32)
                _resident_spec((HID_DIM, OUT_PAD)),             # W2 (f32, lane-padded)
                _resident_spec((1, OUT_PAD)),                   # b2 (f32, lane-padded)
            ],
            out_specs=pl.BlockSpec((tb, OUT_PAD), lambda i: (i, 0)),
        ),
        compiler_params=pltpu.CompilerParams(
            # Batch axis is embarrassingly parallel -> megacore sharding on v7x.
            dimension_semantics=("parallel",),
            vmem_limit_bytes=32 * 1024 * 1024,
        ),
    )


def prepare_params(w1, b1, w2, b2):
    """One-time parameter prep (hoisted out of the forward path).

    w1: (1280, 640), b1: (640,), w2: (640, 5), b2: (5,)  [x @ W convention]
    """
    w1b = w1.astype(jnp.bfloat16)
    b1f = b1.reshape(1, HID_DIM).astype(jnp.float32)
    # Zero-pad the 5-wide projection to 128 lanes -> lane-dense (unmasked) stores.
    w2p = jnp.zeros((HID_DIM, OUT_PAD), jnp.float32).at[:, :OUT_DIM].set(
        w2.astype(jnp.float32))
    b2p = jnp.zeros((1, OUT_PAD), jnp.float32).at[:, :OUT_DIM].set(
        b2.astype(jnp.float32))
    return w1b, b1f, w2p, b2p


def _choose_tb(B: int) -> int:
    """Batch tile: >= 4 grid steps for moderate B, tiles a multiple of 128 rows
    (never below 128 except for tiny batches), capped at 1024 for huge B."""
    if B <= 256:
        return min(128, _round_up(B, 8))
    return max(128, min(1024, _round_up(pl.cdiv(B, 8), 128)))


def image_head_forward(x, params, *, tb=None):
    """x: (B, 1280) float; params from prepare_params(). Returns (B, 5) in x.dtype."""
    w1b, b1f, w2p, b2p = params
    B = x.shape[0]

    tb_eff = tb if tb is not None else _choose_tb(B)
    tb_eff = min(tb_eff, _round_up(B, 8))
    b_pad = _round_up(B, tb_eff)

    xp = x if b_pad == B else jnp.pad(x, ((0, b_pad - B), (0, 0)))

    call = _build_call(tb_eff, b_pad, jnp.dtype(x.dtype).name)
    out = call(xp, w1b, b1f, w2p, b2p)
    return out[:B, :OUT_DIM]


def reference_forward(x, w1, b1, w2, b2):
    h = jnp.maximum(x @ w1 + b1, 0.0)
    return h @ w2 + b2


if __name__ == "__main__":
    key = jax.random.PRNGKey(0)
    k_x, k_w1, k_b1, k_w2, k_b2 = jax.random.split(key, 5)

    # Feature dims are fixed by the module (1280 -> 640 -> 5); batch kept modest.
    # B=512 with the auto-chosen tb=128 -> grid of length 4 (>= 2 steps per v7x core).
    B = 512
    x = jax.random.normal(k_x, (B, IN_DIM), dtype=jnp.float32)

    # nn.Linear-style init: U(-1/sqrt(fan_in), 1/sqrt(fan_in)); weights stored
    # pre-transposed as [in, out] for the x @ W convention.
    bound1 = 1.0 / (IN_DIM ** 0.5)
    bound2 = 1.0 / (HID_DIM ** 0.5)
    w1 = jax.random.uniform(k_w1, (IN_DIM, HID_DIM), jnp.float32, -bound1, bound1)
    b1 = jax.random.uniform(k_b1, (HID_DIM,), jnp.float32, -bound1, bound1)
    w2 = jax.random.uniform(k_w2, (HID_DIM, OUT_DIM), jnp.float32, -bound2, bound2)
    b2 = jax.random.uniform(k_b2, (OUT_DIM,), jnp.float32, -bound2, bound2)

    params = jax.block_until_ready(prepare_params(w1, b1, w2, b2))  # one-time prep

    out = jax.block_until_ready(image_head_forward(x, params))
    ref = reference_forward(x, w1, b1, w2, b2)
    assert out.shape == (B, OUT_DIM)
    assert out.dtype == x.dtype
    # bf16 first matmul with f32 accumulation vs. a pure-f32 reference.
    assert jnp.max(jnp.abs(out - ref)) < 5e-2, "mismatch vs reference"

    # Also exercise the small / non-multiple batch path (padding + single tile).
    out_small = jax.block_until_ready(image_head_forward(x[:5], params))
    ref_small = reference_forward(x[:5], w1, b1, w2, b2)
    assert out_small.shape == (5, OUT_DIM)
    assert jnp.max(jnp.abs(out_small - ref_small)) < 5e-2, "mismatch (small batch)"

    print("KERNEL_OK")
</pallas_src>

<mosaic_0001>
module attributes {stable_mosaic.version = 11 : i64} {
  func.func @image_head_kernel(%arg0: i32, %arg1: memref<128x1280xf32, #tpu.memory_space<vmem>>, %arg2: memref<1280x640xbf16, #tpu.memory_space<vmem>>, %arg3: memref<1x640xf32, #tpu.memory_space<vmem>>, %arg4: memref<640x128xf32, #tpu.memory_space<vmem>>, %arg5: memref<1x128xf32, #tpu.memory_space<vmem>>, %arg6: memref<128x128xf32, #tpu.memory_space<vmem>>) attributes {dimension_semantics = [#tpu.dimension_semantics<parallel>], iteration_bounds = array<i64: 4>, scalar_prefetch = 0 : i64, scratch_operands = 0 : i64, tpu.core_type = #tpu.core_type<tc>, window_params = [{transform_indices = @transform_0, window_bounds = array<i64: 128, 1280>}, {pipeline_mode = #tpu.pipeline_mode<synchronous>, transform_indices = @transform_1, window_bounds = array<i64: 1280, 640>}, {pipeline_mode = #tpu.pipeline_mode<synchronous>, transform_indices = @transform_2, window_bounds = array<i64: 1, 640>}, {pipeline_mode = #tpu.pipeline_mode<synchronous>, transform_indices = @transform_3, window_bounds = array<i64: 640, 128>}, {pipeline_mode = #tpu.pipeline_mode<synchronous>, transform_indices = @transform_4, window_bounds = array<i64: 1, 128>}, {transform_indices = @transform_5, window_bounds = array<i64: 128, 128>}]} {
    %c0 = arith.constant 0 : index
    %c0_0 = arith.constant 0 : index
    %0 = vector.load %arg1[%c0, %c0_0] : memref<128x1280xf32, #tpu.memory_space<vmem>>, vector<128x1280xf32>
    %1 = arith.truncf %0 : vector<128x1280xf32> to vector<128x1280xbf16>
    %c0_1 = arith.constant 0 : index
    %c0_2 = arith.constant 0 : index
    %2 = vector.load %arg2[%c0_1, %c0_2] : memref<1280x640xbf16, #tpu.memory_space<vmem>>, vector<1280x640xbf16>
    %cst = arith.constant dense<0.000000e+00> : vector<128x640xf32>
    %3 = tpu.matmul %1, %2, %cst {dimension_numbers = #tpu.dot_dimension_numbers<[1], [0], [0], [1], [0, 0, 1, 1], [], []>} : vector<128x1280xbf16>, vector<1280x640xbf16>, vector<128x640xf32> -> vector<128x640xf32>
    %c0_3 = arith.constant 0 : index
    %c0_4 = arith.constant 0 : index
    %4 = vector.load %arg3[%c0_3, %c0_4] : memref<1x640xf32, #tpu.memory_space<vmem>>, vector<1x640xf32>
    %5 = vector.broadcast %4 : vector<1x640xf32> to vector<128x640xf32>
    %6 = arith.addf %3, %5 : vector<128x640xf32>
    %cst_5 = arith.constant 0.000000e+00 : f32
    %7 = vector.broadcast %cst_5 : f32 to vector<128x640xf32>
    %8 = arith.maximumf %6, %7 : vector<128x640xf32>
    %c0_6 = arith.constant 0 : index
    %c0_7 = arith.constant 0 : index
    %9 = vector.load %arg4[%c0_6, %c0_7] : memref<640x128xf32, #tpu.memory_space<vmem>>, vector<640x128xf32>
    %cst_8 = arith.constant dense<0.000000e+00> : vector<128x128xf32>
    %10 = tpu.matmul %8, %9, %cst_8 {dimension_numbers = #tpu.dot_dimension_numbers<[1], [0], [0], [1], [0, 0, 1, 1], [], []>} : vector<128x640xf32>, vector<640x128xf32>, vector<128x128xf32> -> vector<128x128xf32>
    %c0_9 = arith.constant 0 : index
    %c0_10 = arith.constant 0 : index
    %11 = vector.load %arg5[%c0_9, %c0_10] : memref<1x128xf32, #tpu.memory_space<vmem>>, vector<1x128xf32>
    %12 = vector.broadcast %11 : vector<1x128xf32> to vector<128x128xf32>
    %13 = arith.addf %10, %12 : vector<128x128xf32>
    %c0_11 = arith.constant 0 : index
    %c0_12 = arith.constant 0 : index
    %14 = vector.load %arg6[%c0_11, %c0_12] : memref<128x128xf32, #tpu.memory_space<vmem>>, vector<128x128xf32>
    tpu.vector_store %arg6[%c0_11, %c0_12], %13 {strides = array<i32>} : memref<128x128xf32, #tpu.memory_space<vmem>>, vector<128x128xf32>,
    return
  }
  func.func @transform_0(%arg0: i32) -> (i32, i32) {
    %c0_i32 = arith.constant 0 : i32
    %c0_i32_0 = arith.constant 0 : i32
    return %arg0, %c0_i32 : i32, i32
  }
  func.func @transform_1(%arg0: i32) -> (i32, i32) {
    %c0_i32 = arith.constant 0 : i32
    %c0_i32_0 = arith.constant 0 : i32
    %c0_i32_1 = arith.constant 0 : i32
    return %c0_i32, %c0_i32_0 : i32, i32
  }
  func.func @transform_2(%arg0: i32) -> (i32, i32) {
    %c0_i32 = arith.constant 0 : i32
    %c0_i32_0 = arith.constant 0 : i32
    %c0_i32_1 = arith.constant 0 : i32
    return %c0_i32, %c0_i32_0 : i32, i32
  }
  func.func @transform_3(%arg0: i32) -> (i32, i32) {
    %c0_i32 = arith.constant 0 : i32
    %c0_i32_0 = arith.constant 0 : i32
    %c0_i32_1 = arith.constant 0 : i32
    return %c0_i32, %c0_i32_0 : i32, i32
  }
  func.func @transform_4(%arg0: i32) -> (i32, i32) {
    %c0_i32 = arith.constant 0 : i32
    %c0_i32_0 = arith.constant 0 : i32
    %c0_i32_1 = arith.constant 0 : i32
    return %c0_i32, %c0_i32_0 : i32, i32
  }
  func.func @transform_5(%arg0: i32) -> (i32, i32) {
    %c0_i32 = arith.constant 0 : i32
    %c0_i32_0 = arith.constant 0 : i32
    return %arg0, %c0_i32 : i32, i32
  }
}

</mosaic_0001>

<llo_original>
// kernel: tpu_custom_call.1
$region0: #{tpu_custom_call.1}
  #allocation0 [shape = 'u32[]', space=smem, size = 0x4, offset = 0x4, fixed_abs, tag = 'smem constant byte address 0x4 - core index']
  #allocation1 [shape = 'u32[72,128]{1,0:T(1,128)}', space=vmem, size = 0x9000, scoped, tag = 'internal scratch']
  %s0 = inlined_call_operand.hbm [shape: f32[512,1280], index: 0, kind: input, shape index: {}]
  %s1 = inlined_call_operand.hbm [shape: bf16[1280,640], index: 1, kind: input, shape index: {}]
  %s2 = inlined_call_operand.hbm [shape: f32[1,640], index: 2, kind: input, shape index: {}]
  %s3 = inlined_call_operand.hbm [shape: f32[640,128], index: 3, kind: input, shape index: {}]
  %s4 = inlined_call_operand.hbm [shape: f32[1,128], index: 4, kind: input, shape index: {}]
  %s5 = inlined_call_operand.hbm [shape: f32[512,128], index: 5, kind: output, shape index: {}]
  %s6 = sld [smem:[#allocation0]]
  $region73: #{tpu_custom_call.1} parent=0
    _
  %s8 = ssub.s32 1, %s6
  %s9 = scalar_select 0, %s8, %s6
  $region1: #{tpu_custom_call.1} parent=0
    #allocation2 [shape = 'u8[1310720]{0}', space=vmem, size = 0x140000, scoped, tag = 'input window, operand 0']
    #allocation3 [shape = 's32[2]{0}', space=sflag, size = 0x8, scoped, tag = 'scoped memory for tpu_custom_call.1']
    #allocation4 [shape = 's32[2]{0}', space=sflag, size = 0x8, scoped, tag = 'scoped memory for tpu_custom_call.1']
    #allocation5 [shape = 'u8[1638400]{0}', space=vmem, size = 0x190000, scoped, tag = 'input window, operand 1, single buffered']
    #allocation6 [shape = 's32[1]{0}', space=sflag, size = 0x4, scoped, tag = 'scoped memory for tpu_custom_call.1']
    #allocation7 [shape = 'u8[2560]{0}', space=vmem, size = 0xc00, scoped, tag = 'input window, operand 2, single buffered']
    #allocation8 [shape = 'u8[327680]{0}', space=vmem, size = 0x50000, scoped, tag = 'input window, operand 3, single buffered']
    #allocation9 [shape = 's32[1]{0}', space=sflag, size = 0x4, scoped, tag = 'scoped memory for tpu_custom_call.1']
    #allocation10 [shape = 'u8[512]{0}', space=vmem, size = 0x400, scoped, tag = 'input window, operand 4, single buffered']
    #allocation11 [shape = 'u8[131072]{0}', space=vmem, size = 0x20000, scoped, tag = 'output window, operand 0']
    %10 = vsyncpa [#allocation3], 0
    %s11 = scalar_lea.sflag [#allocation3], 1
    %12 = vsyncpa %s11, 0
    %13 = vsyncpa [#allocation6], 0
    %14 = vsyncpa [#allocation9], 0
    %15 = vsyncpa [#allocation4], 0
    %s16 = scalar_lea.sflag [#allocation4], 1
    %17 = vsyncpa %s16, 0
    loop: start=0, step=1, limit=6
    $region2: #{tpu_custom_call.1} parent=1 // loop_pre_header
      _
    $region3: #{tpu_custom_call.1} parent=1 // loop_header
      %s19 = sphi 0, %s23
      %p20 = scmp.ge.s32.totalorder %s19, 6
      %s29 = sphi 0, %s31
      %s32 = sphi 0, %s29
      %s33 = sphi 0, %s32
      %s49 = sphi 0, %s33
      %s53 = sphi 0, %s53
      %s55 = sphi 0, %s53
      %s56 = sphi 0, %s55
      %s70 = sphi 0, %s56
      %s74 = sphi 0, %s74
      %s76 = sphi 0, %s74
      %s77 = sphi 0, %s76
      %s91 = sphi 0, %s77
      %s95 = sphi 0, %s95
      %s97 = sphi 0, %s95
      %s98 = sphi 0, %s97
      %s112 = sphi 0, %s98
      %s116 = sphi 0, %s116
      %s118 = sphi 0, %s116
      %s119 = sphi 0, %s118
      %s133 = sphi 0, %s119
      %s139 = sphi 0, %s141
      %s142 = sphi 0, %s139
      %s143 = sphi 0, %s142
      %s159 = sphi 0, %s143
    $region4: #{tpu_custom_call.1} parent=1 // loop_header_branch
      %22 = sbr.rel (%p20) target = $region8
    $region5: #{tpu_custom_call.1} parent=1 // loop_body
      %s24 = ssub.s32 %s19, 1
      %s25 = ssub.s32 %s19, 2
      %s26 = sadd.s32 %s19, 1
      %s27 = ssub.s32 %s19, %s26
      %p28 = scmp.eq.s32.totalorder %s27, 0
      %s30 = sadd.s32 %s29, 1
      %s31 = scalar_select %p28, %s29, %s30
      %p34 = pneg %p28
      %p35 = scmp.eq.s32.totalorder %s19, 3
      %p36 = por %p34, %p35
      %p37 = scmp.ne.s32.totalorder %s29, %s32
      %p38 = scmp.eq.s32.totalorder %s19, 0
      %p39 = por %p37, %p38
      %p40 = scmp.ne.s32.totalorder %s29, %s32
      %p41 = scmp.eq.s32.totalorder %s24, 3
      %p42 = por %p40, %p41
      %p43 = scmp.ne.s32.totalorder %s32, %s33
      %p44 = scmp.eq.s32.totalorder %s24, 0
      %p45 = por %p43, %p44
      %p46 = scmp.ne.s32.totalorder %s32, %s33
      %p47 = scmp.eq.s32.totalorder %s25, 3
      %p48 = por %p46, %p47
      %p50 = scmp.ne.s32.totalorder %s33, %s49
      %p51 = scmp.eq.s32.totalorder %s25, 0
      %p52 = por %p50, %p51
      %s54 = sadd.s32 %s53, 1
      %p57 = scmp.eq.s32.totalorder %s19, 3
      %p58 = scmp.ne.s32.totalorder %s53, %s55
      %p59 = scmp.eq.s32.totalorder %s19, 0
      %p60 = por %p58, %p59
      %p61 = scmp.ne.s32.totalorder %s53, %s55
      %p62 = scmp.eq.s32.totalorder %s24, 3
      %p63 = por %p61, %p62
      %p64 = scmp.ne.s32.totalorder %s55, %s56
      %p65 = scmp.eq.s32.totalorder %s24, 0
      %p66 = por %p64, %p65
      %p67 = scmp.ne.s32.totalorder %s55, %s56
      %p68 = scmp.eq.s32.totalorder %s25, 3
      %p69 = por %p67, %p68
      %p71 = scmp.ne.s32.totalorder %s56, %s70
      %p72 = scmp.eq.s32.totalorder %s25, 0
      %p73 = por %p71, %p72
      %s75 = sadd.s32 %s74, 1
      %p78 = scmp.eq.s32.totalorder %s19, 3
      %p79 = scmp.ne.s32.totalorder %s74, %s76
      %p80 = scmp.eq.s32.totalorder %s19, 0
      %p81 = por %p79, %p80
      %p82 = scmp.ne.s32.totalorder %s74, %s76
      %p83 = scmp.eq.s32.totalorder %s24, 3
      %p84 = por %p82, %p83
      %p85 = scmp.ne.s32.totalorder %s76, %s77
      %p86 = scmp.eq.s32.totalorder %s24, 0
      %p87 = por %p85, %p86
      %p88 = scmp.ne.s32.totalorder %s76, %s77
      %p89 = scmp.eq.s32.totalorder %s25, 3
      %p90 = por %p88, %p89
      %p92 = scmp.ne.s32.totalorder %s77, %s91
      %p93 = scmp.eq.s32.totalorder %s25, 0
      %p94 = por %p92, %p93
      %s96 = sadd.s32 %s95, 1
      %p99 = scmp.eq.s32.totalorder %s19, 3
      %p100 = scmp.ne.s32.totalorder %s95, %s97
      %p101 = scmp.eq.s32.totalorder %s19, 0
      %p102 = por %p100, %p101
      %p103 = scmp.ne.s32.totalorder %s95, %s97
      %p104 = scmp.eq.s32.totalorder %s24, 3
      %p105 = por %p103, %p104
      %p106 = scmp.ne.s32.totalorder %s97, %s98
      %p107 = scmp.eq.s32.totalorder %s24, 0
      %p108 = por %p106, %p107
      %p109 = scmp.ne.s32.totalorder %s97, %s98
      %p110 = scmp.eq.s32.totalorder %s25, 3
      %p111 = por %p109, %p110
      %p113 = scmp.ne.s32.totalorder %s98, %s112
      %p114 = scmp.eq.s32.totalorder %s25, 0
      %p115 = por %p113, %p114
      %s117 = sadd.s32 %s116, 1
      %p120 = scmp.eq.s32.totalorder %s19, 3
      %p121 = scmp.ne.s32.totalorder %s116, %s118
      %p122 = scmp.eq.s32.totalorder %s19, 0
      %p123 = por %p121, %p122
      %p124 = scmp.ne.s32.totalorder %s116, %s118
      %p125 = scmp.eq.s32.totalorder %s24, 3
      %p126 = por %p124, %p125
      %p127 = scmp.ne.s32.totalorder %s118, %s119
      %p128 = scmp.eq.s32.totalorder %s24, 0
      %p129 = por %p127, %p128
      %p130 = scmp.ne.s32.totalorder %s118, %s119
      %p131 = scmp.eq.s32.totalorder %s25, 3
      %p132 = por %p130, %p131
      %p134 = scmp.ne.s32.totalorder %s119, %s133
      %p135 = scmp.eq.s32.totalorder %s25, 0
      %p136 = por %p134, %p135
      %s137 = ssub.s32 %s19, %s26
      %p138 = scmp.eq.s32.totalorder %s137, 0
      %s140 = sadd.s32 %s139, 1
      %s141 = scalar_select %p138, %s139, %s140
      %p144 = pneg %p138
      %p145 = scmp.eq.s32.totalorder %s19, 3
      %p146 = por %p144, %p145
      %p147 = scmp.ne.s32.totalorder %s139, %s142
      %p148 = scmp.eq.s32.totalorder %s19, 0
      %p149 = por %p147, %p148
      %p150 = scmp.ne.s32.totalorder %s139, %s142
      %p151 = scmp.eq.s32.totalorder %s24, 3
      %p152 = por %p150, %p151
      %p153 = scmp.ne.s32.totalorder %s142, %s143
      %p154 = scmp.eq.s32.totalorder %s24, 0
      %p155 = por %p153, %p154
      %p156 = scmp.ne.s32.totalorder %s142, %s143
      %p157 = scmp.eq.s32.totalorder %s25, 3
      %p158 = por %p156, %p157
      %p160 = scmp.ne.s32.totalorder %s143, %s159
      %p161 = scmp.eq.s32.totalorder %s25, 0
      %p162 = por %p160, %p161
      %p163 = scmp.le.s32.totalorder 1, %s19
      %p164 = scmp.lt.s32.totalorder %s19, 5
      %p165 = pnand %p163, %p164
      %p166 = pneg %p165
      // Predicated region
      $region9: #{tpu_custom_call.1} parent=5 // pred_check
        _
      $region10: #{tpu_custom_call.1} parent=5 // pred_check_branch
        %168 = sbr.rel (%p165) target = $region12
      $region11: #{tpu_custom_call.1} parent=5 // pred_region
        %s169 = ssub.s32 %s19, 1
        // Predicated region
        $region13: #{tpu_custom_call.1} parent=11 // pred_check
          %p170 = pneg %p66
        $region14: #{tpu_custom_call.1} parent=11 // pred_check_branch
          %172 = sbr.rel (%p170) target = $region16
        $region15: #{tpu_custom_call.1} parent=11 // pred_region
          %174 = vsyncadd [#allocation6], 0
          %s175 = sshll.u32 %s1, 4
          %s176 = int_to_ptr.hbm [resolvable:$true] %s175
          %s177 = sshll.u32 [#allocation5], 4
          %s178 = int_to_ptr.vmem [resolvable:$true] %s177
          %183 = dma.hbm_to_vmem [thread:$0]  %s176, 51200, %s178, [#allocation6], 320, 320, 20
        $region16: #{tpu_custom_call.1} parent=11 // pred_fallthru
          _
        // Predicated region
        $region17: #{tpu_custom_call.1} parent=11 // pred_check
          %p184 = pneg %p87
        $region18: #{tpu_custom_call.1} parent=11 // pred_check_branch
          %186 = sbr.rel (%p184) target = $region20
        $region19: #{tpu_custom_call.1} parent=11 // pred_region
          %188 = vsyncadd [#allocation6], 0
          %s190 = sshll.u32 %s2, 4
          %s191 = int_to_ptr.hbm [resolvable:$true] %s190
          %s192 = sshll.u32 [#allocation7], 4
          %s193 = int_to_ptr.vmem [resolvable:$true] %s192
          %195 = dma.hbm_to_vmem [thread:$0]  %s191, 80, %s193, [#allocation6]
        $region20: #{tpu_custom_call.1} parent=11 // pred_fallthru
          _
        // Predicated region
        $region21: #{tpu_custom_call.1} parent=11 // pred_check
          %p196 = pneg %p108
        $region22: #{tpu_custom_call.1} parent=11 // pred_check_branch
          %198 = sbr.rel (%p196) target = $region24
        $region23: #{tpu_custom_call.1} parent=11 // pred_region
          %200 = vsyncadd [#allocation9], 0
          %s201 = sshll.u32 %s3, 4
          %s202 = int_to_ptr.hbm [resolvable:$true] %s201
          %s203 = sshll.u32 [#allocation8], 4
          %s204 = int_to_ptr.vmem [resolvable:$true] %s203
          %209 = dma.hbm_to_vmem [thread:$0]  %s202, 10240, %s204, [#allocation9], 128, 128, 8
        $region24: #{tpu_custom_call.1} parent=11 // pred_fallthru
          _
        // Predicated region
        $region25: #{tpu_custom_call.1} parent=11 // pred_check
          %p210 = pneg %p129
        $region26: #{tpu_custom_call.1} parent=11 // pred_check_branch
          %212 = sbr.rel (%p210) target = $region28
        $region27: #{tpu_custom_call.1} parent=11 // pred_region
          %214 = vsyncadd [#allocation9], 0
          %s216 = sshll.u32 %s4, 4
          %s217 = int_to_ptr.hbm [resolvable:$true] %s216
          %s218 = sshll.u32 [#allocation10], 4
          %s219 = int_to_ptr.vmem [resolvable:$true] %s218
          %221 = dma.hbm_to_vmem [thread:$0]  %s217, 16, %s219, [#allocation9]
        $region28: #{tpu_custom_call.1} parent=11 // pred_fallthru
          _
      $region12: #{tpu_custom_call.1} parent=5 // pred_fallthru
        _
      %p222 = scmp.lt.s32.totalorder %s19, 4
      // Predicated region
      $region29: #{tpu_custom_call.1} parent=5 // pred_check
        %p223 = pneg %p222
      $region30: #{tpu_custom_call.1} parent=5 // pred_check_branch
        %225 = sbr.rel (%p223) target = $region32
      $region31: #{tpu_custom_call.1} parent=5 // pred_region
        // Predicated region
        $region33: #{tpu_custom_call.1} parent=31 // pred_check
          %p226 = pneg %p39
        $region34: #{tpu_custom_call.1} parent=31 // pred_check_branch
          %228 = sbr.rel (%p226) target = $region36
        $region35: #{tpu_custom_call.1} parent=31 // pred_region
          %s229 = sand.u32 %s29, 1
          %s230 = scalar_lea.sflag [#allocation3], %s229
          %s231 = sand.u32 %s29, 1
          %s232 = smul.addr %s231, 1280
          %s233 = scalar_lea.vmem [#allocation2], %s232
          %s234 = smul.u32 16, %s19
          %236 = vsyncadd %s230, 0
          %s237 = smul.addr %s234, 10
          %s238 = smul.addr %s237, 8
          %s239 = scalar_lea.hbm %s0, %s238
          %s240 = sshll.u32 %s239, 4
          %s241 = int_to_ptr.hbm [resolvable:$true] %s240
          %s242 = sshll.u32 %s233, 4
          %s243 = int_to_ptr.vmem [resolvable:$true] %s242
          %248 = dma.hbm_to_vmem [thread:$0]  %s241, 20480, %s243, %s230, 1280, 1280, 80
        $region36: #{tpu_custom_call.1} parent=31 // pred_fallthru
          _
      $region32: #{tpu_custom_call.1} parent=5 // pred_fallthru
        _
      %p249 = scmp.le.s32.totalorder 1, %s19
      %p250 = scmp.lt.s32.totalorder %s19, 5
      %p251 = pnand %p249, %p250
      %p252 = pneg %p251
      // Predicated region
      $region37: #{tpu_custom_call.1} parent=5 // pred_check
        _
      $region38: #{tpu_custom_call.1} parent=5 // pred_check_branch
        %254 = sbr.rel (%p251) target = $region40
      $region39: #{tpu_custom_call.1} parent=5 // pred_region
        %s255 = ssub.s32 %s19, 1
        %s256 = sand.u32 %s32, 1
        %s257 = scalar_lea.sflag [#allocation3], %s256
        %s258 = sand.u32 %s32, 1
        %s259 = smul.addr %s258, 1280
        %s260 = scalar_lea.vmem [#allocation2], %s259
        // Predicated region
        $region41: #{tpu_custom_call.1} parent=39 // pred_check
          %p261 = pneg %p45
        $region42: #{tpu_custom_call.1} parent=39 // pred_check_branch
          %263 = sbr.rel (%p261) target = $region44
        $region43: #{tpu_custom_call.1} parent=39 // pred_region
          %265 = dma.done %s257, 20480
        $region44: #{tpu_custom_call.1} parent=39 // pred_fallthru
          _
        // Predicated region
        $region45: #{tpu_custom_call.1} parent=39 // pred_check
          %p266 = pneg %p66
        $region46: #{tpu_custom_call.1} parent=39 // pred_check_branch
          %268 = sbr.rel (%p266) target = $region48
        $region47: #{tpu_custom_call.1} parent=39 // pred_region
          %270 = dma.done [#allocation6], 51200
        $region48: #{tpu_custom_call.1} parent=39 // pred_fallthru
          _
        // Predicated region
        $region49: #{tpu_custom_call.1} parent=39 // pred_check
          %p271 = pneg %p87
        $region50: #{tpu_custom_call.1} parent=39 // pred_check_branch
          %273 = sbr.rel (%p271) target = $region52
        $region51: #{tpu_custom_call.1} parent=39 // pred_region
          %275 = dma.done [#allocation6], 80
        $region52: #{tpu_custom_call.1} parent=39 // pred_fallthru
          _
        // Predicated region
        $region53: #{tpu_custom_call.1} parent=39 // pred_check
          %p276 = pneg %p108
        $region54: #{tpu_custom_call.1} parent=39 // pred_check_branch
          %278 = sbr.rel (%p276) target = $region56
        $region55: #{tpu_custom_call.1} parent=39 // pred_region
          %280 = dma.done [#allocation9], 10240
        $region56: #{tpu_custom_call.1} parent=39 // pred_fallthru
          _
        // Predicated region
        $region57: #{tpu_custom_call.1} parent=39 // pred_check
          %p281 = pneg %p129
        $region58: #{tpu_custom_call.1} parent=39 // pred_check_branch
          %283 = sbr.rel (%p281) target = $region60
        $region59: #{tpu_custom_call.1} parent=39 // pred_region
          %285 = dma.done [#allocation9], 16
        $region60: #{tpu_custom_call.1} parent=39 // pred_fallthru
          _
        %s286 = sand.u32 %s32, 1
        %s287 = scalar_lea.sflag [#allocation3], %s286
        %s288 = sand.u32 %s32, 1
        %s289 = smul.addr %s288, 1280
        %s290 = scalar_lea.vmem [#allocation2], %s289
        %p291 = pneg %p45
        %p292 = pneg %p42
        %p293 = pneg %p66
        %p294 = pneg %p63
        %p295 = pneg %p87
        %p296 = pneg %p84
        %p297 = pneg %p108
        %p298 = pneg %p105
        %p299 = pneg %p129
        %p300 = pneg %p126
        %p301 = pneg %p155
        %p302 = pneg %p152
        %s303 = sand.u32 %s142, 1
        %s304 = scalar_lea.sflag [#allocation4], %s303
        %s305 = sand.u32 %s142, 1
        %s306 = smul.addr %s305, 128
        %s307 = scalar_lea.vmem [#allocation11], %s306
        %s308 = smul.u32 16, %s24
        %s309 = smul.u32 16, %s24
        %v310 = vld [vmem:[%s260] sm:$0xff]
        %v311 = vld [vmem:[%s260 + $0x8] sm:$0xff]
        %v312 = vld [vmem:[%s260 + $0x10] sm:$0xff]
        %v313 = vld [vmem:[%s260 + $0x18] sm:$0xff]
        %v314 = vld [vmem:[%s260 + $0x20] sm:$0xff]
        %v315 = vld [vmem:[%s260 + $0x28] sm:$0xff]
        %v316 = vld [vmem:[%s260 + $0x30] sm:$0xff]
        %v317 = vld [vmem:[%s260 + $0x38] sm:$0xff]
        %v318 = vld [vmem:[%s260 + $0x40] sm:$0xff]
        %v319 = vld [vmem:[%s260 + $0x48] sm:$0xff]
        %v320 = vld [vmem:[%s260 + $0x50] sm:$0xff]
        %v321 = vld [vmem:[%s260 + $0x58] sm:$0xff]
        %v322 = vld [vmem:[%s260 + $0x60] sm:$0xff]
        %v323 = vld [vmem:[%s260 + $0x68] sm:$0xff]
        %v324 = vld [vmem:[%s260 + $0x70] sm:$0xff]
        %v325 = vld [vmem:[%s260 + $0x78] sm:$0xff]
        %v326 = vld [vmem:[%s260 + $0x80] sm:$0xff]
        %v327 = vld [vmem:[%s260 + $0x88] sm:$0xff]
        %v328 = vld [vmem:[%s260 + $0x90] sm:$0xff]
        %v329 = vld [vmem:[%s260 + $0x98] sm:$0xff]
        %v330 = vld [vmem:[%s260 + $0xa0] sm:$0xff]
        %v331 = vld [vmem:[%s260 + $0xa8] sm:$0xff]
        %v332 = vld [vmem:[%s260 + $0xb0] sm:$0xff]
        %v333 = vld [vmem:[%s260 + $0xb8] sm:$0xff]
        %v334 = vld [vmem:[%s260 + $0xc0] sm:$0xff]
        %v335 = vld [vmem:[%s260 + $0xc8] sm:$0xff]
        %v336 = vld [vmem:[%s260 + $0xd0] sm:$0xff]
        %v337 = vld [vmem:[%s260 + $0xd8] sm:$0xff]
        %v338 = vld [vmem:[%s260 + $0xe0] sm:$0xff]
        %v339 = vld [vmem:[%s260 + $0xe8] sm:$0xff]
        %v340 = vld [vmem:[%s260 + $0xf0] sm:$0xff]
        %v341 = vld [vmem:[%s260 + $0xf8] sm:$0xff]
        %v342 = vld [vmem:[%s260 + $0x100] sm:$0xff]
        %v343 = vld [vmem:[%s260 + $0x108] sm:$0xff]
        %v344 = vld [vmem:[%s260 + $0x110] sm:$0xff]
        %v345 = vld [vmem:[%s260 + $0x118] sm:$0xff]
        %v346 = vld [vmem:[%s260 + $0x120] sm:$0xff]
        %v347 = vld [vmem:[%s260 + $0x128] sm:$0xff]
        %v348 = vld [vmem:[%s260 + $0x130] sm:$0xff]
        %v349 = vld [vmem:[%s260 + $0x138] sm:$0xff]
        %v350 = vld [vmem:[%s260 + $0x140] sm:$0xff]
        %v351 = vld [vmem:[%s260 + $0x148] sm:$0xff]
        %v352 = vld [vmem:[%s260 + $0x150] sm:$0xff]
        %v353 = vld [vmem:[%s260 + $0x158] sm:$0xff]
        %v354 = vld [vmem:[%s260 + $0x160] sm:$0xff]
        %v355 = vld [vmem:[%s260 + $0x168] sm:$0xff]
        %v356 = vld [vmem:[%s260 + $0x170] sm:$0xff]
        %v357 = vld [vmem:[%s260 + $0x178] sm:$0xff]
        %v358 = vld [vmem:[%s260 + $0x180] sm:$0xff]
        %v359 = vld [vmem:[%s260 + $0x188] sm:$0xff]
        %v360 = vld [vmem:[%s260 + $0x190] sm:$0xff]
        %v361 = vld [vmem:[%s260 + $0x198] sm:$0xff]
        %v362 = vld [vmem:[%s260 + $0x1a0] sm:$0xff]
        %v363 = vld [vmem:[%s260 + $0x1a8] sm:$0xff]
        %v364 = vld [vmem:[%s260 + $0x1b0] sm:$0xff]
        %v365 = vld [vmem:[%s260 + $0x1b8] sm:$0xff]
        %v366 = vld [vmem:[%s260 + $0x1c0] sm:$0xff]
        %v367 = vld [vmem:[%s260 + $0x1c8] sm:$0xff]
        %v368 = vld [vmem:[%s260 + $0x1d0] sm:$0xff]
        %v369 = vld [vmem:[%s260 + $0x1d8] sm:$0xff]
        %v370 = vld [vmem:[%s260 + $0x1e0] sm:$0xff]
        %v371 = vld [vmem:[%s260 + $0x1e8] sm:$0xff]
        %v372 = vld [vmem:[%s260 + $0x1f0] sm:$0xff]
        %v373 = vld [vmem:[%s260 + $0x1f8] sm:$0xff]
        %v374 = vld [vmem:[%s260 + $0x200] sm:$0xff]
        %v375 = vld [vmem:[%s260 + $0x208] sm:$0xff]
        %v376 = vld [vmem:[%s260 + $0x210] sm:$0xff]
        %v377 = vld [vmem:[%s260 + $0x218] sm:$0xff]
        %v378 = vld [vmem:[%s260 + $0x220] sm:$0xff]
        %v379 = vld [vmem:[%s260 + $0x228] sm:$0xff]
        %v380 = vld [vmem:[%s260 + $0x230] sm:$0xff]
        %v381 = vld [vmem:[%s260 + $0x238] sm:$0xff]
        %v382 = vld [vmem:[%s260 + $0x240] sm:$0xff]
        %v383 = vld [vmem:[%s260 + $0x248] sm:$0xff]
        %v384 = vld [vmem:[%s260 + $0x250] sm:$0xff]
        %v385 = vld [vmem:[%s260 + $0x258] sm:$0xff]
        %v386 = vld [vmem:[%s260 + $0x260] sm:$0xff]
        %v387 = vld [vmem:[%s260 + $0x268] sm:$0xff]
        %v388 = vld [vmem:[%s260 + $0x270] sm:$0xff]
        %v389 = vld [vmem:[%s260 + $0x278] sm:$0xff]
        %v390 = vld [vmem:[%s260 + $0x280] sm:$0xff]
        %v391 = vld [vmem:[%s260 + $0x288] sm:$0xff]
        %v392 = vld [vmem:[%s260 + $0x290] sm:$0xff]
        %v393 = vld [vmem:[%s260 + $0x298] sm:$0xff]
        %v394 = vld [vmem:[%s260 + $0x2a0] sm:$0xff]
        %v395 = vld [vmem:[%s260 + $0x2a8] sm:$0xff]
        %v396 = vld [vmem:[%s260 + $0x2b0] sm:$0xff]
        %v397 = vld [vmem:[%s260 + $0x2b8] sm:$0xff]
        %v398 = vld [vmem:[%s260 + $0x2c0] sm:$0xff]
        %v399 = vld [vmem:[%s260 + $0x2c8] sm:$0xff]
        %v400 = vld [vmem:[%s260 + $0x2d0] sm:$0xff]
        %v401 = vld [vmem:[%s260 + $0x2d8] sm:$0xff]
        %v402 = vld [vmem:[%s260 + $0x2e0] sm:$0xff]
        %v403 = vld [vmem:[%s260 + $0x2e8] sm:$0xff]
        %v404 = vld [vmem:[%s260 + $0x2f0] sm:$0xff]
        %v405 = vld [vmem:[%s260 + $0x2f8] sm:$0xff]
        %v406 = vld [vmem:[%s260 + $0x300] sm:$0xff]
        %v407 = vld [vmem:[%s260 + $0x308] sm:$0xff]
        %v408 = vld [vmem:[%s260 + $0x310] sm:$0xff]
        %v409 = vld [vmem:[%s260 + $0x318] sm:$0xff]
        %v410 = vld [vmem:[%s260 + $0x320] sm:$0xff]
        %v411 = vld [vmem:[%s260 + $0x328] sm:$0xff]
        %v412 = vld [vmem:[%s260 + $0x330] sm:$0xff]
        %v413 = vld [vmem:[%s260 + $0x338] sm:$0xff]
        %v414 = vld [vmem:[%s260 + $0x340] sm:$0xff]
        %v415 = vld [vmem:[%s260 + $0x348] sm:$0xff]
        %v416 = vld [vmem:[%s260 + $0x350] sm:$0xff]
        %v417 = vld [vmem:[%s260 + $0x358] sm:$0xff]
        %v418 = vld [vmem:[%s260 + $0x360] sm:$0xff]
        %v419 = vld [vmem:[%s260 + $0x368] sm:$0xff]
        %v420 = vld [vmem:[%s260 + $0x370] sm:$0xff]
        %v421 = vld [vmem:[%s260 + $0x378] sm:$0xff]
        %v422 = vld [vmem:[%s260 + $0x380] sm:$0xff]
        %v423 = vld [vmem:[%s260 + $0x388] sm:$0xff]
        %v424 = vld [vmem:[%s260 + $0x390] sm:$0xff]
        %v425 = vld [vmem:[%s260 + $0x398] sm:$0xff]
        %v426 = vld [vmem:[%s260 + $0x3a0] sm:$0xff]
        %v427 = vld [vmem:[%s260 + $0x3a8] sm:$0xff]
        %v428 = vld [vmem:[%s260 + $0x3b0] sm:$0xff]
        %v429 = vld [vmem:[%s260 + $0x3b8] sm:$0xff]
        %v430 = vld [vmem:[%s260 + $0x3c0] sm:$0xff]
        %v431 = vld [vmem:[%s260 + $0x3c8] sm:$0xff]
        %v432 = vld [vmem:[%s260 + $0x3d0] sm:$0xff]
        %v433 = vld [vmem:[%s260 + $0x3d8] sm:$0xff]
        %v434 = vld [vmem:[%s260 + $0x3e0] sm:$0xff]
        %v435 = vld [vmem:[%s260 + $0x3e8] sm:$0xff]
        %v436 = vld [vmem:[%s260 + $0x3f0] sm:$0xff]
        %v437 = vld [vmem:[%s260 + $0x3f8] sm:$0xff]
        %v438 = vld [vmem:[%s260 + $0x400] sm:$0xff]
        %v439 = vld [vmem:[%s260 + $0x408] sm:$0xff]
        %v440 = vld [vmem:[%s260 + $0x410] sm:$0xff]
        %v441 = vld [vmem:[%s260 + $0x418] sm:$0xff]
        %v442 = vld [vmem:[%s260 + $0x420] sm:$0xff]
        %v443 = vld [vmem:[%s260 + $0x428] sm:$0xff]
        %v444 = vld [vmem:[%s260 + $0x430] sm:$0xff]
        %v445 = vld [vmem:[%s260 + $0x438] sm:$0xff]
        %v446 = vld [vmem:[%s260 + $0x440] sm:$0xff]
        %v447 = vld [vmem:[%s260 + $0x448] sm:$0xff]
        %v448 = vld [vmem:[%s260 + $0x450] sm:$0xff]
        %v449 = vld [vmem:[%s260 + $0x458] sm:$0xff]
        %v450 = vld [vmem:[%s260 + $0x460] sm:$0xff]
        %v451 = vld [vmem:[%s260 + $0x468] sm:$0xff]
        %v452 = vld [vmem:[%s260 + $0x470] sm:$0xff]
        %v453 = vld [vmem:[%s260 + $0x478] sm:$0xff]
        %v454 = vld [vmem:[%s260 + $0x480] sm:$0xff]
        %v455 = vld [vmem:[%s260 + $0x488] sm:$0xff]
        %v456 = vld [vmem:[%s260 + $0x490] sm:$0xff]
        %v457 = vld [vmem:[%s260 + $0x498] sm:$0xff]
        %v458 = vld [vmem:[%s260 + $0x4a0] sm:$0xff]
        %v459 = vld [vmem:[%s260 + $0x4a8] sm:$0xff]
        %v460 = vld [vmem:[%s260 + $0x4b0] sm:$0xff]
        %v461 = vld [vmem:[%s260 + $0x4b8] sm:$0xff]
        %v462 = vld [vmem:[%s260 + $0x4c0] sm:$0xff]
        %v463 = vld [vmem:[%s260 + $0x4c8] sm:$0xff]
        %v464 = vld [vmem:[%s260 + $0x4d0] sm:$0xff]
        %v465 = vld [vmem:[%s260 + $0x4d8] sm:$0xff]
        %v466 = vld [vmem:[%s260 + $0x4e0] sm:$0xff]
        %v467 = vld [vmem:[%s260 + $0x4e8] sm:$0xff]
        %v468 = vld [vmem:[%s260 + $0x4f0] sm:$0xff]
        %v469 = vld [vmem:[%s260 + $0x4f8] sm:$0xff]
        %v470 = vpack.c.bf16 %v320, %v310
        %v471 = vpack.c.bf16 %v321, %v311
        %v472 = vpack.c.bf16 %v322, %v312
        %v473 = vpack.c.bf16 %v323, %v313
        %v474 = vpack.c.bf16 %v324, %v314
        %v475 = vpack.c.bf16 %v325, %v315
        %v476 = vpack.c.bf16 %v326, %v316
        %v477 = vpack.c.bf16 %v327, %v317
        %v478 = vpack.c.bf16 %v328, %v318
        %v479 = vpack.c.bf16 %v329, %v319
        %v480 = vpack.c.bf16 %v340, %v330
        %v481 = vpack.c.bf16 %v341, %v331
        %v482 = vpack.c.bf16 %v342, %v332
        %v483 = vpack.c.bf16 %v343, %v333
        %v484 = vpack.c.bf16 %v344, %v334
        %v485 = vpack.c.bf16 %v345, %v335
        %v486 = vpack.c.bf16 %v346, %v336
        %v487 = vpack.c.bf16 %v347, %v337
        %v488 = vpack.c.bf16 %v348, %v338
        %v489 = vpack.c.bf16 %v349, %v339
        %v490 = vpack.c.bf16 %v360, %v350
        %v491 = vpack.c.bf16 %v361, %v351
        %v492 = vpack.c.bf16 %v362, %v352
        %v493 = vpack.c.bf16 %v363, %v353
        %v494 = vpack.c.bf16 %v364, %v354
        %v495 = vpack.c.bf16 %v365, %v355
        %v496 = vpack.c.bf16 %v366, %v356
        %v497 = vpack.c.bf16 %v367, %v357
        %v498 = vpack.c.bf16 %v368, %v358
        %v499 = vpack.c.bf16 %v369, %v359
        %v500 = vpack.c.bf16 %v380, %v370
        %v501 = vpack.c.bf16 %v381, %v371
        %v502 = vpack.c.bf16 %v382, %v372
        %v503 = vpack.c.bf16 %v383, %v373
        %v504 = vpack.c.bf16 %v384, %v374
        %v505 = vpack.c.bf16 %v385, %v375
        %v506 = vpack.c.bf16 %v386, %v376
        %v507 = vpack.c.bf16 %v387, %v377
        %v508 = vpack.c.bf16 %v388, %v378
        %v509 = vpack.c.bf16 %v389, %v379
        %v510 = vpack.c.bf16 %v400, %v390
        %v511 = vpack.c.bf16 %v401, %v391
        %v512 = vpack.c.bf16 %v402, %v392
        %v513 = vpack.c.bf16 %v403, %v393
        %v514 = vpack.c.bf16 %v404, %v394
        %v515 = vpack.c.bf16 %v405, %v395
        %v516 = vpack.c.bf16 %v406, %v396
        %v517 = vpack.c.bf16 %v407, %v397
        %v518 = vpack.c.bf16 %v408, %v398
        %v519 = vpack.c.bf16 %v409, %v399
        %v520 = vpack.c.bf16 %v420, %v410
        %v521 = vpack.c.bf16 %v421, %v411
        %v522 = vpack.c.bf16 %v422, %v412
        %v523 = vpack.c.bf16 %v423, %v413
        %v524 = vpack.c.bf16 %v424, %v414
        %v525 = vpack.c.bf16 %v425, %v415
        %v526 = vpack.c.bf16 %v426, %v416
        %v527 = vpack.c.bf16 %v427, %v417
        %v528 = vpack.c.bf16 %v428, %v418
        %v529 = vpack.c.bf16 %v429, %v419
        %v530 = vpack.c.bf16 %v440, %v430
        %v531 = vpack.c.bf16 %v441, %v431
        %v532 = vpack.c.bf16 %v442, %v432
        %v533 = vpack.c.bf16 %v443, %v433
        %v534 = vpack.c.bf16 %v444, %v434
        %v535 = vpack.c.bf16 %v445, %v435
        %v536 = vpack.c.bf16 %v446, %v436
        %v537 = vpack.c.bf16 %v447, %v437
        %v538 = vpack.c.bf16 %v448, %v438
        %v539 = vpack.c.bf16 %v449, %v439
        %v540 = vpack.c.bf16 %v460, %v450
        %v541 = vpack.c.bf16 %v461, %v451
        %v542 = vpack.c.bf16 %v462, %v452
        %v543 = vpack.c.bf16 %v463, %v453
        %v544 = vpack.c.bf16 %v464, %v454
        %v545 = vpack.c.bf16 %v465, %v455
        %v546 = vpack.c.bf16 %v466, %v456
        %v547 = vpack.c.bf16 %v467, %v457
        %v548 = vpack.c.bf16 %v468, %v458
        %v549 = vpack.c.bf16 %v469, %v459
        %v550 = vld [vmem:[#allocation5] sm:$0xff]
        %v551 = vld [vmem:[#allocation5 + $0x8] sm:$0xff]
        %v552 = vld [vmem:[#allocation5 + $0x10] sm:$0xf]
        %v553 = vld [vmem:[#allocation5 + $0x14] sm:$0xff]
        %v554 = vld [vmem:[#allocation5 + $0x1c] sm:$0xff]
        %v555 = vld [vmem:[#allocation5 + $0x24] sm:$0xf]
        %v556 = vld [vmem:[#allocation5 + $0x28] sm:$0xff]
        %v557 = vld [vmem:[#allocation5 + $0x30] sm:$0xff]
        %v558 = vld [vmem:[#allocation5 + $0x38] sm:$0xf]
        %v559 = vld [vmem:[#allocation5 + $0x3c] sm:$0xff]
        %v560 = vld [vmem:[#allocation5 + $0x44] sm:$0xff]
        %v561 = vld [vmem:[#allocation5 + $0x4c] sm:$0xf]
        %v562 = vld [vmem:[#allocation5 + $0x50] sm:$0xff]
        %v563 = vld [vmem:[#allocation5 + $0x58] sm:$0xff]
        %v564 = vld [vmem:[#allocation5 + $0x60] sm:$0xf]
        %v565 = vld [vmem:[#allocation5 + $0x64] sm:$0xff]
        %v566 = vld [vmem:[#allocation5 + $0x6c] sm:$0xff]
        %v567 = vld [vmem:[#allocation5 + $0x74] sm:$0xf]
        %v568 = vld [vmem:[#allocation5 + $0x78] sm:$0xff]
        %v569 = vld [vmem:[#allocation5 + $0x80] sm:$0xff]
        %v570 = vld [vmem:[#allocation5 + $0x88] sm:$0xf]
        %v571 = vld [vmem:[#allocation5 + $0x8c] sm:$0xff]
        %v572 = vld [vmem:[#allocation5 + $0x94] sm:$0xff]
        %v573 = vld [vmem:[#allocation5 + $0x9c] sm:$0xf]
        %v574 = vld [vmem:[#allocation5 + $0xa0] sm:$0xff]
        %v575 = vld [vmem:[#allocation5 + $0xa8] sm:$0xff]
        %v576 = vld [vmem:[#allocation5 + $0xb0] sm:$0xf]
        %v577 = vld [vmem:[#allocation5 + $0xb4] sm:$0xff]
        %v578 = vld [vmem:[#allocation5 + $0xbc] sm:$0xff]
        %v579 = vld [vmem:[#allocation5 + $0xc4] sm:$0xf]
        %v580 = vld [vmem:[#allocation5 + $0xc8] sm:$0xff]
        %v581 = vld [vmem:[#allocation5 + $0xd0] sm:$0xff]
        %v582 = vld [vmem:[#allocation5 + $0xd8] sm:$0xf]
        %v583 = vld [vmem:[#allocation5 + $0xdc] sm:$0xff]
        %v584 = vld [vmem:[#allocation5 + $0xe4] sm:$0xff]
        %v585 = vld [vmem:[#allocation5 + $0xec] sm:$0xf]
        %v586 = vld [vmem:[#allocation5 + $0xf0] sm:$0xff]
        %v587 = vld [vmem:[#allocation5 + $0xf8] sm:$0xff]
        %v588 = vld [vmem:[#allocation5 + $0x100] sm:$0xf]
        %v589 = vld [vmem:[#allocation5 + $0x104] sm:$0xff]
        %v590 = vld [vmem:[#allocation5 + $0x10c] sm:$0xff]
        %v591 = vld [vmem:[#allocation5 + $0x114] sm:$0xf]
        %v592 = vld [vmem:[#allocation5 + $0x118] sm:$0xff]
        %v593 = vld [vmem:[#allocation5 + $0x120] sm:$0xff]
        %v594 = vld [vmem:[#allocation5 + $0x128] sm:$0xf]
        %v595 = vld [vmem:[#allocation5 + $0x12c] sm:$0xff]
        %v596 = vld [vmem:[#allocation5 + $0x134] sm:$0xff]
        %v597 = vld [vmem:[#allocation5 + $0x13c] sm:$0xf]
        %v598 = vld [vmem:[#allocation5 + $0x140] sm:$0xff]
        %v599 = vld [vmem:[#allocation5 + $0x148] sm:$0xff]
        %v600 = vld [vmem:[#allocation5 + $0x150] sm:$0xf]
        %v601 = vld [vmem:[#allocation5 + $0x154] sm:$0xff]
        %v602 = vld [vmem:[#allocation5 + $0x15c] sm:$0xff]
        %v603 = vld [vmem:[#allocation5 + $0x164] sm:$0xf]
        %v604 = vld [vmem:[#allocation5 + $0x168] sm:$0xff]
        %v605 = vld [vmem:[#allocation5 + $0x170] sm:$0xff]
        %v606 = vld [vmem:[#allocation5 + $0x178] sm:$0xf]
        %v607 = vld [vmem:[#allocation5 + $0x17c] sm:$0xff]
        %v608 = vld [vmem:[#allocation5 + $0x184] sm:$0xff]
        %v609 = vld [vmem:[#allocation5 + $0x18c] sm:$0xf]
        %v610 = vld [vmem:[#allocation5 + $0x190] sm:$0xff]
        %v611 = vld [vmem:[#allocation5 + $0x198] sm:$0xff]
        %v612 = vld [vmem:[#allocation5 + $0x1a0] sm:$0xf]
        %v613 = vld [vmem:[#allocation5 + $0x1a4] sm:$0xff]
        %v614 = vld [vmem:[#allocation5 + $0x1ac] sm:$0xff]
        %v615 = vld [vmem:[#allocation5 + $0x1b4] sm:$0xf]
        %v616 = vld [vmem:[#allocation5 + $0x1b8] sm:$0xff]
        %v617 = vld [vmem:[#allocation5 + $0x1c0] sm:$0xff]
        %v618 = vld [vmem:[#allocation5 + $0x1c8] sm:$0xf]
        %v619 = vld [vmem:[#allocation5 + $0x1cc] sm:$0xff]
        %v620 = vld [vmem:[#allocation5 + $0x1d4] sm:$0xff]
        %v621 = vld [vmem:[#allocation5 + $0x1dc] sm:$0xf]
        %v622 = vld [vmem:[#allocation5 + $0x1e0] sm:$0xff]
        %v623 = vld [vmem:[#allocation5 + $0x1e8] sm:$0xff]
        %v624 = vld [vmem:[#allocation5 + $0x1f0] sm:$0xf]
        %v625 = vld [vmem:[#allocation5 + $0x1f4] sm:$0xff]
        %v626 = vld [vmem:[#allocation5 + $0x1fc] sm:$0xff]
        %v627 = vld [vmem:[#allocation5 + $0x204] sm:$0xf]
        %v628 = vld [vmem:[#allocation5 + $0x208] sm:$0xff]
        %v629 = vld [vmem:[#allocation5 + $0x210] sm:$0xff]
        %v630 = vld [vmem:[#allocation5 + $0x218] sm:$0xf]
        %v631 = vld [vmem:[#allocation5 + $0x21c] sm:$0xff]
        %v632 = vld [vmem:[#allocation5 + $0x224] sm:$0xff]
        %v633 = vld [vmem:[#allocation5 + $0x22c] sm:$0xf]
        %v634 = vld [vmem:[#allocation5 + $0x230] sm:$0xff]
        %v635 = vld [vmem:[#allocation5 + $0x238] sm:$0xff]
        %v636 = vld [vmem:[#allocation5 + $0x240] sm:$0xf]
        %v637 = vld [vmem:[#allocation5 + $0x244] sm:$0xff]
        %v638 = vld [vmem:[#allocation5 + $0x24c] sm:$0xff]
        %v639 = vld [vmem:[#allocation5 + $0x254] sm:$0xf]
        %v640 = vld [vmem:[#allocation5 + $0x258] sm:$0xff]
        %v641 = vld [vmem:[#allocation5 + $0x260] sm:$0xff]
        %v642 = vld [vmem:[#allocation5 + $0x268] sm:$0xf]
        %v643 = vld [vmem:[#allocation5 + $0x26c] sm:$0xff]
        %v644 = vld [vmem:[#allocation5 + $0x274] sm:$0xff]
        %v645 = vld [vmem:[#allocation5 + $0x27c] sm:$0xf]
        %v646 = vld [vmem:[#allocation5 + $0x280] sm:$0xff]
        %v647 = vld [vmem:[#allocation5 + $0x288] sm:$0xff]
        %v648 = vld [vmem:[#allocation5 + $0x290] sm:$0xf]
        %v649 = vld [vmem:[#allocation5 + $0x294] sm:$0xff]
        %v650 = vld [vmem:[#allocation5 + $0x29c] sm:$0xff]
        %v651 = vld [vmem:[#allocation5 + $0x2a4] sm:$0xf]
        %v652 = vld [vmem:[#allocation5 + $0x2a8] sm:$0xff]
        %v653 = vld [vmem:[#allocation5 + $0x2b0] sm:$0xff]
        %v654 = vld [vmem:[#allocation5 + $0x2b8] sm:$0xf]
        %v655 = vld [vmem:[#allocation5 + $0x2bc] sm:$0xff]
        %v656 = vld [vmem:[#allocation5 + $0x2c4] sm:$0xff]
        %v657 = vld [vmem:[#allocation5 + $0x2cc] sm:$0xf]
        %v658 = vld [vmem:[#allocation5 + $0x2d0] sm:$0xff]
        %v659 = vld [vmem:[#allocation5 + $0x2d8] sm:$0xff]
        %v660 = vld [vmem:[#allocation5 + $0x2e0] sm:$0xf]
        %v661 = vld [vmem:[#allocation5 + $0x2e4] sm:$0xff]
        %v662 = vld [vmem:[#allocation5 + $0x2ec] sm:$0xff]
        %v663 = vld [vmem:[#allocation5 + $0x2f4] sm:$0xf]
        %v664 = vld [vmem:[#allocation5 + $0x2f8] sm:$0xff]
        %v665 = vld [vmem:[#allocation5 + $0x300] sm:$0xff]
        %v666 = vld [vmem:[#allocation5 + $0x308] sm:$0xf]
        %v667 = vld [vmem:[#allocation5 + $0x30c] sm:$0xff]
        %v668 = vld [vmem:[#allocation5 + $0x314] sm:$0xff]
        %v669 = vld [vmem:[#allocation5 + $0x31c] sm:$0xf]
        %v670 = vld [vmem:[#allocation5 + $0x320] sm:$0xff]
        %v671 = vld [vmem:[#allocation5 + $0x328] sm:$0xff]
        %v672 = vld [vmem:[#allocation5 + $0x330] sm:$0xf]
        %v673 = vld [vmem:[#allocation5 + $0x334] sm:$0xff]
        %v674 = vld [vmem:[#allocation5 + $0x33c] sm:$0xff]
        %v675 = vld [vmem:[#allocation5 + $0x344] sm:$0xf]
        %v676 = vld [vmem:[#allocation5 + $0x348] sm:$0xff]
        %v677 = vld [vmem:[#allocation5 + $0x350] sm:$0xff]
        %v678 = vld [vmem:[#allocation5 + $0x358] sm:$0xf]
        %v679 = vld [vmem:[#allocation5 + $0x35c] sm:$0xff]
        %v680 = vld [vmem:[#allocation5 + $0x364] sm:$0xff]
        %v681 = vld [vmem:[#allocation5 + $0x36c] sm:$0xf]
        %v682 = vld [vmem:[#allocation5 + $0x370] sm:$0xff]
        %v683 = vld [vmem:[#allocation5 + $0x378] sm:$0xff]
        %v684 = vld [vmem:[#allocation5 + $0x380] sm:$0xf]
        %v685 = vld [vmem:[#allocation5 + $0x384] sm:$0xff]
        %v686 = vld [vmem:[#allocation5 + $0x38c] sm:$0xff]
        %v687 = vld [vmem:[#allocation5 + $0x394] sm:$0xf]
        %v688 = vld [vmem:[#allocation5 + $0x398] sm:$0xff]
        %v689 = vld [vmem:[#allocation5 + $0x3a0] sm:$0xff]
        %v690 = vld [vmem:[#allocation5 + $0x3a8] sm:$0xf]
        %v691 = vld [vmem:[#allocation5 + $0x3ac] sm:$0xff]
        %v692 = vld [vmem:[#allocation5 + $0x3b4] sm:$0xff]
        %v693 = vld [vmem:[#allocation5 + $0x3bc] sm:$0xf]
        %v694 = vld [vmem:[#allocation5 + $0x3c0] sm:$0xff]
        %v695 = vld [vmem:[#allocation5 + $0x3c8] sm:$0xff]
        %v696 = vld [vmem:[#allocation5 + $0x3d0] sm:$0xf]
        %v697 = vld [vmem:[#allocation5 + $0x3d4] sm:$0xff]
        %v698 = vld [vmem:[#allocation5 + $0x3dc] sm:$0xff]
        %v699 = vld [vmem:[#allocation5 + $0x3e4] sm:$0xf]
        %v700 = vld [vmem:[#allocation5 + $0x3e8] sm:$0xff]
        %v701 = vld [vmem:[#allocation5 + $0x3f0] sm:$0xff]
        %v702 = vld [vmem:[#allocation5 + $0x3f8] sm:$0xf]
        %v703 = vld [vmem:[#allocation5 + $0x3fc] sm:$0xff]
        %v704 = vld [vmem:[#allocation5 + $0x404] sm:$0xff]
        %v705 = vld [vmem:[#allocation5 + $0x40c] sm:$0xf]
        %v706 = vld [vmem:[#allocation5 + $0x410] sm:$0xff]
        %v707 = vld [vmem:[#allocation5 + $0x418] sm:$0xff]
        %v708 = vld [vmem:[#allocation5 + $0x420] sm:$0xf]
        %v709 = vld [vmem:[#allocation5 + $0x424] sm:$0xff]
        %v710 = vld [vmem:[#allocation5 + $0x42c] sm:$0xff]
        %v711 = vld [vmem:[#allocation5 + $0x434] sm:$0xf]
        %v712 = vld [vmem:[#allocation5 + $0x438] sm:$0xff]
        %v713 = vld [vmem:[#allocation5 + $0x440] sm:$0xff]
        %v714 = vld [vmem:[#allocation5 + $0x448] sm:$0xf]
        %v715 = vld [vmem:[#allocation5 + $0x44c] sm:$0xff]
        %v716 = vld [vmem:[#allocation5 + $0x454] sm:$0xff]
        %v717 = vld [vmem:[#allocation5 + $0x45c] sm:$0xf]
        %v718 = vld [vmem:[#allocation5 + $0x460] sm:$0xff]
        %v719 = vld [vmem:[#allocation5 + $0x468] sm:$0xff]
        %v720 = vld [vmem:[#allocation5 + $0x470] sm:$0xf]
        %v721 = vld [vmem:[#allocation5 + $0x474] sm:$0xff]
        %v722 = vld [vmem:[#allocation5 + $0x47c] sm:$0xff]
        %v723 = vld [vmem:[#allocation5 + $0x484] sm:$0xf]
        %v724 = vld [vmem:[#allocation5 + $0x488] sm:$0xff]
        %v725 = vld [vmem:[#allocation5 + $0x490] sm:$0xff]
        %v726 = vld [vmem:[#allocation5 + $0x498] sm:$0xf]
        %v727 = vld [vmem:[#allocation5 + $0x49c] sm:$0xff]
        %v728 = vld [vmem:[#allocation5 + $0x4a4] sm:$0xff]
        %v729 = vld [vmem:[#allocation5 + $0x4ac] sm:$0xf]
        %v730 = vld [vmem:[#allocation5 + $0x4b0] sm:$0xff]
        %v731 = vld [vmem:[#allocation5 + $0x4b8] sm:$0xff]
        %v732 = vld [vmem:[#allocation5 + $0x4c0] sm:$0xf]
        %v733 = vld [vmem:[#allocation5 + $0x4c4] sm:$0xff]
        %v734 = vld [vmem:[#allocation5 + $0x4cc] sm:$0xff]
        %v735 = vld [vmem:[#allocation5 + $0x4d4] sm:$0xf]
        %v736 = vld [vmem:[#allocation5 + $0x4d8] sm:$0xff]
        %v737 = vld [vmem:[#allocation5 + $0x4e0] sm:$0xff]
        %v738 = vld [vmem:[#allocation5 + $0x4e8] sm:$0xf]
        %v739 = vld [vmem:[#allocation5 + $0x4ec] sm:$0xff]
        %v740 = vld [vmem:[#allocation5 + $0x4f4] sm:$0xff]
        %v741 = vld [vmem:[#allocation5 + $0x4fc] sm:$0xf]
        %v742 = vld [vmem:[#allocation5 + $0x500] sm:$0xff]
        %v743 = vld [vmem:[#allocation5 + $0x508] sm:$0xff]
        %v744 = vld [vmem:[#allocation5 + $0x510] sm:$0xf]
        %v745 = vld [vmem:[#allocation5 + $0x514] sm:$0xff]
        %v746 = vld [vmem:[#allocation5 + $0x51c] sm:$0xff]
        %v747 = vld [vmem:[#allocation5 + $0x524] sm:$0xf]
        %v748 = vld [vmem:[#allocation5 + $0x528] sm:$0xff]
        %v749 = vld [vmem:[#allocation5 + $0x530] sm:$0xff]
        %v750 = vld [vmem:[#allocation5 + $0x538] sm:$0xf]
        %v751 = vld [vmem:[#allocation5 + $0x53c] sm:$0xff]
        %v752 = vld [vmem:[#allocation5 + $0x544] sm:$0xff]
        %v753 = vld [vmem:[#allocation5 + $0x54c] sm:$0xf]
        %v754 = vld [vmem:[#allocation5 + $0x550] sm:$0xff]
        %v755 = vld [vmem:[#allocation5 + $0x558] sm:$0xff]
        %v756 = vld [vmem:[#allocation5 + $0x560] sm:$0xf]
        %v757 = vld [vmem:[#allocation5 + $0x564] sm:$0xff]
        %v758 = vld [vmem:[#allocation5 + $0x56c] sm:$0xff]
        %v759 = vld [vmem:[#allocation5 + $0x574] sm:$0xf]
        %v760 = vld [vmem:[#allocation5 + $0x578] sm:$0xff]
        %v761 = vld [vmem:[#allocation5 + $0x580] sm:$0xff]
        %v762 = vld [vmem:[#allocation5 + $0x588] sm:$0xf]
        %v763 = vld [vmem:[#allocation5 + $0x58c] sm:$0xff]
        %v764 = vld [vmem:[#allocation5 + $0x594] sm:$0xff]
        %v765 = vld [vmem:[#allocation5 + $0x59c] sm:$0xf]
        %v766 = vld [vmem:[#allocation5 + $0x5a0] sm:$0xff]
        %v767 = vld [vmem:[#allocation5 + $0x5a8] sm:$0xff]
        %v768 = vld [vmem:[#allocation5 + $0x5b0] sm:$0xf]
        %v769 = vld [vmem:[#allocation5 + $0x5b4] sm:$0xff]
        %v770 = vld [vmem:[#allocation5 + $0x5bc] sm:$0xff]
        %v771 = vld [vmem:[#allocation5 + $0x5c4] sm:$0xf]
        %v772 = vld [vmem:[#allocation5 + $0x5c8] sm:$0xff]
        %v773 = vld [vmem:[#allocation5 + $0x5d0] sm:$0xff]
        %v774 = vld [vmem:[#allocation5 + $0x5d8] sm:$0xf]
        %v775 = vld [vmem:[#allocation5 + $0x5dc] sm:$0xff]
        %v776 = vld [vmem:[#allocation5 + $0x5e4] sm:$0xff]
        %v777 = vld [vmem:[#allocation5 + $0x5ec] sm:$0xf]
        %v778 = vld [vmem:[#allocation5 + $0x5f0] sm:$0xff]
        %v779 = vld [vmem:[#allocation5 + $0x5f8] sm:$0xff]
        %v780 = vld [vmem:[#allocation5 + $0x600] sm:$0xf]
        %v781 = vld [vmem:[#allocation5 + $0x604] sm:$0xff]
        %v782 = vld [vmem:[#allocation5 + $0x60c] sm:$0xff]
        %v783 = vld [vmem:[#allocation5 + $0x614] sm:$0xf]
        %v784 = vld [vmem:[#allocation5 + $0x618] sm:$0xff]
        %v785 = vld [vmem:[#allocation5 + $0x620] sm:$0xff]
        %v786 = vld [vmem:[#allocation5 + $0x628] sm:$0xf]
        %v787 = vld [vmem:[#allocation5 + $0x62c] sm:$0xff]
        %v788 = vld [vmem:[#allocation5 + $0x634] sm:$0xff]
        %v789 = vld [vmem:[#allocation5 + $0x63c] sm:$0xf]
        %v790 = vld [vmem:[#allocation5 + $0x640] sm:$0xff]
        %v791 = vld [vmem:[#allocation5 + $0x648] sm:$0xff]
        %v792 = vld [vmem:[#allocation5 + $0x650] sm:$0xf]
        %v793 = vld [vmem:[#allocation5 + $0x654] sm:$0xff]
        %v794 = vld [vmem:[#allocation5 + $0x65c] sm:$0xff]
        %v795 = vld [vmem:[#allocation5 + $0x664] sm:$0xf]
        %v796 = vld [vmem:[#allocation5 + $0x668] sm:$0xff]
        %v797 = vld [vmem:[#allocation5 + $0x670] sm:$0xff]
        %v798 = vld [vmem:[#allocation5 + $0x678] sm:$0xf]
        %v799 = vld [vmem:[#allocation5 + $0x67c] sm:$0xff]
        %v800 = vld [vmem:[#allocation5 + $0x684] sm:$0xff]
        %v801 = vld [vmem:[#allocation5 + $0x68c] sm:$0xf]
        %v802 = vld [vmem:[#allocation5 + $0x690] sm:$0xff]
        %v803 = vld [vmem:[#allocation5 + $0x698] sm:$0xff]
        %v804 = vld [vmem:[#allocation5 + $0x6a0] sm:$0xf]
        %v805 = vld [vmem:[#allocation5 + $0x6a4] sm:$0xff]
        %v806 = vld [vmem:[#allocation5 + $0x6ac] sm:$0xff]
        %v807 = vld [vmem:[#allocation5 + $0x6b4] sm:$0xf]
        %v808 = vld [vmem:[#allocation5 + $0x6b8] sm:$0xff]
        %v809 = vld [vmem:[#allocation5 + $0x6c0] sm:$0xff]
        %v810 = vld [vmem:[#allocation5 + $0x6c8] sm:$0xf]
        %v811 = vld [vmem:[#allocation5 + $0x6cc] sm:$0xff]
        %v812 = vld [vmem:[#allocation5 + $0x6d4] sm:$0xff]
        %v813 = vld [vmem:[#allocation5 + $0x6dc] sm:$0xf]
        %v814 = vld [vmem:[#allocation5 + $0x6e0] sm:$0xff]
        %v815 = vld [vmem:[#allocation5 + $0x6e8] sm:$0xff]
        %v816 = vld [vmem:[#allocation5 + $0x6f0] sm:$0xf]
        %v817 = vld [vmem:[#allocation5 + $0x6f4] sm:$0xff]
        %v818 = vld [vmem:[#allocation5 + $0x6fc] sm:$0xff]
        %v819 = vld [vmem:[#allocation5 + $0x704] sm:$0xf]
        %v820 = vld [vmem:[#allocation5 + $0x708] sm:$0xff]
        %v821 = vld [vmem:[#allocation5 + $0x710] sm:$0xff]
        %v822 = vld [vmem:[#allocation5 + $0x718] sm:$0xf]
        %v823 = vld [vmem:[#allocation5 + $0x71c] sm:$0xff]
        %v824 = vld [vmem:[#allocation5 + $0x724] sm:$0xff]
        %v825 = vld [vmem:[#allocation5 + $0x72c] sm:$0xf]
        %v826 = vld [vmem:[#allocation5 + $0x730] sm:$0xff]
        %v827 = vld [vmem:[#allocation5 + $0x738] sm:$0xff]
        %v828 = vld [vmem:[#allocation5 + $0x740] sm:$0xf]
        %v829 = vld [vmem:[#allocation5 + $0x744] sm:$0xff]
        %v830 = vld [vmem:[#allocation5 + $0x74c] sm:$0xff]
        %v831 = vld [vmem:[#allocation5 + $0x754] sm:$0xf]
        %v832 = vld [vmem:[#allocation5 + $0x758] sm:$0xff]
        %v833 = vld [vmem:[#allocation5 + $0x760] sm:$0xff]
        %v834 = vld [vmem:[#allocation5 + $0x768] sm:$0xf]
        %v835 = vld [vmem:[#allocation5 + $0x76c] sm:$0xff]
        %v836 = vld [vmem:[#allocation5 + $0x774] sm:$0xff]
        %v837 = vld [vmem:[#allocation5 + $0x77c] sm:$0xf]
        %v838 = vld [vmem:[#allocation5 + $0x780] sm:$0xff]
        %v839 = vld [vmem:[#allocation5 + $0x788] sm:$0xff]
        %v840 = vld [vmem:[#allocation5 + $0x790] sm:$0xf]
        %v841 = vld [vmem:[#allocation5 + $0x794] sm:$0xff]
        %v842 = vld [vmem:[#allocation5 + $0x79c] sm:$0xff]
        %v843 = vld [vmem:[#allocation5 + $0x7a4] sm:$0xf]
        %v844 = vld [vmem:[#allocation5 + $0x7a8] sm:$0xff]
        %v845 = vld [vmem:[#allocation5 + $0x7b0] sm:$0xff]
        %v846 = vld [vmem:[#allocation5 + $0x7b8] sm:$0xf]
        %v847 = vld [vmem:[#allocation5 + $0x7bc] sm:$0xff]
        %v848 = vld [vmem:[#allocation5 + $0x7c4] sm:$0xff]
        %v849 = vld [vmem:[#allocation5 + $0x7cc] sm:$0xf]
        %v850 = vld [vmem:[#allocation5 + $0x7d0] sm:$0xff]
        %v851 = vld [vmem:[#allocation5 + $0x7d8] sm:$0xff]
        %v852 = vld [vmem:[#allocation5 + $0x7e0] sm:$0xf]
        %v853 = vld [vmem:[#allocation5 + $0x7e4] sm:$0xff]
        %v854 = vld [vmem:[#allocation5 + $0x7ec] sm:$0xff]
        %v855 = vld [vmem:[#allocation5 + $0x7f4] sm:$0xf]
        %v856 = vld [vmem:[#allocation5 + $0x7f8] sm:$0xff]
        %v857 = vld [vmem:[#allocation5 + $0x800] sm:$0xff]
        %v858 = vld [vmem:[#allocation5 + $0x808] sm:$0xf]
        %v859 = vld [vmem:[#allocation5 + $0x80c] sm:$0xff]
        %v860 = vld [vmem:[#allocation5 + $0x814] sm:$0xff]
        %v861 = vld [vmem:[#allocation5 + $0x81c] sm:$0xf]
        %v862 = vld [vmem:[#allocation5 + $0x820] sm:$0xff]
        %v863 = vld [vmem:[#allocation5 + $0x828] sm:$0xff]
        %v864 = vld [vmem:[#allocation5 + $0x830] sm:$0xf]
        %v865 = vld [vmem:[#allocation5 + $0x834] sm:$0xff]
        %v866 = vld [vmem:[#allocation5 + $0x83c] sm:$0xff]
        %v867 = vld [vmem:[#allocation5 + $0x844] sm:$0xf]
        %v868 = vld [vmem:[#allocation5 + $0x848] sm:$0xff]
        %v869 = vld [vmem:[#allocation5 + $0x850] sm:$0xff]
        %v870 = vld [vmem:[#allocation5 + $0x858] sm:$0xf]
        %v871 = vld [vmem:[#allocation5 + $0x85c] sm:$0xff]
        %v872 = vld [vmem:[#allocation5 + $0x864] sm:$0xff]
        %v873 = vld [vmem:[#allocation5 + $0x86c] sm:$0xf]
        %v874 = vld [vmem:[#allocation5 + $0x870] sm:$0xff]
        %v875 = vld [vmem:[#allocation5 + $0x878] sm:$0xff]
        %v876 = vld [vmem:[#allocation5 + $0x880] sm:$0xf]
        %v877 = vld [vmem:[#allocation5 + $0x884] sm:$0xff]
        %v878 = vld [vmem:[#allocation5 + $0x88c] sm:$0xff]
        %v879 = vld [vmem:[#allocation5 + $0x894] sm:$0xf]
        %v880 = vld [vmem:[#allocation5 + $0x898] sm:$0xff]
        %v881 = vld [vmem:[#allocation5 + $0x8a0] sm:$0xff]
        %v882 = vld [vmem:[#allocation5 + $0x8a8] sm:$0xf]
        %v883 = vld [vmem:[#allocation5 + $0x8ac] sm:$0xff]
        %v884 = vld [vmem:[#allocation5 + $0x8b4] sm:$0xff]
        %v885 = vld [vmem:[#allocation5 + $0x8bc] sm:$0xf]
        %v886 = vld [vmem:[#allocation5 + $0x8c0] sm:$0xff]
        %v887 = vld [vmem:[#allocation5 + $0x8c8] sm:$0xff]
        %v888 = vld [vmem:[#allocation5 + $0x8d0] sm:$0xf]
        %v889 = vld [vmem:[#allocation5 + $0x8d4] sm:$0xff]
        %v890 = vld [vmem:[#allocation5 + $0x8dc] sm:$0xff]
        %v891 = vld [vmem:[#allocation5 + $0x8e4] sm:$0xf]
        %v892 = vld [vmem:[#allocation5 + $0x8e8] sm:$0xff]
        %v893 = vld [vmem:[#allocation5 + $0x8f0] sm:$0xff]
        %v894 = vld [vmem:[#allocation5 + $0x8f8] sm:$0xf]
        %v895 = vld [vmem:[#allocation5 + $0x8fc] sm:$0xff]
        %v896 = vld [vmem:[#allocation5 + $0x904] sm:$0xff]
        %v897 = vld [vmem:[#allocation5 + $0x90c] sm:$0xf]
        %v898 = vld [vmem:[#allocation5 + $0x910] sm:$0xff]
        %v899 = vld [vmem:[#allocation5 + $0x918] sm:$0xff]
        %v900 = vld [vmem:[#allocation5 + $0x920] sm:$0xf]
        %v901 = vld [vmem:[#allocation5 + $0x924] sm:$0xff]
        %v902 = vld [vmem:[#allocation5 + $0x92c] sm:$0xff]
        %v903 = vld [vmem:[#allocation5 + $0x934] sm:$0xf]
        %v904 = vld [vmem:[#allocation5 + $0x938] sm:$0xff]
        %v905 = vld [vmem:[#allocation5 + $0x940] sm:$0xff]
        %v906 = vld [vmem:[#allocation5 + $0x948] sm:$0xf]
        %v907 = vld [vmem:[#allocation5 + $0x94c] sm:$0xff]
        %v908 = vld [vmem:[#allocation5 + $0x954] sm:$0xff]
        %v909 = vld [vmem:[#allocation5 + $0x95c] sm:$0xf]
        %v910 = vld [vmem:[#allocation5 + $0x960] sm:$0xff]
        %v911 = vld [vmem:[#allocation5 + $0x968] sm:$0xff]
        %v912 = vld [vmem:[#allocation5 + $0x970] sm:$0xf]
        %v913 = vld [vmem:[#allocation5 + $0x974] sm:$0xff]
        %v914 = vld [vmem:[#allocation5 + $0x97c] sm:$0xff]
        %v915 = vld [vmem:[#allocation5 + $0x984] sm:$0xf]
        %v916 = vld [vmem:[#allocation5 + $0x988] sm:$0xff]
        %v917 = vld [vmem:[#allocation5 + $0x990] sm:$0xff]
        %v918 = vld [vmem:[#allocation5 + $0x998] sm:$0xf]
        %v919 = vld [vmem:[#allocation5 + $0x99c] sm:$0xff]
        %v920 = vld [vmem:[#allocation5 + $0x9a4] sm:$0xff]
        %v921 = vld [vmem:[#allocation5 + $0x9ac] sm:$0xf]
        %v922 = vld [vmem:[#allocation5 + $0x9b0] sm:$0xff]
        %v923 = vld [vmem:[#allocation5 + $0x9b8] sm:$0xff]
        %v924 = vld [vmem:[#allocation5 + $0x9c0] sm:$0xf]
        %v925 = vld [vmem:[#allocation5 + $0x9c4] sm:$0xff]
        %v926 = vld [vmem:[#allocation5 + $0x9cc] sm:$0xff]
        %v927 = vld [vmem:[#allocation5 + $0x9d4] sm:$0xf]
        %v928 = vld [vmem:[#allocation5 + $0x9d8] sm:$0xff]
        %v929 = vld [vmem:[#allocation5 + $0x9e0] sm:$0xff]
        %v930 = vld [vmem:[#allocation5 + $0x9e8] sm:$0xf]
        %v931 = vld [vmem:[#allocation5 + $0x9ec] sm:$0xff]
        %v932 = vld [vmem:[#allocation5 + $0x9f4] sm:$0xff]
        %v933 = vld [vmem:[#allocation5 + $0x9fc] sm:$0xf]
        %v934 = vld [vmem:[#allocation5 + $0xa00] sm:$0xff]
        %v935 = vld [vmem:[#allocation5 + $0xa08] sm:$0xff]
        %v936 = vld [vmem:[#allocation5 + $0xa10] sm:$0xf]
        %v937 = vld [vmem:[#allocation5 + $0xa14] sm:$0xff]
        %v938 = vld [vmem:[#allocation5 + $0xa1c] sm:$0xff]
        %v939 = vld [vmem:[#allocation5 + $0xa24] sm:$0xf]
        %v940 = vld [vmem:[#allocation5 + $0xa28] sm:$0xff]
        %v941 = vld [vmem:[#allocation5 + $0xa30] sm:$0xff]
        %v942 = vld [vmem:[#allocation5 + $0xa38] sm:$0xf]
        %v943 = vld [vmem:[#allocation5 + $0xa3c] sm:$0xff]
        %v944 = vld [vmem:[#allocation5 + $0xa44] sm:$0xff]
        %v945 = vld [vmem:[#allocation5 + $0xa4c] sm:$0xf]
        %v946 = vld [vmem:[#allocation5 + $0xa50] sm:$0xff]
        %v947 = vld [vmem:[#allocation5 + $0xa58] sm:$0xff]
        %v948 = vld [vmem:[#allocation5 + $0xa60] sm:$0xf]
        %v949 = vld [vmem:[#allocation5 + $0xa64] sm:$0xff]
        %v950 = vld [vmem:[#allocation5 + $0xa6c] sm:$0xff]
        %v951 = vld [vmem:[#allocation5 + $0xa74] sm:$0xf]
        %v952 = vld [vmem:[#allocation5 + $0xa78] sm:$0xff]
        %v953 = vld [vmem:[#allocation5 + $0xa80] sm:$0xff]
        %v954 = vld [vmem:[#allocation5 + $0xa88] sm:$0xf]
        %v955 = vld [vmem:[#allocation5 + $0xa8c] sm:$0xff]
        %v956 = vld [vmem:[#allocation5 + $0xa94] sm:$0xff]
        %v957 = vld [vmem:[#allocation5 + $0xa9c] sm:$0xf]
        %v958 = vld [vmem:[#allocation5 + $0xaa0] sm:$0xff]
        %v959 = vld [vmem:[#allocation5 + $0xaa8] sm:$0xff]
        %v960 = vld [vmem:[#allocation5 + $0xab0] sm:$0xf]
        %v961 = vld [vmem:[#allocation5 + $0xab4] sm:$0xff]
        %v962 = vld [vmem:[#allocation5 + $0xabc] sm:$0xff]
        %v963 = vld [vmem:[#allocation5 + $0xac4] sm:$0xf]
        %v964 = vld [vmem:[#allocation5 + $0xac8] sm:$0xff]
        %v965 = vld [vmem:[#allocation5 + $0xad0] sm:$0xff]
        %v966 = vld [vmem:[#allocation5 + $0xad8] sm:$0xf]
        %v967 = vld [vmem:[#allocation5 + $0xadc] sm:$0xff]
        %v968 = vld [vmem:[#allocation5 + $0xae4] sm:$0xff]
        %v969 = vld [vmem:[#allocation5 + $0xaec] sm:$0xf]
        %v970 = vld [vmem:[#allocation5 + $0xaf0] sm:$0xff]
        %v971 = vld [vmem:[#allocation5 + $0xaf8] sm:$0xff]
        %v972 = vld [vmem:[#allocation5 + $0xb00] sm:$0xf]
        %v973 = vld [vmem:[#allocation5 + $0xb04] sm:$0xff]
        %v974 = vld [vmem:[#allocation5 + $0xb0c] sm:$0xff]
        %v975 = vld [vmem:[#allocation5 + $0xb14] sm:$0xf]
        %v976 = vld [vmem:[#allocation5 + $0xb18] sm:$0xff]
        %v977 = vld [vmem:[#allocation5 + $0xb20] sm:$0xff]
        %v978 = vld [vmem:[#allocation5 + $0xb28] sm:$0xf]
        %v979 = vld [vmem:[#allocation5 + $0xb2c] sm:$0xff]
        %v980 = vld [vmem:[#allocation5 + $0xb34] sm:$0xff]
        %v981 = vld [vmem:[#allocation5 + $0xb3c] sm:$0xf]
        %v982 = vld [vmem:[#allocation5 + $0xb40] sm:$0xff]
        %v983 = vld [vmem:[#allocation5 + $0xb48] sm:$0xff]
        %v984 = vld [vmem:[#allocation5 + $0xb50] sm:$0xf]
        %v985 = vld [vmem:[#allocation5 + $0xb54] sm:$0xff]
        %v986 = vld [vmem:[#allocation5 + $0xb5c] sm:$0xff]
        %v987 = vld [vmem:[#allocation5 + $0xb64] sm:$0xf]
        %v988 = vld [vmem:[#allocation5 + $0xb68] sm:$0xff]
        %v989 = vld [vmem:[#allocation5 + $0xb70] sm:$0xff]
        %v990 = vld [vmem:[#allocation5 + $0xb78] sm:$0xf]
        %v991 = vld [vmem:[#allocation5 + $0xb7c] sm:$0xff]
        %v992 = vld [vmem:[#allocation5 + $0xb84] sm:$0xff]
        %v993 = vld [vmem:[#allocation5 + $0xb8c] sm:$0xf]
        %v994 = vld [vmem:[#allocation5 + $0xb90] sm:$0xff]
        %v995 = vld [vmem:[#allocation5 + $0xb98] sm:$0xff]
        %v996 = vld [vmem:[#allocation5 + $0xba0] sm:$0xf]
        %v997 = vld [vmem:[#allocation5 + $0xba4] sm:$0xff]
        %v998 = vld [vmem:[#allocation5 + $0xbac] sm:$0xff]
        %v999 = vld [vmem:[#allocation5 + $0xbb4] sm:$0xf]
        %v1000 = vld [vmem:[#allocation5 + $0xbb8] sm:$0xff]
        %v1001 = vld [vmem:[#allocation5 + $0xbc0] sm:$0xff]
        %v1002 = vld [vmem:[#allocation5 + $0xbc8] sm:$0xf]
        %v1003 = vld [vmem:[#allocation5 + $0xbcc] sm:$0xff]
        %v1004 = vld [vmem:[#allocation5 + $0xbd4] sm:$0xff]
        %v1005 = vld [vmem:[#allocation5 + $0xbdc] sm:$0xf]
        %v1006 = vld [vmem:[#allocation5 + $0xbe0] sm:$0xff]
        %v1007 = vld [vmem:[#allocation5 + $0xbe8] sm:$0xff]
        %v1008 = vld [vmem:[#allocation5 + $0xbf0] sm:$0xf]
        %v1009 = vld [vmem:[#allocation5 + $0xbf4] sm:$0xff]
        %v1010 = vld [vmem:[#allocation5 + $0xbfc] sm:$0xff]
        %v1011 = vld [vmem:[#allocation5 + $0xc04] sm:$0xf]
        %v1012 = vld [vmem:[#allocation5 + $0xc08] sm:$0xff]
        %v1013 = vld [vmem:[#allocation5 + $0xc10] sm:$0xff]
        %v1014 = vld [vmem:[#allocation5 + $0xc18] sm:$0xf]
        %v1015 = vld [vmem:[#allocation5 + $0xc1c] sm:$0xff]
        %v1016 = vld [vmem:[#allocation5 + $0xc24] sm:$0xff]
        %v1017 = vld [vmem:[#allocation5 + $0xc2c] sm:$0xf]
        %v1018 = vld [vmem:[#allocation5 + $0xc30] sm:$0xff]
        %v1019 = vld [vmem:[#allocation5 + $0xc38] sm:$0xff]
        %v1020 = vld [vmem:[#allocation5 + $0xc40] sm:$0xf]
        %v1021 = vld [vmem:[#allocation5 + $0xc44] sm:$0xff]
        %v1022 = vld [vmem:[#allocation5 + $0xc4c] sm:$0xff]
        %v1023 = vld [vmem:[#allocation5 + $0xc54] sm:$0xf]
        %v1024 = vld [vmem:[#allocation5 + $0xc58] sm:$0xff]
        %v1025 = vld [vmem:[#allocation5 + $0xc60] sm:$0xff]
        %v1026 = vld [vmem:[#allocation5 + $0xc68] sm:$0xf]
        %v1027 = vld [vmem:[#allocation5 + $0xc6c] sm:$0xff]
        %v1028 = vld [vmem:[#allocation5 + $0xc74] sm:$0xff]
        %v1029 = vld [vmem:[#allocation5 + $0xc7c] sm:$0xf]
        %v1030 = vld [vmem:[#allocation7] sm:$0x1f]
        %v1032 = vperm.slane %v1030, 0
        %v1033 = vperm.slane %v1030, 1
        %v1034 = vperm.slane %v1030, 2
        %v1035 = vperm.slane %v1030, 3
        %v1036 = vperm.slane %v1030, 4
        %v1522 = vunpack.c.l.b16 %v550
        %v1523 = vunpack.c.h.b16 %v550
        %v1524 = vunpack.c.l.b16 %v551
        %v1525 = vunpack.c.h.b16 %v551
        %v1526 = vunpack.c.l.b16 %v552
        %v1527 = vunpack.c.l.b16 %v553
        %v1528 = vunpack.c.h.b16 %v553
        %v1529 = vunpack.c.l.b16 %v554
        %v1530 = vunpack.c.h.b16 %v554
        %v1531 = vunpack.c.l.b16 %v555
        %v1532 = vunpack.c.l.b16 %v556
        %v1533 = vunpack.c.h.b16 %v556
        %v1534 = vunpack.c.l.b16 %v557
        %v1535 = vunpack.c.h.b16 %v557
        %v1536 = vunpack.c.l.b16 %v558
        %v1537 = vunpack.c.l.b16 %v559
        %v1538 = vunpack.c.h.b16 %v559
        %v1539 = vunpack.c.l.b16 %v560
        %v1540 = vunpack.c.h.b16 %v560
        %v1541 = vunpack.c.l.b16 %v561
        %v1542 = vunpack.c.l.b16 %v562
        %v1543 = vunpack.c.h.b16 %v562
        %v1544 = vunpack.c.l.b16 %v563
        %v1545 = vunpack.c.h.b16 %v563
        %v1546 = vunpack.c.l.b16 %v564
        %v1547 = vunpack.c.l.b16 %v565
        %v1548 = vunpack.c.h.b16 %v565
        %v1549 = vunpack.c.l.b16 %v566
        %v1550 = vunpack.c.h.b16 %v566
        %v1551 = vunpack.c.l.b16 %v567
        %v1552 = vunpack.c.l.b16 %v568
        %v1553 = vunpack.c.h.b16 %v568
        %v1554 = vunpack.c.l.b16 %v569
        %v1555 = vunpack.c.h.b16 %v569
        %v1556 = vunpack.c.l.b16 %v570
        %v1557 = vunpack.c.l.b16 %v571
        %v1558 = vunpack.c.h.b16 %v571
        %v1559 = vunpack.c.l.b16 %v572
        %v1560 = vunpack.c.h.b16 %v572
        %v1561 = vunpack.c.l.b16 %v573
        %v1562 = vunpack.c.l.b16 %v574
        %v1563 = vunpack.c.h.b16 %v574
        %v1564 = vunpack.c.l.b16 %v575
        %v1565 = vunpack.c.h.b16 %v575
        %v1566 = vunpack.c.l.b16 %v576
        %v1567 = vunpack.c.l.b16 %v577
        %v1568 = vunpack.c.h.b16 %v577
        %v1569 = vunpack.c.l.b16 %v578
        %v1570 = vunpack.c.h.b16 %v578
        %v1571 = vunpack.c.l.b16 %v579
        %v1572 = vunpack.c.l.b16 %v580
        %v1573 = vunpack.c.h.b16 %v580
        %v1574 = vunpack.c.l.b16 %v581
        %v1575 = vunpack.c.h.b16 %v581
        %v1576 = vunpack.c.l.b16 %v582
        %v1577 = vunpack.c.l.b16 %v583
        %v1578 = vunpack.c.h.b16 %v583
        %v1579 = vunpack.c.l.b16 %v584
        %v1580 = vunpack.c.h.b16 %v584
        %v1581 = vunpack.c.l.b16 %v585
        %v1582 = vunpack.c.l.b16 %v586
        %v1583 = vunpack.c.h.b16 %v586
        %v1584 = vunpack.c.l.b16 %v587
        %v1585 = vunpack.c.h.b16 %v587
        %v1586 = vunpack.c.l.b16 %v588
        %v1587 = vunpack.c.l.b16 %v589
        %v1588 = vunpack.c.h.b16 %v589
        %v1589 = vunpack.c.l.b16 %v590
        %v1590 = vunpack.c.h.b16 %v590
        %v1591 = vunpack.c.l.b16 %v591
        %v1592 = vunpack.c.l.b16 %v592
        %v1593 = vunpack.c.h.b16 %v592
        %v1594 = vunpack.c.l.b16 %v593
        %v1595 = vunpack.c.h.b16 %v593
        %v1596 = vunpack.c.l.b16 %v594
        %v1597 = vunpack.c.l.b16 %v595
        %v1598 = vunpack.c.h.b16 %v595
        %v1599 = vunpack.c.l.b16 %v596
        %v1600 = vunpack.c.h.b16 %v596
        %v1601 = vunpack.c.l.b16 %v597
        %v1602 = vunpack.c.l.b16 %v598
        %v1603 = vunpack.c.h.b16 %v598
        %v1604 = vunpack.c.l.b16 %v599
        %v1605 = vunpack.c.h.b16 %v599
        %v1606 = vunpack.c.l.b16 %v600
        %v1607 = vunpack.c.l.b16 %v601
        %v1608 = vunpack.c.h.b16 %v601
        %v1609 = vunpack.c.l.b16 %v602
        %v1610 = vunpack.c.h.b16 %v602
        %v1611 = vunpack.c.l.b16 %v603
        %v1612 = vunpack.c.l.b16 %v604
        %v1613 = vunpack.c.h.b16 %v604
        %v1614 = vunpack.c.l.b16 %v605
        %v1615 = vunpack.c.h.b16 %v605
        %v1616 = vunpack.c.l.b16 %v606
        %v1617 = vunpack.c.l.b16 %v607
        %v1618 = vunpack.c.h.b16 %v607
        %v1619 = vunpack.c.l.b16 %v608
        %v1620 = vunpack.c.h.b16 %v608
        %v1621 = vunpack.c.l.b16 %v609
        %v1622 = vunpack.c.l.b16 %v610
        %v1623 = vunpack.c.h.b16 %v610
        %v1624 = vunpack.c.l.b16 %v611
        %v1625 = vunpack.c.h.b16 %v611
        %v1626 = vunpack.c.l.b16 %v612
        %v1627 = vunpack.c.l.b16 %v613
        %v1628 = vunpack.c.h.b16 %v613
        %v1629 = vunpack.c.l.b16 %v614
        %v1630 = vunpack.c.h.b16 %v614
        %v1631 = vunpack.c.l.b16 %v615
        %v1632 = vunpack.c.l.b16 %v616
        %v1633 = vunpack.c.h.b16 %v616
        %v1634 = vunpack.c.l.b16 %v617
        %v1635 = vunpack.c.h.b16 %v617
        %v1636 = vunpack.c.l.b16 %v618
        %v1637 = vunpack.c.l.b16 %v619
        %v1638 = vunpack.c.h.b16 %v619
        %v1639 = vunpack.c.l.b16 %v620
        %v1640 = vunpack.c.h.b16 %v620
        %v1641 = vunpack.c.l.b16 %v621
        %v1642 = vunpack.c.l.b16 %v622
        %v1643 = vunpack.c.h.b16 %v622
        %v1644 = vunpack.c.l.b16 %v623
        %v1645 = vunpack.c.h.b16 %v623
        %v1646 = vunpack.c.l.b16 %v624
        %v1647 = vunpack.c.l.b16 %v625
        %v1648 = vunpack.c.h.b16 %v625
        %v1649 = vunpack.c.l.b16 %v626
        %v1650 = vunpack.c.h.b16 %v626
        %v1651 = vunpack.c.l.b16 %v627
        %v1652 = vunpack.c.l.b16 %v628
        %v1653 = vunpack.c.h.b16 %v628
        %v1654 = vunpack.c.l.b16 %v629
        %v1655 = vunpack.c.h.b16 %v629
        %v1656 = vunpack.c.l.b16 %v630
        %v1657 = vunpack.c.l.b16 %v631
        %v1658 = vunpack.c.h.b16 %v631
        %v1659 = vunpack.c.l.b16 %v632
        %v1660 = vunpack.c.h.b16 %v632
        %v1661 = vunpack.c.l.b16 %v633
        %v1662 = vunpack.c.l.b16 %v634
        %v1663 = vunpack.c.h.b16 %v634
        %v1664 = vunpack.c.l.b16 %v635
        %v1665 = vunpack.c.h.b16 %v635
        %v1666 = vunpack.c.l.b16 %v636
        %v1667 = vunpack.c.l.b16 %v637
        %v1668 = vunpack.c.h.b16 %v637
        %v1669 = vunpack.c.l.b16 %v638
        %v1670 = vunpack.c.h.b16 %v638
        %v1671 = vunpack.c.l.b16 %v639
        %v1672 = vunpack.c.l.b16 %v640
        %v1673 = vunpack.c.h.b16 %v640
        %v1674 = vunpack.c.l.b16 %v641
        %v1675 = vunpack.c.h.b16 %v641
        %v1676 = vunpack.c.l.b16 %v642
        %v1677 = vunpack.c.l.b16 %v643
        %v1678 = vunpack.c.h.b16 %v643
        %v1679 = vunpack.c.l.b16 %v644
        %v1680 = vunpack.c.h.b16 %v644
        %v1681 = vunpack.c.l.b16 %v645
        %v1682 = vunpack.c.l.b16 %v646
        %v1683 = vunpack.c.h.b16 %v646
        %v1684 = vunpack.c.l.b16 %v647
        %v1685 = vunpack.c.h.b16 %v647
        %v1686 = vunpack.c.l.b16 %v648
        %v1687 = vunpack.c.l.b16 %v649
        %v1688 = vunpack.c.h.b16 %v649
        %v1689 = vunpack.c.l.b16 %v650
        %v1690 = vunpack.c.h.b16 %v650
        %v1691 = vunpack.c.l.b16 %v651
        %v1692 = vunpack.c.l.b16 %v652
        %v1693 = vunpack.c.h.b16 %v652
        %v1694 = vunpack.c.l.b16 %v653
        %v1695 = vunpack.c.h.b16 %v653
        %v1696 = vunpack.c.l.b16 %v654
        %v1697 = vunpack.c.l.b16 %v655
        %v1698 = vunpack.c.h.b16 %v655
        %v1699 = vunpack.c.l.b16 %v656
        %v1700 = vunpack.c.h.b16 %v656
        %v1701 = vunpack.c.l.b16 %v657
        %v1702 = vunpack.c.l.b16 %v658
        %v1703 = vunpack.c.h.b16 %v658
        %v1704 = vunpack.c.l.b16 %v659
        %v1705 = vunpack.c.h.b16 %v659
        %v1706 = vunpack.c.l.b16 %v660
        %v1707 = vunpack.c.l.b16 %v661
        %v1708 = vunpack.c.h.b16 %v661
        %v1709 = vunpack.c.l.b16 %v662
        %v1710 = vunpack.c.h.b16 %v662
        %v1711 = vunpack.c.l.b16 %v663
        %v1712 = vunpack.c.l.b16 %v664
        %v1713 = vunpack.c.h.b16 %v664
        %v1714 = vunpack.c.l.b16 %v665
        %v1715 = vunpack.c.h.b16 %v665
        %v1716 = vunpack.c.l.b16 %v666
        %v1717 = vunpack.c.l.b16 %v667
        %v1718 = vunpack.c.h.b16 %v667
        %v1719 = vunpack.c.l.b16 %v668
        %v1720 = vunpack.c.h.b16 %v668
        %v1721 = vunpack.c.l.b16 %v669
        %v1722 = vunpack.c.l.b16 %v670
        %v1723 = vunpack.c.h.b16 %v670
        %v1724 = vunpack.c.l.b16 %v671
        %v1725 = vunpack.c.h.b16 %v671
        %v1726 = vunpack.c.l.b16 %v672
        %v1727 = vunpack.c.l.b16 %v673
        %v1728 = vunpack.c.h.b16 %v673
        %v1729 = vunpack.c.l.b16 %v674
        %v1730 = vunpack.c.h.b16 %v674
        %v1731 = vunpack.c.l.b16 %v675
        %v1732 = vunpack.c.l.b16 %v676
        %v1733 = vunpack.c.h.b16 %v676
        %v1734 = vunpack.c.l.b16 %v677
        %v1735 = vunpack.c.h.b16 %v677
        %v1736 = vunpack.c.l.b16 %v678
        %v1737 = vunpack.c.l.b16 %v679
        %v1738 = vunpack.c.h.b16 %v679
        %v1739 = vunpack.c.l.b16 %v680
        %v1740 = vunpack.c.h.b16 %v680
        %v1741 = vunpack.c.l.b16 %v681
        %v1742 = vunpack.c.l.b16 %v682
        %v1743 = vunpack.c.h.b16 %v682
        %v1744 = vunpack.c.l.b16 %v683
        %v1745 = vunpack.c.h.b16 %v683
        %v1746 = vunpack.c.l.b16 %v684
        %v1747 = vunpack.c.l.b16 %v685
        %v1748 = vunpack.c.h.b16 %v685
        %v1749 = vunpack.c.l.b16 %v686
        %v1750 = vunpack.c.h.b16 %v686
        %v1751 = vunpack.c.l.b16 %v687
        %v1752 = vunpack.c.l.b16 %v688
        %v1753 = vunpack.c.h.b16 %v688
        %v1754 = vunpack.c.l.b16 %v689
        %v1755 = vunpack.c.h.b16 %v689
        %v1756 = vunpack.c.l.b16 %v690
        %v1757 = vunpack.c.l.b16 %v691
        %v1758 = vunpack.c.h.b16 %v691
        %v1759 = vunpack.c.l.b16 %v692
        %v1760 = vunpack.c.h.b16 %v692
        %v1761 = vunpack.c.l.b16 %v693
        %v1762 = vunpack.c.l.b16 %v694
        %v1763 = vunpack.c.h.b16 %v694
        %v1764 = vunpack.c.l.b16 %v695
        %v1765 = vunpack.c.h.b16 %v695
        %v1766 = vunpack.c.l.b16 %v696
        %v1767 = vunpack.c.l.b16 %v697
        %v1768 = vunpack.c.h.b16 %v697
        %v1769 = vunpack.c.l.b16 %v698
        %v1770 = vunpack.c.h.b16 %v698
        %v1771 = vunpack.c.l.b16 %v699
        %v1772 = vunpack.c.l.b16 %v700
        %v1773 = vunpack.c.h.b16 %v700
        %v1774 = vunpack.c.l.b16 %v701
        %v1775 = vunpack.c.h.b16 %v701
        %v1776 = vunpack.c.l.b16 %v702
        %v1777 = vunpack.c.l.b16 %v703
        %v1778 = vunpack.c.h.b16 %v703
        %v1779 = vunpack.c.l.b16 %v704
        %v1780 = vunpack.c.h.b16 %v704
        %v1781 = vunpack.c.l.b16 %v705
        %v1782 = vunpack.c.l.b16 %v706
        %v1783 = vunpack.c.h.b16 %v706
        %v1784 = vunpack.c.l.b16 %v707
        %v1785 = vunpack.c.h.b16 %v707
        %v1786 = vunpack.c.l.b16 %v708
        %v1787 = vunpack.c.l.b16 %v709
        %v1788 = vunpack.c.h.b16 %v709
        %v1789 = vunpack.c.l.b16 %v710
        %v1790 = vunpack.c.h.b16 %v710
        %v1791 = vunpack.c.l.b16 %v711
        %v1792 = vunpack.c.l.b16 %v712
        %v1793 = vunpack.c.h.b16 %v712
        %v1794 = vunpack.c.l.b16 %v713
        %v1795 = vunpack.c.h.b16 %v713
        %v1796 = vunpack.c.l.b16 %v714
        %v1797 = vunpack.c.l.b16 %v715
        %v1798 = vunpack.c.h.b16 %v715
        %v1799 = vunpack.c.l.b16 %v716
        %v1800 = vunpack.c.h.b16 %v716
        %v1801 = vunpack.c.l.b16 %v717
        %v1802 = vunpack.c.l.b16 %v718
        %v1803 = vunpack.c.h.b16 %v718
        %v1804 = vunpack.c.l.b16 %v719
        %v1805 = vunpack.c.h.b16 %v719
        %v1806 = vunpack.c.l.b16 %v720
        %v1807 = vunpack.c.l.b16 %v721
        %v1808 = vunpack.c.h.b16 %v721
        %v1809 = vunpack.c.l.b16 %v722
        %v1810 = vunpack.c.h.b16 %v722
        %v1811 = vunpack.c.l.b16 %v723
        %v1812 = vunpack.c.l.b16 %v724
        %v1813 = vunpack.c.h.b16 %v724
        %v1814 = vunpack.c.l.b16 %v725
        %v1815 = vunpack.c.h.b16 %v725
        %v1816 = vunpack.c.l.b16 %v726
        %v1817 = vunpack.c.l.b16 %v727
        %v1818 = vunpack.c.h.b16 %v727
        %v1819 = vunpack.c.l.b16 %v728
        %v1820 = vunpack.c.h.b16 %v728
        %v1821 = vunpack.c.l.b16 %v729
        %v1822 = vunpack.c.l.b16 %v730
        %v1823 = vunpack.c.h.b16 %v730
        %v1824 = vunpack.c.l.b16 %v731
        %v1825 = vunpack.c.h.b16 %v731
        %v1826 = vunpack.c.l.b16 %v732
        %v1827 = vunpack.c.l.b16 %v733
        %v1828 = vunpack.c.h.b16 %v733
        %v1829 = vunpack.c.l.b16 %v734
        %v1830 = vunpack.c.h.b16 %v734
        %v1831 = vunpack.c.l.b16 %v735
        %v1832 = vunpack.c.l.b16 %v736
        %v1833 = vunpack.c.h.b16 %v736
        %v1834 = vunpack.c.l.b16 %v737
        %v1835 = vunpack.c.h.b16 %v737
        %v1836 = vunpack.c.l.b16 %v738
        %v1837 = vunpack.c.l.b16 %v739
        %v1838 = vunpack.c.h.b16 %v739
        %v1839 = vunpack.c.l.b16 %v740
        %v1840 = vunpack.c.h.b16 %v740
        %v1841 = vunpack.c.l.b16 %v741
        %v1842 = vunpack.c.l.b16 %v742
        %v1843 = vunpack.c.h.b16 %v742
        %v1844 = vunpack.c.l.b16 %v743
        %v1845 = vunpack.c.h.b16 %v743
        %v1846 = vunpack.c.l.b16 %v744
        %v1847 = vunpack.c.l.b16 %v745
        %v1848 = vunpack.c.h.b16 %v745
        %v1849 = vunpack.c.l.b16 %v746
        %v1850 = vunpack.c.h.b16 %v746
        %v1851 = vunpack.c.l.b16 %v747
        %v1852 = vunpack.c.l.b16 %v748
        %v1853 = vunpack.c.h.b16 %v748
        %v1854 = vunpack.c.l.b16 %v749
        %v1855 = vunpack.c.h.b16 %v749
        %v1856 = vunpack.c.l.b16 %v750
        %v1857 = vunpack.c.l.b16 %v751
        %v1858 = vunpack.c.h.b16 %v751
        %v1859 = vunpack.c.l.b16 %v752
        %v1860 = vunpack.c.h.b16 %v752
        %v1861 = vunpack.c.l.b16 %v753
        %v1862 = vunpack.c.l.b16 %v754
        %v1863 = vunpack.c.h.b16 %v754
        %v1864 = vunpack.c.l.b16 %v755
        %v1865 = vunpack.c.h.b16 %v755
        %v1866 = vunpack.c.l.b16 %v756
        %v1867 = vunpack.c.l.b16 %v757
        %v1868 = vunpack.c.h.b16 %v757
        %v1869 = vunpack.c.l.b16 %v758
        %v1870 = vunpack.c.h.b16 %v758
        %v1871 = vunpack.c.l.b16 %v759
        %v1872 = vunpack.c.l.b16 %v760
        %v1873 = vunpack.c.h.b16 %v760
        %v1874 = vunpack.c.l.b16 %v761
        %v1875 = vunpack.c.h.b16 %v761
        %v1876 = vunpack.c.l.b16 %v762
        %v1877 = vunpack.c.l.b16 %v763
        %v1878 = vunpack.c.h.b16 %v763
        %v1879 = vunpack.c.l.b16 %v764
        %v1880 = vunpack.c.h.b16 %v764
        %v1881 = vunpack.c.l.b16 %v765
        %v1882 = vunpack.c.l.b16 %v766
        %v1883 = vunpack.c.h.b16 %v766
        %v1884 = vunpack.c.l.b16 %v767
        %v1885 = vunpack.c.h.b16 %v767
        %v1886 = vunpack.c.l.b16 %v768
        %v1887 = vunpack.c.l.b16 %v769
        %v1888 = vunpack.c.h.b16 %v769
        %v1889 = vunpack.c.l.b16 %v770
        %v1890 = vunpack.c.h.b16 %v770
        %v1891 = vunpack.c.l.b16 %v771
        %v1892 = vunpack.c.l.b16 %v772
        %v1893 = vunpack.c.h.b16 %v772
        %v1894 = vunpack.c.l.b16 %v773
        %v1895 = vunpack.c.h.b16 %v773
        %v1896 = vunpack.c.l.b16 %v774
        %v1897 = vunpack.c.l.b16 %v775
        %v1898 = vunpack.c.h.b16 %v775
        %v1899 = vunpack.c.l.b16 %v776
        %v1900 = vunpack.c.h.b16 %v776
        %v1901 = vunpack.c.l.b16 %v777
        %v1902 = vunpack.c.l.b16 %v778
        %v1903 = vunpack.c.h.b16 %v778
        %v1904 = vunpack.c.l.b16 %v779
        %v1905 = vunpack.c.h.b16 %v779
        %v1906 = vunpack.c.l.b16 %v780
        %v1907 = vunpack.c.l.b16 %v781
        %v1908 = vunpack.c.h.b16 %v781
        %v1909 = vunpack.c.l.b16 %v782
        %v1910 = vunpack.c.h.b16 %v782
        %v1911 = vunpack.c.l.b16 %v783
        %v1912 = vunpack.c.l.b16 %v784
        %v1913 = vunpack.c.h.b16 %v784
        %v1914 = vunpack.c.l.b16 %v785
        %v1915 = vunpack.c.h.b16 %v785
        %v1916 = vunpack.c.l.b16 %v786
        %v1917 = vunpack.c.l.b16 %v787
        %v1918 = vunpack.c.h.b16 %v787
        %v1919 = vunpack.c.l.b16 %v788
        %v1920 = vunpack.c.h.b16 %v788
        %v1921 = vunpack.c.l.b16 %v789
        %v1922 = vunpack.c.l.b16 %v790
        %v1923 = vunpack.c.h.b16 %v790
        %v1924 = vunpack.c.l.b16 %v791
        %v1925 = vunpack.c.h.b16 %v791
        %v1926 = vunpack.c.l.b16 %v792
        %v1927 = vunpack.c.l.b16 %v793
        %v1928 = vunpack.c.h.b16 %v793
        %v1929 = vunpack.c.l.b16 %v794
        %v1930 = vunpack.c.h.b16 %v794
        %v1931 = vunpack.c.l.b16 %v795
        %v1932 = vunpack.c.l.b16 %v796
        %v1933 = vunpack.c.h.b16 %v796
        %v1934 = vunpack.c.l.b16 %v797
        %v1935 = vunpack.c.h.b16 %v797
        %v1936 = vunpack.c.l.b16 %v798
        %v1937 = vunpack.c.l.b16 %v799
        %v1938 = vunpack.c.h.b16 %v799
        %v1939 = vunpack.c.l.b16 %v800
        %v1940 = vunpack.c.h.b16 %v800
        %v1941 = vunpack.c.l.b16 %v801
        %v1942 = vunpack.c.l.b16 %v802
        %v1943 = vunpack.c.h.b16 %v802
        %v1944 = vunpack.c.l.b16 %v803
        %v1945 = vunpack.c.h.b16 %v803
        %v1946 = vunpack.c.l.b16 %v804
        %v1947 = vunpack.c.l.b16 %v805
        %v1948 = vunpack.c.h.b16 %v805
        %v1949 = vunpack.c.l.b16 %v806
        %v1950 = vunpack.c.h.b16 %v806
        %v1951 = vunpack.c.l.b16 %v807
        %v1952 = vunpack.c.l.b16 %v808
        %v1953 = vunpack.c.h.b16 %v808
        %v1954 = vunpack.c.l.b16 %v809
        %v1955 = vunpack.c.h.b16 %v809
        %v1956 = vunpack.c.l.b16 %v810
        %v1957 = vunpack.c.l.b16 %v811
        %v1958 = vunpack.c.h.b16 %v811
        %v1959 = vunpack.c.l.b16 %v812
        %v1960 = vunpack.c.h.b16 %v812
        %v1961 = vunpack.c.l.b16 %v813
        %v1962 = vunpack.c.l.b16 %v814
        %v1963 = vunpack.c.h.b16 %v814
        %v1964 = vunpack.c.l.b16 %v815
        %v1965 = vunpack.c.h.b16 %v815
        %v1966 = vunpack.c.l.b16 %v816
        %v1967 = vunpack.c.l.b16 %v817
        %v1968 = vunpack.c.h.b16 %v817
        %v1969 = vunpack.c.l.b16 %v818
        %v1970 = vunpack.c.h.b16 %v818
        %v1971 = vunpack.c.l.b16 %v819
        %v1972 = vunpack.c.l.b16 %v820
        %v1973 = vunpack.c.h.b16 %v820
        %v1974 = vunpack.c.l.b16 %v821
        %v1975 = vunpack.c.h.b16 %v821
        %v1976 = vunpack.c.l.b16 %v822
        %v1977 = vunpack.c.l.b16 %v823
        %v1978 = vunpack.c.h.b16 %v823
        %v1979 = vunpack.c.l.b16 %v824
        %v1980 = vunpack.c.h.b16 %v824
        %v1981 = vunpack.c.l.b16 %v825
        %v1982 = vunpack.c.l.b16 %v826
        %v1983 = vunpack.c.h.b16 %v826
        %v1984 = vunpack.c.l.b16 %v827
        %v1985 = vunpack.c.h.b16 %v827
        %v1986 = vunpack.c.l.b16 %v828
        %v1987 = vunpack.c.l.b16 %v829
        %v1988 = vunpack.c.h.b16 %v829
        %v1989 = vunpack.c.l.b16 %v830
        %v1990 = vunpack.c.h.b16 %v830
        %v1991 = vunpack.c.l.b16 %v831
        %v1992 = vunpack.c.l.b16 %v832
        %v1993 = vunpack.c.h.b16 %v832
        %v1994 = vunpack.c.l.b16 %v833
        %v1995 = vunpack.c.h.b16 %v833
        %v1996 = vunpack.c.l.b16 %v834
        %v1997 = vunpack.c.l.b16 %v835
        %v1998 = vunpack.c.h.b16 %v835
        %v1999 = vunpack.c.l.b16 %v836
        %v2000 = vunpack.c.h.b16 %v836
        %v2001 = vunpack.c.l.b16 %v837
        %v2002 = vunpack.c.l.b16 %v838
        %v2003 = vunpack.c.h.b16 %v838
        %v2004 = vunpack.c.l.b16 %v839
        %v2005 = vunpack.c.h.b16 %v839
        %v2006 = vunpack.c.l.b16 %v840
        %v2007 = vunpack.c.l.b16 %v841
        %v2008 = vunpack.c.h.b16 %v841
        %v2009 = vunpack.c.l.b16 %v842
        %v2010 = vunpack.c.h.b16 %v842
        %v2011 = vunpack.c.l.b16 %v843
        %v2012 = vunpack.c.l.b16 %v844
        %v2013 = vunpack.c.h.b16 %v844
        %v2014 = vunpack.c.l.b16 %v845
        %v2015 = vunpack.c.h.b16 %v845
        %v2016 = vunpack.c.l.b16 %v846
        %v2017 = vunpack.c.l.b16 %v847
        %v2018 = vunpack.c.h.b16 %v847
        %v2019 = vunpack.c.l.b16 %v848
        %v2020 = vunpack.c.h.b16 %v848
        %v2021 = vunpack.c.l.b16 %v849
        %v2022 = vunpack.c.l.b16 %v850
        %v2023 = vunpack.c.h.b16 %v850
        %v2024 = vunpack.c.l.b16 %v851
        %v2025 = vunpack.c.h.b16 %v851
        %v2026 = vunpack.c.l.b16 %v852
        %v2027 = vunpack.c.l.b16 %v853
        %v2028 = vunpack.c.h.b16 %v853
        %v2029 = vunpack.c.l.b16 %v854
        %v2030 = vunpack.c.h.b16 %v854
        %v2031 = vunpack.c.l.b16 %v855
        %v2032 = vunpack.c.l.b16 %v856
        %v2033 = vunpack.c.h.b16 %v856
        %v2034 = vunpack.c.l.b16 %v857
        %v2035 = vunpack.c.h.b16 %v857
        %v2036 = vunpack.c.l.b16 %v858
        %v2037 = vunpack.c.l.b16 %v859
        %v2038 = vunpack.c.h.b16 %v859
        %v2039 = vunpack.c.l.b16 %v860
        %v2040 = vunpack.c.h.b16 %v860
        %v2041 = vunpack.c.l.b16 %v861
        %v2042 = vunpack.c.l.b16 %v862
        %v2043 = vunpack.c.h.b16 %v862
        %v2044 = vunpack.c.l.b16 %v863
        %v2045 = vunpack.c.h.b16 %v863
        %v2046 = vunpack.c.l.b16 %v864
        %v2047 = vunpack.c.l.b16 %v865
        %v2048 = vunpack.c.h.b16 %v865
        %v2049 = vunpack.c.l.b16 %v866
        %v2050 = vunpack.c.h.b16 %v866
        %v2051 = vunpack.c.l.b16 %v867
        %v2052 = vunpack.c.l.b16 %v868
        %v2053 = vunpack.c.h.b16 %v868
        %v2054 = vunpack.c.l.b16 %v869
        %v2055 = vunpack.c.h.b16 %v869
        %v2056 = vunpack.c.l.b16 %v870
        %v2057 = vunpack.c.l.b16 %v871
        %v2058 = vunpack.c.h.b16 %v871
        %v2059 = vunpack.c.l.b16 %v872
        %v2060 = vunpack.c.h.b16 %v872
        %v2061 = vunpack.c.l.b16 %v873
        %v2062 = vunpack.c.l.b16 %v874
        %v2063 = vunpack.c.h.b16 %v874
        %v2064 = vunpack.c.l.b16 %v875
        %v2065 = vunpack.c.h.b16 %v875
        %v2066 = vunpack.c.l.b16 %v876
        %v2067 = vunpack.c.l.b16 %v877
        %v2068 = vunpack.c.h.b16 %v877
        %v2069 = vunpack.c.l.b16 %v878
        %v2070 = vunpack.c.h.b16 %v878
        %v2071 = vunpack.c.l.b16 %v879
        %v2072 = vunpack.c.l.b16 %v880
        %v2073 = vunpack.c.h.b16 %v880
        %v2074 = vunpack.c.l.b16 %v881
        %v2075 = vunpack.c.h.b16 %v881
        %v2076 = vunpack.c.l.b16 %v882
        %v2077 = vunpack.c.l.b16 %v883
        %v2078 = vunpack.c.h.b16 %v883
        %v2079 = vunpack.c.l.b16 %v884
        %v2080 = vunpack.c.h.b16 %v884
        %v2081 = vunpack.c.l.b16 %v885
        %v2082 = vunpack.c.l.b16 %v886
        %v2083 = vunpack.c.h.b16 %v886
        %v2084 = vunpack.c.l.b16 %v887
        %v2085 = vunpack.c.h.b16 %v887
        %v2086 = vunpack.c.l.b16 %v888
        %v2087 = vunpack.c.l.b16 %v889
        %v2088 = vunpack.c.h.b16 %v889
        %v2089 = vunpack.c.l.b16 %v890
        %v2090 = vunpack.c.h.b16 %v890
        %v2091 = vunpack.c.l.b16 %v891
        %v2092 = vunpack.c.l.b16 %v892
        %v2093 = vunpack.c.h.b16 %v892
        %v2094 = vunpack.c.l.b16 %v893
        %v2095 = vunpack.c.h.b16 %v893
        %v2096 = vunpack.c.l.b16 %v894
        %v2097 = vunpack.c.l.b16 %v895
        %v2098 = vunpack.c.h.b16 %v895
        %v2099 = vunpack.c.l.b16 %v896
        %v2100 = vunpack.c.h.b16 %v896
        %v2101 = vunpack.c.l.b16 %v897
        %v2102 = vunpack.c.l.b16 %v898
        %v2103 = vunpack.c.h.b16 %v898
        %v2104 = vunpack.c.l.b16 %v899
        %v2105 = vunpack.c.h.b16 %v899
        %v2106 = vunpack.c.l.b16 %v900
        %v2107 = vunpack.c.l.b16 %v901
        %v2108 = vunpack.c.h.b16 %v901
        %v2109 = vunpack.c.l.b16 %v902
        %v2110 = vunpack.c.h.b16 %v902
        %v2111 = vunpack.c.l.b16 %v903
        %v2112 = vunpack.c.l.b16 %v904
        %v2113 = vunpack.c.h.b16 %v904
        %v2114 = vunpack.c.l.b16 %v905
        %v2115 = vunpack.c.h.b16 %v905
        %v2116 = vunpack.c.l.b16 %v906
        %v2117 = vunpack.c.l.b16 %v907
        %v2118 = vunpack.c.h.b16 %v907
        %v2119 = vunpack.c.l.b16 %v908
        %v2120 = vunpack.c.h.b16 %v908
        %v2121 = vunpack.c.l.b16 %v909
        %v2122 = vunpack.c.l.b16 %v910
        %v2123 = vunpack.c.h.b16 %v910
        %v2124 = vunpack.c.l.b16 %v911
        %v2125 = vunpack.c.h.b16 %v911
        %v2126 = vunpack.c.l.b16 %v912
        %v2127 = vunpack.c.l.b16 %v913
        %v2128 = vunpack.c.h.b16 %v913
        %v2129 = vunpack.c.l.b16 %v914
        %v2130 = vunpack.c.h.b16 %v914
        %v2131 = vunpack.c.l.b16 %v915
        %v2132 = vunpack.c.l.b16 %v916
        %v2133 = vunpack.c.h.b16 %v916
        %v2134 = vunpack.c.l.b16 %v917
        %v2135 = vunpack.c.h.b16 %v917
        %v2136 = vunpack.c.l.b16 %v918
        %v2137 = vunpack.c.l.b16 %v919
        %v2138 = vunpack.c.h.b16 %v919
        %v2139 = vunpack.c.l.b16 %v920
        %v2140 = vunpack.c.h.b16 %v920
        %v2141 = vunpack.c.l.b16 %v921
        %v2142 = vunpack.c.l.b16 %v922
        %v2143 = vunpack.c.h.b16 %v922
        %v2144 = vunpack.c.l.b16 %v923
        %v2145 = vunpack.c.h.b16 %v923
        %v2146 = vunpack.c.l.b16 %v924
        %v2147 = vunpack.c.l.b16 %v925
        %v2148 = vunpack.c.h.b16 %v925
        %v2149 = vunpack.c.l.b16 %v926
        %v2150 = vunpack.c.h.b16 %v926
        %v2151 = vunpack.c.l.b16 %v927
        %v2152 = vunpack.c.l.b16 %v928
        %v2153 = vunpack.c.h.b16 %v928
        %v2154 = vunpack.c.l.b16 %v929
        %v2155 = vunpack.c.h.b16 %v929
        %v2156 = vunpack.c.l.b16 %v930
        %v2157 = vunpack.c.l.b16 %v931
        %v2158 = vunpack.c.h.b16 %v931
        %v2159 = vunpack.c.l.b16 %v932
        %v2160 = vunpack.c.h.b16 %v932
        %v2161 = vunpack.c.l.b16 %v933
        %v2162 = vunpack.c.l.b16 %v934
        %v2163 = vunpack.c.h.b16 %v934
        %v2164 = vunpack.c.l.b16 %v935
        %v2165 = vunpack.c.h.b16 %v935
        %v2166 = vunpack.c.l.b16 %v936
        %v2167 = vunpack.c.l.b16 %v937
        %v2168 = vunpack.c.h.b16 %v937
        %v2169 = vunpack.c.l.b16 %v938
        %v2170 = vunpack.c.h.b16 %v938
        %v2171 = vunpack.c.l.b16 %v939
        %v2172 = vunpack.c.l.b16 %v940
        %v2173 = vunpack.c.h.b16 %v940
        %v2174 = vunpack.c.l.b16 %v941
        %v2175 = vunpack.c.h.b16 %v941
        %v2176 = vunpack.c.l.b16 %v942
        %v2177 = vunpack.c.l.b16 %v943
        %v2178 = vunpack.c.h.b16 %v943
        %v2179 = vunpack.c.l.b16 %v944
        %v2180 = vunpack.c.h.b16 %v944
        %v2181 = vunpack.c.l.b16 %v945
        %v2182 = vunpack.c.l.b16 %v946
        %v2183 = vunpack.c.h.b16 %v946
        %v2184 = vunpack.c.l.b16 %v947
        %v2185 = vunpack.c.h.b16 %v947
        %v2186 = vunpack.c.l.b16 %v948
        %v2187 = vunpack.c.l.b16 %v949
        %v2188 = vunpack.c.h.b16 %v949
        %v2189 = vunpack.c.l.b16 %v950
        %v2190 = vunpack.c.h.b16 %v950
        %v2191 = vunpack.c.l.b16 %v951
        %v2192 = vunpack.c.l.b16 %v952
        %v2193 = vunpack.c.h.b16 %v952
        %v2194 = vunpack.c.l.b16 %v953
        %v2195 = vunpack.c.h.b16 %v953
        %v2196 = vunpack.c.l.b16 %v954
        %v2197 = vunpack.c.l.b16 %v955
        %v2198 = vunpack.c.h.b16 %v955
        %v2199 = vunpack.c.l.b16 %v956
        %v2200 = vunpack.c.h.b16 %v956
        %v2201 = vunpack.c.l.b16 %v957
        %v2202 = vunpack.c.l.b16 %v958
        %v2203 = vunpack.c.h.b16 %v958
        %v2204 = vunpack.c.l.b16 %v959
        %v2205 = vunpack.c.h.b16 %v959
        %v2206 = vunpack.c.l.b16 %v960
        %v2207 = vunpack.c.l.b16 %v961
        %v2208 = vunpack.c.h.b16 %v961
        %v2209 = vunpack.c.l.b16 %v962
        %v2210 = vunpack.c.h.b16 %v962
        %v2211 = vunpack.c.l.b16 %v963
        %v2212 = vunpack.c.l.b16 %v964
        %v2213 = vunpack.c.h.b16 %v964
        %v2214 = vunpack.c.l.b16 %v965
        %v2215 = vunpack.c.h.b16 %v965
        %v2216 = vunpack.c.l.b16 %v966
        %v2217 = vunpack.c.l.b16 %v967
        %v2218 = vunpack.c.h.b16 %v967
        %v2219 = vunpack.c.l.b16 %v968
        %v2220 = vunpack.c.h.b16 %v968
        %v2221 = vunpack.c.l.b16 %v969
        %v2222 = vunpack.c.l.b16 %v970
        %v2223 = vunpack.c.h.b16 %v970
        %v2224 = vunpack.c.l.b16 %v971
        %v2225 = vunpack.c.h.b16 %v971
        %v2226 = vunpack.c.l.b16 %v972
        %v2227 = vunpack.c.l.b16 %v973
        %v2228 = vunpack.c.h.b16 %v973
        %v2229 = vunpack.c.l.b16 %v974
        %v2230 = vunpack.c.h.b16 %v974
        %v2231 = vunpack.c.l.b16 %v975
        %v2232 = vunpack.c.l.b16 %v976
        %v2233 = vunpack.c.h.b16 %v976
        %v2234 = vunpack.c.l.b16 %v977
        %v2235 = vunpack.c.h.b16 %v977
        %v2236 = vunpack.c.l.b16 %v978
        %v2237 = vunpack.c.l.b16 %v979
        %v2238 = vunpack.c.h.b16 %v979
        %v2239 = vunpack.c.l.b16 %v980
        %v2240 = vunpack.c.h.b16 %v980
        %v2241 = vunpack.c.l.b16 %v981
        %v2242 = vunpack.c.l.b16 %v982
        %v2243 = vunpack.c.h.b16 %v982
        %v2244 = vunpack.c.l.b16 %v983
        %v2245 = vunpack.c.h.b16 %v983
        %v2246 = vunpack.c.l.b16 %v984
        %v2247 = vunpack.c.l.b16 %v985
        %v2248 = vunpack.c.h.b16 %v985
        %v2249 = vunpack.c.l.b16 %v986
        %v2250 = vunpack.c.h.b16 %v986
        %v2251 = vunpack.c.l.b16 %v987
        %v2252 = vunpack.c.l.b16 %v988
        %v2253 = vunpack.c.h.b16 %v988
        %v2254 = vunpack.c.l.b16 %v989
        %v2255 = vunpack.c.h.b16 %v989
        %v2256 = vunpack.c.l.b16 %v990
        %v2257 = vunpack.c.l.b16 %v991
        %v2258 = vunpack.c.h.b16 %v991
        %v2259 = vunpack.c.l.b16 %v992
        %v2260 = vunpack.c.h.b16 %v992
        %v2261 = vunpack.c.l.b16 %v993
        %v2262 = vunpack.c.l.b16 %v994
        %v2263 = vunpack.c.h.b16 %v994
        %v2264 = vunpack.c.l.b16 %v995
        %v2265 = vunpack.c.h.b16 %v995
        %v2266 = vunpack.c.l.b16 %v996
        %v2267 = vunpack.c.l.b16 %v997
        %v2268 = vunpack.c.h.b16 %v997
        %v2269 = vunpack.c.l.b16 %v998
        %v2270 = vunpack.c.h.b16 %v998
        %v2271 = vunpack.c.l.b16 %v999
        %v2272 = vunpack.c.l.b16 %v1000
        %v2273 = vunpack.c.h.b16 %v1000
        %v2274 = vunpack.c.l.b16 %v1001
        %v2275 = vunpack.c.h.b16 %v1001
        %v2276 = vunpack.c.l.b16 %v1002
        %v2277 = vunpack.c.l.b16 %v1003
        %v2278 = vunpack.c.h.b16 %v1003
        %v2279 = vunpack.c.l.b16 %v1004
        %v2280 = vunpack.c.h.b16 %v1004
        %v2281 = vunpack.c.l.b16 %v1005
        %v2282 = vunpack.c.l.b16 %v1006
        %v2283 = vunpack.c.h.b16 %v1006
        %v2284 = vunpack.c.l.b16 %v1007
        %v2285 = vunpack.c.h.b16 %v1007
        %v2286 = vunpack.c.l.b16 %v1008
        %v2287 = vunpack.c.l.b16 %v1009
        %v2288 = vunpack.c.h.b16 %v1009
        %v2289 = vunpack.c.l.b16 %v1010
        %v2290 = vunpack.c.h.b16 %v1010
        %v2291 = vunpack.c.l.b16 %v1011
        %v2292 = vunpack.c.l.b16 %v1012
        %v2293 = vunpack.c.h.b16 %v1012
        %v2294 = vunpack.c.l.b16 %v1013
        %v2295 = vunpack.c.h.b16 %v1013
        %v2296 = vunpack.c.l.b16 %v1014
        %v2297 = vunpack.c.l.b16 %v1015
        %v2298 = vunpack.c.h.b16 %v1015
        %v2299 = vunpack.c.l.b16 %v1016
        %v2300 = vunpack.c.h.b16 %v1016
        %v2301 = vunpack.c.l.b16 %v1017
        %v2302 = vunpack.c.l.b16 %v1018
        %v2303 = vunpack.c.h.b16 %v1018
        %v2304 = vunpack.c.l.b16 %v1019
        %v2305 = vunpack.c.h.b16 %v1019
        %v2306 = vunpack.c.l.b16 %v1020
        %v2307 = vunpack.c.l.b16 %v1021
        %v2308 = vunpack.c.h.b16 %v1021
        %v2309 = vunpack.c.l.b16 %v1022
        %v2310 = vunpack.c.h.b16 %v1022
        %v2311 = vunpack.c.l.b16 %v1023
        %v2312 = vunpack.c.l.b16 %v1024
        %v2313 = vunpack.c.h.b16 %v1024
        %v2314 = vunpack.c.l.b16 %v1025
        %v2315 = vunpack.c.h.b16 %v1025
        %v2316 = vunpack.c.l.b16 %v1026
        %v2317 = vunpack.c.l.b16 %v1027
        %v2318 = vunpack.c.h.b16 %v1027
        %v2319 = vunpack.c.l.b16 %v1028
        %v2320 = vunpack.c.h.b16 %v1028
        %v2321 = vunpack.c.l.b16 %v1029
        %v2322 = vpack.c.b16 %v1527, %v1522
        %v2323 = vpack.c.b16 %v1528, %v1523
        %v2324 = vpack.c.b16 %v1529, %v1524
        %v2325 = vpack.c.b16 %v1530, %v1525
        %v2326 = vpack.c.b16 %v1531, %v1526
        %v2327 = vpack.c.b16 %v1537, %v1532
        %v2328 = vpack.c.b16 %v1538, %v1533
        %v2329 = vpack.c.b16 %v1539, %v1534
        %v2330 = vpack.c.b16 %v1540, %v1535
        %v2331 = vpack.c.b16 %v1541, %v1536
        %v2332 = vpack.c.b16 %v1547, %v1542
        %v2333 = vpack.c.b16 %v1548, %v1543
        %v2334 = vpack.c.b16 %v1549, %v1544
        %v2335 = vpack.c.b16 %v1550, %v1545
        %v2336 = vpack.c.b16 %v1551, %v1546
        %v2337 = vpack.c.b16 %v1557, %v1552
        %v2338 = vpack.c.b16 %v1558, %v1553
        %v2339 = vpack.c.b16 %v1559, %v1554
        %v2340 = vpack.c.b16 %v1560, %v1555
        %v2341 = vpack.c.b16 %v1561, %v1556
        %v2342 = vpack.c.b16 %v1567, %v1562
        %v2343 = vpack.c.b16 %v1568, %v1563
        %v2344 = vpack.c.b16 %v1569, %v1564
        %v2345 = vpack.c.b16 %v1570, %v1565
        %v2346 = vpack.c.b16 %v1571, %v1566
        %v2347 = vpack.c.b16 %v1577, %v1572
        %v2348 = vpack.c.b16 %v1578, %v1573
        %v2349 = vpack.c.b16 %v1579, %v1574
        %v2350 = vpack.c.b16 %v1580, %v1575
        %v2351 = vpack.c.b16 %v1581, %v1576
        %v2352 = vpack.c.b16 %v1587, %v1582
        %v2353 = vpack.c.b16 %v1588, %v1583
        %v2354 = vpack.c.b16 %v1589, %v1584
        %v2355 = vpack.c.b16 %v1590, %v1585
        %v2356 = vpack.c.b16 %v1591, %v1586
        %v2357 = vpack.c.b16 %v1597, %v1592
        %v2358 = vpack.c.b16 %v1598, %v1593
        %v2359 = vpack.c.b16 %v1599, %v1594
        %v2360 = vpack.c.b16 %v1600, %v1595
        %v2361 = vpack.c.b16 %v1601, %v1596
        %v2362 = vpack.c.b16 %v1607, %v1602
        %v2363 = vpack.c.b16 %v1608, %v1603
        %v2364 = vpack.c.b16 %v1609, %v1604
        %v2365 = vpack.c.b16 %v1610, %v1605
        %v2366 = vpack.c.b16 %v1611, %v1606
        %v2367 = vpack.c.b16 %v1617, %v1612
        %v2368 = vpack.c.b16 %v1618, %v1613
        %v2369 = vpack.c.b16 %v1619, %v1614
        %v2370 = vpack.c.b16 %v1620, %v1615
        %v2371 = vpack.c.b16 %v1621, %v1616
        %v2372 = vpack.c.b16 %v1627, %v1622
        %v2373 = vpack.c.b16 %v1628, %v1623
        %v2374 = vpack.c.b16 %v1629, %v1624
        %v2375 = vpack.c.b16 %v1630, %v1625
        %v2376 = vpack.c.b16 %v1631, %v1626
        %v2377 = vpack.c.b16 %v1637, %v1632
        %v2378 = vpack.c.b16 %v1638, %v1633
        %v2379 = vpack.c.b16 %v1639, %v1634
        %v2380 = vpack.c.b16 %v1640, %v1635
        %v2381 = vpack.c.b16 %v1641, %v1636
        %v2382 = vpack.c.b16 %v1647, %v1642
        %v2383 = vpack.c.b16 %v1648, %v1643
        %v2384 = vpack.c.b16 %v1649, %v1644
        %v2385 = vpack.c.b16 %v1650, %v1645
        %v2386 = vpack.c.b16 %v1651, %v1646
        %v2387 = vpack.c.b16 %v1657, %v1652
        %v2388 = vpack.c.b16 %v1658, %v1653
        %v2389 = vpack.c.b16 %v1659, %v1654
        %v2390 = vpack.c.b16 %v1660, %v1655
        %v2391 = vpack.c.b16 %v1661, %v1656
        %v2392 = vpack.c.b16 %v1667, %v1662
        %v2393 = vpack.c.b16 %v1668, %v1663
        %v2394 = vpack.c.b16 %v1669, %v1664
        %v2395 = vpack.c.b16 %v1670, %v1665
        %v2396 = vpack.c.b16 %v1671, %v1666
        %v2397 = vpack.c.b16 %v1677, %v1672
        %v2398 = vpack.c.b16 %v1678, %v1673
        %v2399 = vpack.c.b16 %v1679, %v1674
        %v2400 = vpack.c.b16 %v1680, %v1675
        %v2401 = vpack.c.b16 %v1681, %v1676
        %v2402 = vpack.c.b16 %v1687, %v1682
        %v2403 = vpack.c.b16 %v1688, %v1683
        %v2404 = vpack.c.b16 %v1689, %v1684
        %v2405 = vpack.c.b16 %v1690, %v1685
        %v2406 = vpack.c.b16 %v1691, %v1686
        %v2407 = vpack.c.b16 %v1697, %v1692
        %v2408 = vpack.c.b16 %v1698, %v1693
        %v2409 = vpack.c.b16 %v1699, %v1694
        %v2410 = vpack.c.b16 %v1700, %v1695
        %v2411 = vpack.c.b16 %v1701, %v1696
        %v2412 = vpack.c.b16 %v1707, %v1702
        %v2413 = vpack.c.b16 %v1708, %v1703
        %v2414 = vpack.c.b16 %v1709, %v1704
        %v2415 = vpack.c.b16 %v1710, %v1705
        %v2416 = vpack.c.b16 %v1711, %v1706
        %v2417 = vpack.c.b16 %v1717, %v1712
        %v2418 = vpack.c.b16 %v1718, %v1713
        %v2419 = vpack.c.b16 %v1719, %v1714
        %v2420 = vpack.c.b16 %v1720, %v1715
        %v2421 = vpack.c.b16 %v1721, %v1716
        %v2422 = vpack.c.b16 %v1727, %v1722
        %v2423 = vpack.c.b16 %v1728, %v1723
        %v2424 = vpack.c.b16 %v1729, %v1724
        %v2425 = vpack.c.b16 %v1730, %v1725
        %v2426 = vpack.c.b16 %v1731, %v1726
        %v2427 = vpack.c.b16 %v1737, %v1732
        %v2428 = vpack.c.b16 %v1738, %v1733
        %v2429 = vpack.c.b16 %v1739, %v1734
        %v2430 = vpack.c.b16 %v1740, %v1735
        %v2431 = vpack.c.b16 %v1741, %v1736
        %v2432 = vpack.c.b16 %v1747, %v1742
        %v2433 = vpack.c.b16 %v1748, %v1743
        %v2434 = vpack.c.b16 %v1749, %v1744
        %v2435 = vpack.c.b16 %v1750, %v1745
        %v2436 = vpack.c.b16 %v1751, %v1746
        %v2437 = vpack.c.b16 %v1757, %v1752
        %v2438 = vpack.c.b16 %v1758, %v1753
        %v2439 = vpack.c.b16 %v1759, %v1754
        %v2440 = vpack.c.b16 %v1760, %v1755
        %v2441 = vpack.c.b16 %v1761, %v1756
        %v2442 = vpack.c.b16 %v1767, %v1762
        %v2443 = vpack.c.b16 %v1768, %v1763
        %v2444 = vpack.c.b16 %v1769, %v1764
        %v2445 = vpack.c.b16 %v1770, %v1765
        %v2446 = vpack.c.b16 %v1771, %v1766
        %v2447 = vpack.c.b16 %v1777, %v1772
        %v2448 = vpack.c.b16 %v1778, %v1773
        %v2449 = vpack.c.b16 %v1779, %v1774
        %v2450 = vpack.c.b16 %v1780, %v1775
        %v2451 = vpack.c.b16 %v1781, %v1776
        %v2452 = vpack.c.b16 %v1787, %v1782
        %v2453 = vpack.c.b16 %v1788, %v1783
        %v2454 = vpack.c.b16 %v1789, %v1784
        %v2455 = vpack.c.b16 %v1790, %v1785
        %v2456 = vpack.c.b16 %v1791, %v1786
        %v2457 = vpack.c.b16 %v1797, %v1792
        %v2458 = vpack.c.b16 %v1798, %v1793
        %v2459 = vpack.c.b16 %v1799, %v1794
        %v2460 = vpack.c.b16 %v1800, %v1795
        %v2461 = vpack.c.b16 %v1801, %v1796
        %v2462 = vpack.c.b16 %v1807, %v1802
        %v2463 = vpack.c.b16 %v1808, %v1803
        %v2464 = vpack.c.b16 %v1809, %v1804
        %v2465 = vpack.c.b16 %v1810, %v1805
        %v2466 = vpack.c.b16 %v1811, %v1806
        %v2467 = vpack.c.b16 %v1817, %v1812
        %v2468 = vpack.c.b16 %v1818, %v1813
        %v2469 = vpack.c.b16 %v1819, %v1814
        %v2470 = vpack.c.b16 %v1820, %v1815
        %v2471 = vpack.c.b16 %v1821, %v1816
        %v2472 = vpack.c.b16 %v1827, %v1822
        %v2473 = vpack.c.b16 %v1828, %v1823
        %v2474 = vpack.c.b16 %v1829, %v1824
        %v2475 = vpack.c.b16 %v1830, %v1825
        %v2476 = vpack.c.b16 %v1831, %v1826
        %v2477 = vpack.c.b16 %v1837, %v1832
        %v2478 = vpack.c.b16 %v1838, %v1833
        %v2479 = vpack.c.b16 %v1839, %v1834
        %v2480 = vpack.c.b16 %v1840, %v1835
        %v2481 = vpack.c.b16 %v1841, %v1836
        %v2482 = vpack.c.b16 %v1847, %v1842
        %v2483 = vpack.c.b16 %v1848, %v1843
        %v2484 = vpack.c.b16 %v1849, %v1844
        %v2485 = vpack.c.b16 %v1850, %v1845
        %v2486 = vpack.c.b16 %v1851, %v1846
        %v2487 = vpack.c.b16 %v1857, %v1852
        %v2488 = vpack.c.b16 %v1858, %v1853
        %v2489 = vpack.c.b16 %v1859, %v1854
        %v2490 = vpack.c.b16 %v1860, %v1855
        %v2491 = vpack.c.b16 %v1861, %v1856
        %v2492 = vpack.c.b16 %v1867, %v1862
        %v2493 = vpack.c.b16 %v1868, %v1863
        %v2494 = vpack.c.b16 %v1869, %v1864
        %v2495 = vpack.c.b16 %v1870, %v1865
        %v2496 = vpack.c.b16 %v1871, %v1866
        %v2497 = vpack.c.b16 %v1877, %v1872
        %v2498 = vpack.c.b16 %v1878, %v1873
        %v2499 = vpack.c.b16 %v1879, %v1874
        %v2500 = vpack.c.b16 %v1880, %v1875
        %v2501 = vpack.c.b16 %v1881, %v1876
        %v2502 = vpack.c.b16 %v1887, %v1882
        %v2503 = vpack.c.b16 %v1888, %v1883
        %v2504 = vpack.c.b16 %v1889, %v1884
        %v2505 = vpack.c.b16 %v1890, %v1885
        %v2506 = vpack.c.b16 %v1891, %v1886
        %v2507 = vpack.c.b16 %v1897, %v1892
        %v2508 = vpack.c.b16 %v1898, %v1893
        %v2509 = vpack.c.b16 %v1899, %v1894
        %v2510 = vpack.c.b16 %v1900, %v1895
        %v2511 = vpack.c.b16 %v1901, %v1896
        %v2512 = vpack.c.b16 %v1907, %v1902
        %v2513 = vpack.c.b16 %v1908, %v1903
        %v2514 = vpack.c.b16 %v1909, %v1904
        %v2515 = vpack.c.b16 %v1910, %v1905
        %v2516 = vpack.c.b16 %v1911, %v1906
        %v2517 = vpack.c.b16 %v1917, %v1912
        %v2518 = vpack.c.b16 %v1918, %v1913
        %v2519 = vpack.c.b16 %v1919, %v1914
        %v2520 = vpack.c.b16 %v1920, %v1915
        %v2521 = vpack.c.b16 %v1921, %v1916
        %v2522 = vpack.c.b16 %v1927, %v1922
        %v2523 = vpack.c.b16 %v1928, %v1923
        %v2524 = vpack.c.b16 %v1929, %v1924
        %v2525 = vpack.c.b16 %v1930, %v1925
        %v2526 = vpack.c.b16 %v1931, %v1926
        %v2527 = vpack.c.b16 %v1937, %v1932
        %v2528 = vpack.c.b16 %v1938, %v1933
        %v2529 = vpack.c.b16 %v1939, %v1934
        %v2530 = vpack.c.b16 %v1940, %v1935
        %v2531 = vpack.c.b16 %v1941, %v1936
        %v2532 = vpack.c.b16 %v1947, %v1942
        %v2533 = vpack.c.b16 %v1948, %v1943
        %v2534 = vpack.c.b16 %v1949, %v1944
        %v2535 = vpack.c.b16 %v1950, %v1945
        %v2536 = vpack.c.b16 %v1951, %v1946
        %v2537 = vpack.c.b16 %v1957, %v1952
        %v2538 = vpack.c.b16 %v1958, %v1953
        %v2539 = vpack.c.b16 %v1959, %v1954
        %v2540 = vpack.c.b16 %v1960, %v1955
        %v2541 = vpack.c.b16 %v1961, %v1956
        %v2542 = vpack.c.b16 %v1967, %v1962
        %v2543 = vpack.c.b16 %v1968, %v1963
        %v2544 = vpack.c.b16 %v1969, %v1964
        %v2545 = vpack.c.b16 %v1970, %v1965
        %v2546 = vpack.c.b16 %v1971, %v1966
        %v2547 = vpack.c.b16 %v1977, %v1972
        %v2548 = vpack.c.b16 %v1978, %v1973
        %v2549 = vpack.c.b16 %v1979, %v1974
        %v2550 = vpack.c.b16 %v1980, %v1975
        %v2551 = vpack.c.b16 %v1981, %v1976
        %v2552 = vpack.c.b16 %v1987, %v1982
        %v2553 = vpack.c.b16 %v1988, %v1983
        %v2554 = vpack.c.b16 %v1989, %v1984
        %v2555 = vpack.c.b16 %v1990, %v1985
        %v2556 = vpack.c.b16 %v1991, %v1986
        %v2557 = vpack.c.b16 %v1997, %v1992
        %v2558 = vpack.c.b16 %v1998, %v1993
        %v2559 = vpack.c.b16 %v1999, %v1994
        %v2560 = vpack.c.b16 %v2000, %v1995
        %v2561 = vpack.c.b16 %v2001, %v1996
        %v2562 = vpack.c.b16 %v2007, %v2002
        %v2563 = vpack.c.b16 %v2008, %v2003
        %v2564 = vpack.c.b16 %v2009, %v2004
        %v2565 = vpack.c.b16 %v2010, %v2005
        %v2566 = vpack.c.b16 %v2011, %v2006
        %v2567 = vpack.c.b16 %v2017, %v2012
        %v2568 = vpack.c.b16 %v2018, %v2013
        %v2569 = vpack.c.b16 %v2019, %v2014
        %v2570 = vpack.c.b16 %v2020, %v2015
        %v2571 = vpack.c.b16 %v2021, %v2016
        %v2572 = vpack.c.b16 %v2027, %v2022
        %v2573 = vpack.c.b16 %v2028, %v2023
        %v2574 = vpack.c.b16 %v2029, %v2024
        %v2575 = vpack.c.b16 %v2030, %v2025
        %v2576 = vpack.c.b16 %v2031, %v2026
        %v2577 = vpack.c.b16 %v2037, %v2032
        %v2578 = vpack.c.b16 %v2038, %v2033
        %v2579 = vpack.c.b16 %v2039, %v2034
        %v2580 = vpack.c.b16 %v2040, %v2035
        %v2581 = vpack.c.b16 %v2041, %v2036
        %v2582 = vpack.c.b16 %v2047, %v2042
        %v2583 = vpack.c.b16 %v2048, %v2043
        %v2584 = vpack.c.b16 %v2049, %v2044
        %v2585 = vpack.c.b16 %v2050, %v2045
        %v2586 = vpack.c.b16 %v2051, %v2046
        %v2587 = vpack.c.b16 %v2057, %v2052
        %v2588 = vpack.c.b16 %v2058, %v2053
        %v2589 = vpack.c.b16 %v2059, %v2054
        %v2590 = vpack.c.b16 %v2060, %v2055
        %v2591 = vpack.c.b16 %v2061, %v2056
        %v2592 = vpack.c.b16 %v2067, %v2062
        %v2593 = vpack.c.b16 %v2068, %v2063
        %v2594 = vpack.c.b16 %v2069, %v2064
        %v2595 = vpack.c.b16 %v2070, %v2065
        %v2596 = vpack.c.b16 %v2071, %v2066
        %v2597 = vpack.c.b16 %v2077, %v2072
        %v2598 = vpack.c.b16 %v2078, %v2073
        %v2599 = vpack.c.b16 %v2079, %v2074
        %v2600 = vpack.c.b16 %v2080, %v2075
        %v2601 = vpack.c.b16 %v2081, %v2076
        %v2602 = vpack.c.b16 %v2087, %v2082
        %v2603 = vpack.c.b16 %v2088, %v2083
        %v2604 = vpack.c.b16 %v2089, %v2084
        %v2605 = vpack.c.b16 %v2090, %v2085
        %v2606 = vpack.c.b16 %v2091, %v2086
        %v2607 = vpack.c.b16 %v2097, %v2092
        %v2608 = vpack.c.b16 %v2098, %v2093
        %v2609 = vpack.c.b16 %v2099, %v2094
        %v2610 = vpack.c.b16 %v2100, %v2095
        %v2611 = vpack.c.b16 %v2101, %v2096
        %v2612 = vpack.c.b16 %v2107, %v2102
        %v2613 = vpack.c.b16 %v2108, %v2103
        %v2614 = vpack.c.b16 %v2109, %v2104
        %v2615 = vpack.c.b16 %v2110, %v2105
        %v2616 = vpack.c.b16 %v2111, %v2106
        %v2617 = vpack.c.b16 %v2117, %v2112
        %v2618 = vpack.c.b16 %v2118, %v2113
        %v2619 = vpack.c.b16 %v2119, %v2114
        %v2620 = vpack.c.b16 %v2120, %v2115
        %v2621 = vpack.c.b16 %v2121, %v2116
        %v2622 = vpack.c.b16 %v2127, %v2122
        %v2623 = vpack.c.b16 %v2128, %v2123
        %v2624 = vpack.c.b16 %v2129, %v2124
        %v2625 = vpack.c.b16 %v2130, %v2125
        %v2626 = vpack.c.b16 %v2131, %v2126
        %v2627 = vpack.c.b16 %v2137, %v2132
        %v2628 = vpack.c.b16 %v2138, %v2133
        %v2629 = vpack.c.b16 %v2139, %v2134
        %v2630 = vpack.c.b16 %v2140, %v2135
        %v2631 = vpack.c.b16 %v2141, %v2136
        %v2632 = vpack.c.b16 %v2147, %v2142
        %v2633 = vpack.c.b16 %v2148, %v2143
        %v2634 = vpack.c.b16 %v2149, %v2144
        %v2635 = vpack.c.b16 %v2150, %v2145
        %v2636 = vpack.c.b16 %v2151, %v2146
        %v2637 = vpack.c.b16 %v2157, %v2152
        %v2638 = vpack.c.b16 %v2158, %v2153
        %v2639 = vpack.c.b16 %v2159, %v2154
        %v2640 = vpack.c.b16 %v2160, %v2155
        %v2641 = vpack.c.b16 %v2161, %v2156
        %v2642 = vpack.c.b16 %v2167, %v2162
        %v2643 = vpack.c.b16 %v2168, %v2163
        %v2644 = vpack.c.b16 %v2169, %v2164
        %v2645 = vpack.c.b16 %v2170, %v2165
        %v2646 = vpack.c.b16 %v2171, %v2166
        %v2647 = vpack.c.b16 %v2177, %v2172
        %v2648 = vpack.c.b16 %v2178, %v2173
        %v2649 = vpack.c.b16 %v2179, %v2174
        %v2650 = vpack.c.b16 %v2180, %v2175
        %v2651 = vpack.c.b16 %v2181, %v2176
        %v2652 = vpack.c.b16 %v2187, %v2182
        %v2653 = vpack.c.b16 %v2188, %v2183
        %v2654 = vpack.c.b16 %v2189, %v2184
        %v2655 = vpack.c.b16 %v2190, %v2185
        %v2656 = vpack.c.b16 %v2191, %v2186
        %v2657 = vpack.c.b16 %v2197, %v2192
        %v2658 = vpack.c.b16 %v2198, %v2193
        %v2659 = vpack.c.b16 %v2199, %v2194
        %v2660 = vpack.c.b16 %v2200, %v2195
        %v2661 = vpack.c.b16 %v2201, %v2196
        %v2662 = vpack.c.b16 %v2207, %v2202
        %v2663 = vpack.c.b16 %v2208, %v2203
        %v2664 = vpack.c.b16 %v2209, %v2204
        %v2665 = vpack.c.b16 %v2210, %v2205
        %v2666 = vpack.c.b16 %v2211, %v2206
        %v2667 = vpack.c.b16 %v2217, %v2212
        %v2668 = vpack.c.b16 %v2218, %v2213
        %v2669 = vpack.c.b16 %v2219, %v2214
        %v2670 = vpack.c.b16 %v2220, %v2215
        %v2671 = vpack.c.b16 %v2221, %v2216
        %v2672 = vpack.c.b16 %v2227, %v2222
        %v2673 = vpack.c.b16 %v2228, %v2223
        %v2674 = vpack.c.b16 %v2229, %v2224
        %v2675 = vpack.c.b16 %v2230, %v2225
        %v2676 = vpack.c.b16 %v2231, %v2226
        %v2677 = vpack.c.b16 %v2237, %v2232
        %v2678 = vpack.c.b16 %v2238, %v2233
        %v2679 = vpack.c.b16 %v2239, %v2234
        %v2680 = vpack.c.b16 %v2240, %v2235
        %v2681 = vpack.c.b16 %v2241, %v2236
        %v2682 = vpack.c.b16 %v2247, %v2242
        %v2683 = vpack.c.b16 %v2248, %v2243
        %v2684 = vpack.c.b16 %v2249, %v2244
        %v2685 = vpack.c.b16 %v2250, %v2245
        %v2686 = vpack.c.b16 %v2251, %v2246
        %v2687 = vpack.c.b16 %v2257, %v2252
        %v2688 = vpack.c.b16 %v2258, %v2253
        %v2689 = vpack.c.b16 %v2259, %v2254
        %v2690 = vpack.c.b16 %v2260, %v2255
        %v2691 = vpack.c.b16 %v2261, %v2256
        %v2692 = vpack.c.b16 %v2267, %v2262
        %v2693 = vpack.c.b16 %v2268, %v2263
        %v2694 = vpack.c.b16 %v2269, %v2264
        %v2695 = vpack.c.b16 %v2270, %v2265
        %v2696 = vpack.c.b16 %v2271, %v2266
        %v2697 = vpack.c.b16 %v2277, %v2272
        %v2698 = vpack.c.b16 %v2278, %v2273
        %v2699 = vpack.c.b16 %v2279, %v2274
        %v2700 = vpack.c.b16 %v2280, %v2275
        %v2701 = vpack.c.b16 %v2281, %v2276
        %v2702 = vpack.c.b16 %v2287, %v2282
        %v2703 = vpack.c.b16 %v2288, %v2283
        %v2704 = vpack.c.b16 %v2289, %v2284
        %v2705 = vpack.c.b16 %v2290, %v2285
        %v2706 = vpack.c.b16 %v2291, %v2286
        %v2707 = vpack.c.b16 %v2297, %v2292
        %v2708 = vpack.c.b16 %v2298, %v2293
        %v2709 = vpack.c.b16 %v2299, %v2294
        %v2710 = vpack.c.b16 %v2300, %v2295
        %v2711 = vpack.c.b16 %v2301, %v2296
        %v2712 = vpack.c.b16 %v2307, %v2302
        %v2713 = vpack.c.b16 %v2308, %v2303
        %v2714 = vpack.c.b16 %v2309, %v2304
        %v2715 = vpack.c.b16 %v2310, %v2305
        %v2716 = vpack.c.b16 %v2311, %v2306
        %v2717 = vpack.c.b16 %v2317, %v2312
        %v2718 = vpack.c.b16 %v2318, %v2313
        %v2719 = vpack.c.b16 %v2319, %v2314
        %v2720 = vpack.c.b16 %v2320, %v2315
        %v2721 = vpack.c.b16 %v2321, %v2316
        %3122 = vmatpush.bf16.msra.mxu0 %v2357
        %3123 = vmatpush.bf16.msra.mxu0 %v2352
        %3124 = vmatpush.bf16.msra.mxu0 %v2347
        %3125 = vmatpush.bf16.msra.mxu0 %v2342
        %3126 = vmatpush.bf16.msra.mxu0 %v2337
        %3127 = vmatpush.bf16.msra.mxu0 %v2332
        %3128 = vmatpush.bf16.msra.mxu0 %v2327
        %3129 = vmatpush.bf16.msra.mxu0 %v2322
        %3130 = vmatmul.bf16.gmra.mxu0 %v470
        %v3131 = vpop.f32.mrf.mxu0
        %v3132 = vadd.f32 %v1032, %v3131
        %v3133 = vpop.f32.mrf.mxu0
        %v3134 = vadd.f32 %v1032, %v3133
        %3135 = vmatmul.bf16.gmra.mxu0 %v480
        %v3136 = vpop.f32.mrf.mxu0
        %v3137 = vadd.f32 %v1032, %v3136
        %v3138 = vpop.f32.mrf.mxu0
        %v3139 = vadd.f32 %v1032, %v3138
        %3140 = vmatmul.bf16.gmra.mxu0 %v490
        %v3141 = vpop.f32.mrf.mxu0
        %v3142 = vadd.f32 %v1032, %v3141
        %v3143 = vpop.f32.mrf.mxu0
        %v3144 = vadd.f32 %v1032, %v3143
        %3145 = vmatmul.bf16.gmra.mxu0 %v500
        %v3146 = vpop.f32.mrf.mxu0
        %v3147 = vadd.f32 %v1032, %v3146
        %v3148 = vpop.f32.mrf.mxu0
        %v3149 = vadd.f32 %v1032, %v3148
        %3150 = vmatmul.bf16.gmra.mxu0 %v510
        %v3151 = vpop.f32.mrf.mxu0
        %v3152 = vadd.f32 %v1032, %v3151
        %v3153 = vpop.f32.mrf.mxu0
        %v3154 = vadd.f32 %v1032, %v3153
        %3155 = vmatmul.bf16.gmra.mxu0 %v520
        %v3156 = vpop.f32.mrf.mxu0
        %v3157 = vadd.f32 %v1032, %v3156
        %v3158 = vpop.f32.mrf.mxu0
        %v3159 = vadd.f32 %v1032, %v3158
        %3160 = vmatmul.bf16.gmra.mxu0 %v530
        %v3161 = vpop.f32.mrf.mxu0
        %v3162 = vadd.f32 %v1032, %v3161
        %v3163 = vpop.f32.mrf.mxu0
        %v3164 = vadd.f32 %v1032, %v3163
        %3165 = vmatmul.bf16.gmra.mxu0 %v540
        %v3166 = vpop.f32.mrf.mxu0
        %v3167 = vadd.f32 %v1032, %v3166
        %v3168 = vpop.f32.mrf.mxu0
        %v3169 = vadd.f32 %v1032, %v3168
        %3170 = vdwg.mxu0
        %3171 = vmatpush.bf16.msra.mxu0 %v2397
        %3172 = vmatpush.bf16.msra.mxu0 %v2392
        %3173 = vmatpush.bf16.msra.mxu0 %v2387
        %3174 = vmatpush.bf16.msra.mxu0 %v2382
        %3175 = vmatpush.bf16.msra.mxu0 %v2377
        %3176 = vmatpush.bf16.msra.mxu0 %v2372
        %3177 = vmatpush.bf16.msra.mxu0 %v2367
        %3178 = vmatpush.bf16.msra.mxu0 %v2362
        %3179 = vmatmul.bf16.gmra.mxu0 %v471
        %v3180 = vpop.f32.mrf.mxu0
        %v3181 = vadd.f32 %v3132, %v3180
        %v3182 = vpop.f32.mrf.mxu0
        %v3183 = vadd.f32 %v3134, %v3182
        %3184 = vmatmul.bf16.gmra.mxu0 %v481
        %v3185 = vpop.f32.mrf.mxu0
        %v3186 = vadd.f32 %v3137, %v3185
        %v3187 = vpop.f32.mrf.mxu0
        %v3188 = vadd.f32 %v3139, %v3187
        %3189 = vmatmul.bf16.gmra.mxu0 %v491
        %v3190 = vpop.f32.mrf.mxu0
        %v3191 = vadd.f32 %v3142, %v3190
        %v3192 = vpop.f32.mrf.mxu0
        %v3193 = vadd.f32 %v3144, %v3192
        %3194 = vmatmul.bf16.gmra.mxu0 %v501
        %v3195 = vpop.f32.mrf.mxu0
        %v3196 = vadd.f32 %v3147, %v3195
        %v3197 = vpop.f32.mrf.mxu0
        %v3198 = vadd.f32 %v3149, %v3197
        %3199 = vmatmul.bf16.gmra.mxu0 %v511
        %v3200 = vpop.f32.mrf.mxu0
        %v3201 = vadd.f32 %v3152, %v3200
        %v3202 = vpop.f32.mrf.mxu0
        %v3203 = vadd.f32 %v3154, %v3202
        %3204 = vmatmul.bf16.gmra.mxu0 %v521
        %v3205 = vpop.f32.mrf.mxu0
        %v3206 = vadd.f32 %v3157, %v3205
        %v3207 = vpop.f32.mrf.mxu0
        %v3208 = vadd.f32 %v3159, %v3207
        %3209 = vmatmul.bf16.gmra.mxu0 %v531
        %v3210 = vpop.f32.mrf.mxu0
        %v3211 = vadd.f32 %v3162, %v3210
        %v3212 = vpop.f32.mrf.mxu0
        %v3213 = vadd.f32 %v3164, %v3212
        %3214 = vmatmul.bf16.gmra.mxu0 %v541
        %v3215 = vpop.f32.mrf.mxu0
        %v3216 = vadd.f32 %v3167, %v3215
        %v3217 = vpop.f32.mrf.mxu0
        %v3218 = vadd.f32 %v3169, %v3217
        %3219 = vdwg.mxu0
        %3220 = vmatpush.bf16.msra.mxu0 %v2437
        %3221 = vmatpush.bf16.msra.mxu0 %v2432
        %3222 = vmatpush.bf16.msra.mxu0 %v2427
        %3223 = vmatpush.bf16.msra.mxu0 %v2422
        %3224 = vmatpush.bf16.msra.mxu0 %v2417
        %3225 = vmatpush.bf16.msra.mxu0 %v2412
        %3226 = vmatpush.bf16.msra.mxu0 %v2407
        %3227 = vmatpush.bf16.msra.mxu0 %v2402
        %3228 = vmatmul.bf16.gmra.mxu0 %v472
        %v3229 = vpop.f32.mrf.mxu0
        %v3230 = vadd.f32 %v3181, %v3229
        %v3231 = vpop.f32.mrf.mxu0
        %v3232 = vadd.f32 %v3183, %v3231
        %3233 = vmatmul.bf16.gmra.mxu0 %v482
        %v3234 = vpop.f32.mrf.mxu0
        %v3235 = vadd.f32 %v3186, %v3234
        %v3236 = vpop.f32.mrf.mxu0
        %v3237 = vadd.f32 %v3188, %v3236
        %3238 = vmatmul.bf16.gmra.mxu0 %v492
        %v3239 = vpop.f32.mrf.mxu0
        %v3240 = vadd.f32 %v3191, %v3239
        %v3241 = vpop.f32.mrf.mxu0
        %v3242 = vadd.f32 %v3193, %v3241
        %3243 = vmatmul.bf16.gmra.mxu0 %v502
        %v3244 = vpop.f32.mrf.mxu0
        %v3245 = vadd.f32 %v3196, %v3244
        %v3246 = vpop.f32.mrf.mxu0
        %v3247 = vadd.f32 %v3198, %v3246
        %3248 = vmatmul.bf16.gmra.mxu0 %v512
        %v3249 = vpop.f32.mrf.mxu0
        %v3250 = vadd.f32 %v3201, %v3249
        %v3251 = vpop.f32.mrf.mxu0
        %v3252 = vadd.f32 %v3203, %v3251
        %3253 = vmatmul.bf16.gmra.mxu0 %v522
        %v3254 = vpop.f32.mrf.mxu0
        %v3255 = vadd.f32 %v3206, %v3254
        %v3256 = vpop.f32.mrf.mxu0
        %v3257 = vadd.f32 %v3208, %v3256
        %3258 = vmatmul.bf16.gmra.mxu0 %v532
        %v3259 = vpop.f32.mrf.mxu0
        %v3260 = vadd.f32 %v3211, %v3259
        %v3261 = vpop.f32.mrf.mxu0
        %v3262 = vadd.f32 %v3213, %v3261
        %3263 = vmatmul.bf16.gmra.mxu0 %v542
        %v3264 = vpop.f32.mrf.mxu0
        %v3265 = vadd.f32 %v3216, %v3264
        %v3266 = vpop.f32.mrf.mxu0
        %v3267 = vadd.f32 %v3218, %v3266
        %3268 = vdwg.mxu0
        %3269 = vmatpush.bf16.msra.mxu0 %v2477
        %3270 = vmatpush.bf16.msra.mxu0 %v2472
        %3271 = vmatpush.bf16.msra.mxu0 %v2467
        %3272 = vmatpush.bf16.msra.mxu0 %v2462
        %3273 = vmatpush.bf16.msra.mxu0 %v2457
        %3274 = vmatpush.bf16.msra.mxu0 %v2452
        %3275 = vmatpush.bf16.msra.mxu0 %v2447
        %3276 = vmatpush.bf16.msra.mxu0 %v2442
        %3277 = vmatmul.bf16.gmra.mxu0 %v473
        %v3278 = vpop.f32.mrf.mxu0
        %v3279 = vadd.f32 %v3230, %v3278
        %v3280 = vpop.f32.mrf.mxu0
        %v3281 = vadd.f32 %v3232, %v3280
        %3282 = vmatmul.bf16.gmra.mxu0 %v483
        %v3283 = vpop.f32.mrf.mxu0
        %v3284 = vadd.f32 %v3235, %v3283
        %v3285 = vpop.f32.mrf.mxu0
        %v3286 = vadd.f32 %v3237, %v3285
        %3287 = vmatmul.bf16.gmra.mxu0 %v493
        %v3288 = vpop.f32.mrf.mxu0
        %v3289 = vadd.f32 %v3240, %v3288
        %v3290 = vpop.f32.mrf.mxu0
        %v3291 = vadd.f32 %v3242, %v3290
        %3292 = vmatmul.bf16.gmra.mxu0 %v503
        %v3293 = vpop.f32.mrf.mxu0
        %v3294 = vadd.f32 %v3245, %v3293
        %v3295 = vpop.f32.mrf.mxu0
        %v3296 = vadd.f32 %v3247, %v3295
        %3297 = vmatmul.bf16.gmra.mxu0 %v513
        %v3298 = vpop.f32.mrf.mxu0
        %v3299 = vadd.f32 %v3250, %v3298
        %v3300 = vpop.f32.mrf.mxu0
        %v3301 = vadd.f32 %v3252, %v3300
        %3302 = vmatmul.bf16.gmra.mxu0 %v523
        %v3303 = vpop.f32.mrf.mxu0
        %v3304 = vadd.f32 %v3255, %v3303
        %v3305 = vpop.f32.mrf.mxu0
        %v3306 = vadd.f32 %v3257, %v3305
        %3307 = vmatmul.bf16.gmra.mxu0 %v533
        %v3308 = vpop.f32.mrf.mxu0
        %v3309 = vadd.f32 %v3260, %v3308
        %v3310 = vpop.f32.mrf.mxu0
        %v3311 = vadd.f32 %v3262, %v3310
        %3312 = vmatmul.bf16.gmra.mxu0 %v543
        %v3313 = vpop.f32.mrf.mxu0
        %v3314 = vadd.f32 %v3265, %v3313
        %v3315 = vpop.f32.mrf.mxu0
        %v3316 = vadd.f32 %v3267, %v3315
        %3317 = vdwg.mxu0
        %3318 = vmatpush.bf16.msra.mxu0 %v2517
        %3319 = vmatpush.bf16.msra.mxu0 %v2512
        %3320 = vmatpush.bf16.msra.mxu0 %v2507
        %3321 = vmatpush.bf16.msra.mxu0 %v2502
        %3322 = vmatpush.bf16.msra.mxu0 %v2497
        %3323 = vmatpush.bf16.msra.mxu0 %v2492
        %3324 = vmatpush.bf16.msra.mxu0 %v2487
        %3325 = vmatpush.bf16.msra.mxu0 %v2482
        %3326 = vmatmul.bf16.gmra.mxu0 %v474
        %v3327 = vpop.f32.mrf.mxu0
        %v3328 = vadd.f32 %v3279, %v3327
        %v3329 = vpop.f32.mrf.mxu0
        %v3330 = vadd.f32 %v3281, %v3329
        %3331 = vmatmul.bf16.gmra.mxu0 %v484
        %v3332 = vpop.f32.mrf.mxu0
        %v3333 = vadd.f32 %v3284, %v3332
        %v3334 = vpop.f32.mrf.mxu0
        %v3335 = vadd.f32 %v3286, %v3334
        %3336 = vmatmul.bf16.gmra.mxu0 %v494
        %v3337 = vpop.f32.mrf.mxu0
        %v3338 = vadd.f32 %v3289, %v3337
        %v3339 = vpop.f32.mrf.mxu0
        %v3340 = vadd.f32 %v3291, %v3339
        %3341 = vmatmul.bf16.gmra.mxu0 %v504
        %v3342 = vpop.f32.mrf.mxu0
        %v3343 = vadd.f32 %v3294, %v3342
        %v3344 = vpop.f32.mrf.mxu0
        %v3345 = vadd.f32 %v3296, %v3344
        %3346 = vmatmul.bf16.gmra.mxu0 %v514
        %v3347 = vpop.f32.mrf.mxu0
        %v3348 = vadd.f32 %v3299, %v3347
        %v3349 = vpop.f32.mrf.mxu0
        %v3350 = vadd.f32 %v3301, %v3349
        %3351 = vmatmul.bf16.gmra.mxu0 %v524
        %v3352 = vpop.f32.mrf.mxu0
        %v3353 = vadd.f32 %v3304, %v3352
        %v3354 = vpop.f32.mrf.mxu0
        %v3355 = vadd.f32 %v3306, %v3354
        %3356 = vmatmul.bf16.gmra.mxu0 %v534
        %v3357 = vpop.f32.mrf.mxu0
        %v3358 = vadd.f32 %v3309, %v3357
        %v3359 = vpop.f32.mrf.mxu0
        %v3360 = vadd.f32 %v3311, %v3359
        %3361 = vmatmul.bf16.gmra.mxu0 %v544
        %v3362 = vpop.f32.mrf.mxu0
        %v3363 = vadd.f32 %v3314, %v3362
        %v3364 = vpop.f32.mrf.mxu0
        %v3365 = vadd.f32 %v3316, %v3364
        %3366 = vdwg.mxu0
        %3367 = vmatpush.bf16.msra.mxu0 %v2557
        %3368 = vmatpush.bf16.msra.mxu0 %v2552
        %3369 = vmatpush.bf16.msra.mxu0 %v2547
        %3370 = vmatpush.bf16.msra.mxu0 %v2542
        %3371 = vmatpush.bf16.msra.mxu0 %v2537
        %3372 = vmatpush.bf16.msra.mxu0 %v2532
        %3373 = vmatpush.bf16.msra.mxu0 %v2527
        %3374 = vmatpush.bf16.msra.mxu0 %v2522
        %3375 = vmatmul.bf16.gmra.mxu0 %v475
        %v3376 = vpop.f32.mrf.mxu0
        %v3377 = vadd.f32 %v3328, %v3376
        %v3378 = vpop.f32.mrf.mxu0
        %v3379 = vadd.f32 %v3330, %v3378
        %3380 = vmatmul.bf16.gmra.mxu0 %v485
        %v3381 = vpop.f32.mrf.mxu0
        %v3382 = vadd.f32 %v3333, %v3381
        %v3383 = vpop.f32.mrf.mxu0
        %v3384 = vadd.f32 %v3335, %v3383
        %3385 = vmatmul.bf16.gmra.mxu0 %v495
        %v3386 = vpop.f32.mrf.mxu0
        %v3387 = vadd.f32 %v3338, %v3386
        %v3388 = vpop.f32.mrf.mxu0
        %v3389 = vadd.f32 %v3340, %v3388
        %3390 = vmatmul.bf16.gmra.mxu0 %v505
        %v3391 = vpop.f32.mrf.mxu0
        %v3392 = vadd.f32 %v3343, %v3391
        %v3393 = vpop.f32.mrf.mxu0
        %v3394 = vadd.f32 %v3345, %v3393
        %3395 = vmatmul.bf16.gmra.mxu0 %v515
        %v3396 = vpop.f32.mrf.mxu0
        %v3397 = vadd.f32 %v3348, %v3396
        %v3398 = vpop.f32.mrf.mxu0
        %v3399 = vadd.f32 %v3350, %v3398
        %3400 = vmatmul.bf16.gmra.mxu0 %v525
        %v3401 = vpop.f32.mrf.mxu0
        %v3402 = vadd.f32 %v3353, %v3401
        %v3403 = vpop.f32.mrf.mxu0
        %v3404 = vadd.f32 %v3355, %v3403
        %3405 = vmatmul.bf16.gmra.mxu0 %v535
        %v3406 = vpop.f32.mrf.mxu0
        %v3407 = vadd.f32 %v3358, %v3406
        %v3408 = vpop.f32.mrf.mxu0
        %v3409 = vadd.f32 %v3360, %v3408
        %3410 = vmatmul.bf16.gmra.mxu0 %v545
        %v3411 = vpop.f32.mrf.mxu0
        %v3412 = vadd.f32 %v3363, %v3411
        %v3413 = vpop.f32.mrf.mxu0
        %v3414 = vadd.f32 %v3365, %v3413
        %3415 = vdwg.mxu0
        %3416 = vmatpush.bf16.msra.mxu0 %v2597
        %3417 = vmatpush.bf16.msra.mxu0 %v2592
        %3418 = vmatpush.bf16.msra.mxu0 %v2587
        %3419 = vmatpush.bf16.msra.mxu0 %v2582
        %3420 = vmatpush.bf16.msra.mxu0 %v2577
        %3421 = vmatpush.bf16.msra.mxu0 %v2572
        %3422 = vmatpush.bf16.msra.mxu0 %v2567
        %3423 = vmatpush.bf16.msra.mxu0 %v2562
        %3424 = vmatmul.bf16.gmra.mxu0 %v476
        %v3425 = vpop.f32.mrf.mxu0
        %v3426 = vadd.f32 %v3377, %v3425
        %v3427 = vpop.f32.mrf.mxu0
        %v3428 = vadd.f32 %v3379, %v3427
        %3429 = vmatmul.bf16.gmra.mxu0 %v486
        %v3430 = vpop.f32.mrf.mxu0
        %v3431 = vadd.f32 %v3382, %v3430
        %v3432 = vpop.f32.mrf.mxu0
        %v3433 = vadd.f32 %v3384, %v3432
        %3434 = vmatmul.bf16.gmra.mxu0 %v496
        %v3435 = vpop.f32.mrf.mxu0
        %v3436 = vadd.f32 %v3387, %v3435
        %v3437 = vpop.f32.mrf.mxu0
        %v3438 = vadd.f32 %v3389, %v3437
        %3439 = vmatmul.bf16.gmra.mxu0 %v506
        %v3440 = vpop.f32.mrf.mxu0
        %v3441 = vadd.f32 %v3392, %v3440
        %v3442 = vpop.f32.mrf.mxu0
        %v3443 = vadd.f32 %v3394, %v3442
        %3444 = vmatmul.bf16.gmra.mxu0 %v516
        %v3445 = vpop.f32.mrf.mxu0
        %v3446 = vadd.f32 %v3397, %v3445
        %v3447 = vpop.f32.mrf.mxu0
        %v3448 = vadd.f32 %v3399, %v3447
        %3449 = vmatmul.bf16.gmra.mxu0 %v526
        %v3450 = vpop.f32.mrf.mxu0
        %v3451 = vadd.f32 %v3402, %v3450
        %v3452 = vpop.f32.mrf.mxu0
        %v3453 = vadd.f32 %v3404, %v3452
        %3454 = vmatmul.bf16.gmra.mxu0 %v536
        %v3455 = vpop.f32.mrf.mxu0
        %v3456 = vadd.f32 %v3407, %v3455
        %v3457 = vpop.f32.mrf.mxu0
        %v3458 = vadd.f32 %v3409, %v3457
        %3459 = vmatmul.bf16.gmra.mxu0 %v546
        %v3460 = vpop.f32.mrf.mxu0
        %v3461 = vadd.f32 %v3412, %v3460
        %v3462 = vpop.f32.mrf.mxu0
        %v3463 = vadd.f32 %v3414, %v3462
        %3464 = vdwg.mxu0
        %3465 = vmatpush.bf16.msra.mxu0 %v2637
        %3466 = vmatpush.bf16.msra.mxu0 %v2632
        %3467 = vmatpush.bf16.msra.mxu0 %v2627
        %3468 = vmatpush.bf16.msra.mxu0 %v2622
        %3469 = vmatpush.bf16.msra.mxu0 %v2617
        %3470 = vmatpush.bf16.msra.mxu0 %v2612
        %3471 = vmatpush.bf16.msra.mxu0 %v2607
        %3472 = vmatpush.bf16.msra.mxu0 %v2602
        %3473 = vmatmul.bf16.gmra.mxu0 %v477
        %v3474 = vpop.f32.mrf.mxu0
        %v3475 = vadd.f32 %v3426, %v3474
        %v3476 = vpop.f32.mrf.mxu0
        %v3477 = vadd.f32 %v3428, %v3476
        %3478 = vmatmul.bf16.gmra.mxu0 %v487
        %v3479 = vpop.f32.mrf.mxu0
        %v3480 = vadd.f32 %v3431, %v3479
        %v3481 = vpop.f32.mrf.mxu0
        %v3482 = vadd.f32 %v3433, %v3481
        %3483 = vmatmul.bf16.gmra.mxu0 %v497
        %v3484 = vpop.f32.mrf.mxu0
        %v3485 = vadd.f32 %v3436, %v3484
        %v3486 = vpop.f32.mrf.mxu0
        %v3487 = vadd.f32 %v3438, %v3486
        %3488 = vmatmul.bf16.gmra.mxu0 %v507
        %v3489 = vpop.f32.mrf.mxu0
        %v3490 = vadd.f32 %v3441, %v3489
        %v3491 = vpop.f32.mrf.mxu0
        %v3492 = vadd.f32 %v3443, %v3491
        %3493 = vmatmul.bf16.gmra.mxu0 %v517
        %v3494 = vpop.f32.mrf.mxu0
        %v3495 = vadd.f32 %v3446, %v3494
        %v3496 = vpop.f32.mrf.mxu0
        %v3497 = vadd.f32 %v3448, %v3496
        %3498 = vmatmul.bf16.gmra.mxu0 %v527
        %v3499 = vpop.f32.mrf.mxu0
        %v3500 = vadd.f32 %v3451, %v3499
        %v3501 = vpop.f32.mrf.mxu0
        %v3502 = vadd.f32 %v3453, %v3501
        %3503 = vmatmul.bf16.gmra.mxu0 %v537
        %v3504 = vpop.f32.mrf.mxu0
        %v3505 = vadd.f32 %v3456, %v3504
        %v3506 = vpop.f32.mrf.mxu0
        %v3507 = vadd.f32 %v3458, %v3506
        %3508 = vmatmul.bf16.gmra.mxu0 %v547
        %v3509 = vpop.f32.mrf.mxu0
        %v3510 = vadd.f32 %v3461, %v3509
        %v3511 = vpop.f32.mrf.mxu0
        %v3512 = vadd.f32 %v3463, %v3511
        %3513 = vdwg.mxu0
        %3514 = vmatpush.bf16.msra.mxu0 %v2677
        %3515 = vmatpush.bf16.msra.mxu0 %v2672
        %3516 = vmatpush.bf16.msra.mxu0 %v2667
        %3517 = vmatpush.bf16.msra.mxu0 %v2662
        %3518 = vmatpush.bf16.msra.mxu0 %v2657
        %3519 = vmatpush.bf16.msra.mxu0 %v2652
        %3520 = vmatpush.bf16.msra.mxu0 %v2647
        %3521 = vmatpush.bf16.msra.mxu0 %v2642
        %3522 = vmatmul.bf16.gmra.mxu0 %v478
        %v3523 = vpop.f32.mrf.mxu0
        %v3524 = vadd.f32 %v3475, %v3523
        %v3525 = vpop.f32.mrf.mxu0
        %v3526 = vadd.f32 %v3477, %v3525
        %3527 = vmatmul.bf16.gmra.mxu0 %v488
        %v3528 = vpop.f32.mrf.mxu0
        %v3529 = vadd.f32 %v3480, %v3528
        %v3530 = vpop.f32.mrf.mxu0
        %v3531 = vadd.f32 %v3482, %v3530
        %3532 = vmatmul.bf16.gmra.mxu0 %v498
        %v3533 = vpop.f32.mrf.mxu0
        %v3534 = vadd.f32 %v3485, %v3533
        %v3535 = vpop.f32.mrf.mxu0
        %v3536 = vadd.f32 %v3487, %v3535
        %3537 = vmatmul.bf16.gmra.mxu0 %v508
        %v3538 = vpop.f32.mrf.mxu0
        %v3539 = vadd.f32 %v3490, %v3538
        %v3540 = vpop.f32.mrf.mxu0
        %v3541 = vadd.f32 %v3492, %v3540
        %3542 = vmatmul.bf16.gmra.mxu0 %v518
        %v3543 = vpop.f32.mrf.mxu0
        %v3544 = vadd.f32 %v3495, %v3543
        %v3545 = vpop.f32.mrf.mxu0
        %v3546 = vadd.f32 %v3497, %v3545
        %3547 = vmatmul.bf16.gmra.mxu0 %v528
        %v3548 = vpop.f32.mrf.mxu0
        %v3549 = vadd.f32 %v3500, %v3548
        %v3550 = vpop.f32.mrf.mxu0
        %v3551 = vadd.f32 %v3502, %v3550
        %3552 = vmatmul.bf16.gmra.mxu0 %v538
        %v3553 = vpop.f32.mrf.mxu0
        %v3554 = vadd.f32 %v3505, %v3553
        %v3555 = vpop.f32.mrf.mxu0
        %v3556 = vadd.f32 %v3507, %v3555
        %3557 = vmatmul.bf16.gmra.mxu0 %v548
        %v3558 = vpop.f32.mrf.mxu0
        %v3559 = vadd.f32 %v3510, %v3558
        %v3560 = vpop.f32.mrf.mxu0
        %v3561 = vadd.f32 %v3512, %v3560
        %3562 = vdwg.mxu0
        %3563 = vmatpush.bf16.msra.mxu0 %v2717
        %3564 = vmatpush.bf16.msra.mxu0 %v2712
        %3565 = vmatpush.bf16.msra.mxu0 %v2707
        %3566 = vmatpush.bf16.msra.mxu0 %v2702
        %3567 = vmatpush.bf16.msra.mxu0 %v2697
        %3568 = vmatpush.bf16.msra.mxu0 %v2692
        %3569 = vmatpush.bf16.msra.mxu0 %v2687
        %3570 = vmatpush.bf16.msra.mxu0 %v2682
        %3571 = vmatmul.bf16.gmra.mxu0 %v479
        %v3572 = vpop.f32.mrf.mxu0
        %v3573 = vadd.f32 %v3524, %v3572
        %v3574 = vpop.f32.mrf.mxu0
        %v3575 = vadd.f32 %v3526, %v3574
        %3576 = vmatmul.bf16.gmra.mxu0 %v489
        %v3577 = vpop.f32.mrf.mxu0
        %v3578 = vadd.f32 %v3529, %v3577
        %v3579 = vpop.f32.mrf.mxu0
        %v3580 = vadd.f32 %v3531, %v3579
        %3581 = vmatmul.bf16.gmra.mxu0 %v499
        %v3582 = vpop.f32.mrf.mxu0
        %v3583 = vadd.f32 %v3534, %v3582
        %v3584 = vpop.f32.mrf.mxu0
        %v3585 = vadd.f32 %v3536, %v3584
        %3586 = vmatmul.bf16.gmra.mxu0 %v509
        %v3587 = vpop.f32.mrf.mxu0
        %v3588 = vadd.f32 %v3539, %v3587
        %v3589 = vpop.f32.mrf.mxu0
        %v3590 = vadd.f32 %v3541, %v3589
        %3591 = vmatmul.bf16.gmra.mxu0 %v519
        %v3592 = vpop.f32.mrf.mxu0
        %v3593 = vadd.f32 %v3544, %v3592
        %v3594 = vpop.f32.mrf.mxu0
        %v3595 = vadd.f32 %v3546, %v3594
        %3596 = vmatmul.bf16.gmra.mxu0 %v529
        %v3597 = vpop.f32.mrf.mxu0
        %v3598 = vadd.f32 %v3549, %v3597
        %v3599 = vpop.f32.mrf.mxu0
        %v3600 = vadd.f32 %v3551, %v3599
        %3601 = vmatmul.bf16.gmra.mxu0 %v539
        %v3602 = vpop.f32.mrf.mxu0
        %v3603 = vadd.f32 %v3554, %v3602
        %v3604 = vpop.f32.mrf.mxu0
        %v3605 = vadd.f32 %v3556, %v3604
        %3606 = vmatmul.bf16.gmra.mxu0 %v549
        %v3607 = vpop.f32.mrf.mxu0
        %v3608 = vadd.f32 %v3559, %v3607
        %v3609 = vpop.f32.mrf.mxu0
        %v3610 = vadd.f32 %v3561, %v3609
        %3611 = vdwg.mxu0
        %3612 = vmatpush.bf16.msra.mxu0 %v2358
        %3613 = vmatpush.bf16.msra.mxu0 %v2353
        %3614 = vmatpush.bf16.msra.mxu0 %v2348
        %3615 = vmatpush.bf16.msra.mxu0 %v2343
        %3616 = vmatpush.bf16.msra.mxu0 %v2338
        %3617 = vmatpush.bf16.msra.mxu0 %v2333
        %3618 = vmatpush.bf16.msra.mxu0 %v2328
        %3619 = vmatpush.bf16.msra.mxu0 %v2323
        %3620 = vmatmul.bf16.gmra.mxu0 %v470
        %v3621 = vpop.f32.mrf.mxu0
        %v3622 = vadd.f32 %v1033, %v3621
        %v3623 = vpop.f32.mrf.mxu0
        %v3624 = vadd.f32 %v1033, %v3623
        %3625 = vmatmul.bf16.gmra.mxu0 %v480
        %v3626 = vpop.f32.mrf.mxu0
        %v3627 = vadd.f32 %v1033, %v3626
        %v3628 = vpop.f32.mrf.mxu0
        %v3629 = vadd.f32 %v1033, %v3628
        %3630 = vmatmul.bf16.gmra.mxu0 %v490
        %v3631 = vpop.f32.mrf.mxu0
        %v3632 = vadd.f32 %v1033, %v3631
        %v3633 = vpop.f32.mrf.mxu0
        %v3634 = vadd.f32 %v1033, %v3633
        %3635 = vmatmul.bf16.gmra.mxu0 %v500
        %v3636 = vpop.f32.mrf.mxu0
        %v3637 = vadd.f32 %v1033, %v3636
        %v3638 = vpop.f32.mrf.mxu0
        %v3639 = vadd.f32 %v1033, %v3638
        %3640 = vmatmul.bf16.gmra.mxu0 %v510
        %v3641 = vpop.f32.mrf.mxu0
        %v3642 = vadd.f32 %v1033, %v3641
        %v3643 = vpop.f32.mrf.mxu0
        %v3644 = vadd.f32 %v1033, %v3643
        %3645 = vmatmul.bf16.gmra.mxu0 %v520
        %v3646 = vpop.f32.mrf.mxu0
        %v3647 = vadd.f32 %v1033, %v3646
        %v3648 = vpop.f32.mrf.mxu0
        %v3649 = vadd.f32 %v1033, %v3648
        %3650 = vmatmul.bf16.gmra.mxu0 %v530
        %v3651 = vpop.f32.mrf.mxu0
        %v3652 = vadd.f32 %v1033, %v3651
        %v3653 = vpop.f32.mrf.mxu0
        %v3654 = vadd.f32 %v1033, %v3653
        %3655 = vmatmul.bf16.gmra.mxu0 %v540
        %v3656 = vpop.f32.mrf.mxu0
        %v3657 = vadd.f32 %v1033, %v3656
        %v3658 = vpop.f32.mrf.mxu0
        %v3659 = vadd.f32 %v1033, %v3658
        %3660 = vdwg.mxu0
        %3661 = vmatpush.bf16.msra.mxu0 %v2398
        %3662 = vmatpush.bf16.msra.mxu0 %v2393
        %3663 = vmatpush.bf16.msra.mxu0 %v2388
        %3664 = vmatpush.bf16.msra.mxu0 %v2383
        %3665 = vmatpush.bf16.msra.mxu0 %v2378
        %3666 = vmatpush.bf16.msra.mxu0 %v2373
        %3667 = vmatpush.bf16.msra.mxu0 %v2368
        %3668 = vmatpush.bf16.msra.mxu0 %v2363
        %3669 = vmatmul.bf16.gmra.mxu0 %v471
        %v3670 = vpop.f32.mrf.mxu0
        %v3671 = vadd.f32 %v3622, %v3670
        %v3672 = vpop.f32.mrf.mxu0
        %v3673 = vadd.f32 %v3624, %v3672
        %3674 = vmatmul.bf16.gmra.mxu0 %v481
        %v3675 = vpop.f32.mrf.mxu0
        %v3676 = vadd.f32 %v3627, %v3675
        %v3677 = vpop.f32.mrf.mxu0
        %v3678 = vadd.f32 %v3629, %v3677
        %3679 = vmatmul.bf16.gmra.mxu0 %v491
        %v3680 = vpop.f32.mrf.mxu0
        %v3681 = vadd.f32 %v3632, %v3680
        %v3682 = vpop.f32.mrf.mxu0
        %v3683 = vadd.f32 %v3634, %v3682
        %3684 = vmatmul.bf16.gmra.mxu0 %v501
        %v3685 = vpop.f32.mrf.mxu0
        %v3686 = vadd.f32 %v3637, %v3685
        %v3687 = vpop.f32.mrf.mxu0
        %v3688 = vadd.f32 %v3639, %v3687
        %3689 = vmatmul.bf16.gmra.mxu0 %v511
        %v3690 = vpop.f32.mrf.mxu0
        %v3691 = vadd.f32 %v3642, %v3690
        %v3692 = vpop.f32.mrf.mxu0
        %v3693 = vadd.f32 %v3644, %v3692
        %3694 = vmatmul.bf16.gmra.mxu0 %v521
        %v3695 = vpop.f32.mrf.mxu0
        %v3696 = vadd.f32 %v3647, %v3695
        %v3697 = vpop.f32.mrf.mxu0
        %v3698 = vadd.f32 %v3649, %v3697
        %3699 = vmatmul.bf16.gmra.mxu0 %v531
        %v3700 = vpop.f32.mrf.mxu0
        %v3701 = vadd.f32 %v3652, %v3700
        %v3702 = vpop.f32.mrf.mxu0
        %v3703 = vadd.f32 %v3654, %v3702
        %3704 = vmatmul.bf16.gmra.mxu0 %v541
        %v3705 = vpop.f32.mrf.mxu0
        %v3706 = vadd.f32 %v3657, %v3705
        %v3707 = vpop.f32.mrf.mxu0
        %v3708 = vadd.f32 %v3659, %v3707
        %3709 = vdwg.mxu0
        %3710 = vmatpush.bf16.msra.mxu0 %v2438
        %3711 = vmatpush.bf16.msra.mxu0 %v2433
        %3712 = vmatpush.bf16.msra.mxu0 %v2428
        %3713 = vmatpush.bf16.msra.mxu0 %v2423
        %3714 = vmatpush.bf16.msra.mxu0 %v2418
        %3715 = vmatpush.bf16.msra.mxu0 %v2413
        %3716 = vmatpush.bf16.msra.mxu0 %v2408
        %3717 = vmatpush.bf16.msra.mxu0 %v2403
        %3718 = vmatmul.bf16.gmra.mxu0 %v472
        %v3719 = vpop.f32.mrf.mxu0
        %v3720 = vadd.f32 %v3671, %v3719
        %v3721 = vpop.f32.mrf.mxu0
        %v3722 = vadd.f32 %v3673, %v3721
        %3723 = vmatmul.bf16.gmra.mxu0 %v482
        %v3724 = vpop.f32.mrf.mxu0
        %v3725 = vadd.f32 %v3676, %v3724
        %v3726 = vpop.f32.mrf.mxu0
        %v3727 = vadd.f32 %v3678, %v3726
        %3728 = vmatmul.bf16.gmra.mxu0 %v492
        %v3729 = vpop.f32.mrf.mxu0
        %v3730 = vadd.f32 %v3681, %v3729
        %v3731 = vpop.f32.mrf.mxu0
        %v3732 = vadd.f32 %v3683, %v3731
        %3733 = vmatmul.bf16.gmra.mxu0 %v502
        %v3734 = vpop.f32.mrf.mxu0
        %v3735 = vadd.f32 %v3686, %v3734
        %v3736 = vpop.f32.mrf.mxu0
        %v3737 = vadd.f32 %v3688, %v3736
        %3738 = vmatmul.bf16.gmra.mxu0 %v512
        %v3739 = vpop.f32.mrf.mxu0
        %v3740 = vadd.f32 %v3691, %v3739
        %v3741 = vpop.f32.mrf.mxu0
        %v3742 = vadd.f32 %v3693, %v3741
        %3743 = vmatmul.bf16.gmra.mxu0 %v522
        %v3744 = vpop.f32.mrf.mxu0
        %v3745 = vadd.f32 %v3696, %v3744
        %v3746 = vpop.f32.mrf.mxu0
        %v3747 = vadd.f32 %v3698, %v3746
        %3748 = vmatmul.bf16.gmra.mxu0 %v532
        %v3749 = vpop.f32.mrf.mxu0
        %v3750 = vadd.f32 %v3701, %v3749
        %v3751 = vpop.f32.mrf.mxu0
        %v3752 = vadd.f32 %v3703, %v3751
        %3753 = vmatmul.bf16.gmra.mxu0 %v542
        %v3754 = vpop.f32.mrf.mxu0
        %v3755 = vadd.f32 %v3706, %v3754
        %v3756 = vpop.f32.mrf.mxu0
        %v3757 = vadd.f32 %v3708, %v3756
        %3758 = vdwg.mxu0
        %3759 = vmatpush.bf16.msra.mxu0 %v2478
        %3760 = vmatpush.bf16.msra.mxu0 %v2473
        %3761 = vmatpush.bf16.msra.mxu0 %v2468
        %3762 = vmatpush.bf16.msra.mxu0 %v2463
        %3763 = vmatpush.bf16.msra.mxu0 %v2458
        %3764 = vmatpush.bf16.msra.mxu0 %v2453
        %3765 = vmatpush.bf16.msra.mxu0 %v2448
        %3766 = vmatpush.bf16.msra.mxu0 %v2443
        %3767 = vmatmul.bf16.gmra.mxu0 %v473
        %v3768 = vpop.f32.mrf.mxu0
        %v3769 = vadd.f32 %v3720, %v3768
        %v3770 = vpop.f32.mrf.mxu0
        %v3771 = vadd.f32 %v3722, %v3770
        %3772 = vmatmul.bf16.gmra.mxu0 %v483
        %v3773 = vpop.f32.mrf.mxu0
        %v3774 = vadd.f32 %v3725, %v3773
        %v3775 = vpop.f32.mrf.mxu0
        %v3776 = vadd.f32 %v3727, %v3775
        %3777 = vmatmul.bf16.gmra.mxu0 %v493
        %v3778 = vpop.f32.mrf.mxu0
        %v3779 = vadd.f32 %v3730, %v3778
        %v3780 = vpop.f32.mrf.mxu0
        %v3781 = vadd.f32 %v3732, %v3780
        %3782 = vmatmul.bf16.gmra.mxu0 %v503
        %v3783 = vpop.f32.mrf.mxu0
        %v3784 = vadd.f32 %v3735, %v3783
        %v3785 = vpop.f32.mrf.mxu0
        %v3786 = vadd.f32 %v3737, %v3785
        %3787 = vmatmul.bf16.gmra.mxu0 %v513
        %v3788 = vpop.f32.mrf.mxu0
        %v3789 = vadd.f32 %v3740, %v3788
        %v3790 = vpop.f32.mrf.mxu0
        %v3791 = vadd.f32 %v3742, %v3790
        %3792 = vmatmul.bf16.gmra.mxu0 %v523
        %v3793 = vpop.f32.mrf.mxu0
        %v3794 = vadd.f32 %v3745, %v3793
        %v3795 = vpop.f32.mrf.mxu0
        %v3796 = vadd.f32 %v3747, %v3795
        %3797 = vmatmul.bf16.gmra.mxu0 %v533
        %v3798 = vpop.f32.mrf.mxu0
        %v3799 = vadd.f32 %v3750, %v3798
        %v3800 = vpop.f32.mrf.mxu0
        %v3801 = vadd.f32 %v3752, %v3800
        %3802 = vmatmul.bf16.gmra.mxu0 %v543
        %v3803 = vpop.f32.mrf.mxu0
        %v3804 = vadd.f32 %v3755, %v3803
        %v3805 = vpop.f32.mrf.mxu0
        %v3806 = vadd.f32 %v3757, %v3805
        %3807 = vdwg.mxu0
        %3808 = vmatpush.bf16.msra.mxu0 %v2518
        %3809 = vmatpush.bf16.msra.mxu0 %v2513
        %3810 = vmatpush.bf16.msra.mxu0 %v2508
        %3811 = vmatpush.bf16.msra.mxu0 %v2503
        %3812 = vmatpush.bf16.msra.mxu0 %v2498
        %3813 = vmatpush.bf16.msra.mxu0 %v2493
        %3814 = vmatpush.bf16.msra.mxu0 %v2488
        %3815 = vmatpush.bf16.msra.mxu0 %v2483
        %3816 = vmatmul.bf16.gmra.mxu0 %v474
        %v3817 = vpop.f32.mrf.mxu0
        %v3818 = vadd.f32 %v3769, %v3817
        %v3819 = vpop.f32.mrf.mxu0
        %v3820 = vadd.f32 %v3771, %v3819
        %3821 = vmatmul.bf16.gmra.mxu0 %v484
        %v3822 = vpop.f32.mrf.mxu0
        %v3823 = vadd.f32 %v3774, %v3822
        %v3824 = vpop.f32.mrf.mxu0
        %v3825 = vadd.f32 %v3776, %v3824
        %3826 = vmatmul.bf16.gmra.mxu0 %v494
        %v3827 = vpop.f32.mrf.mxu0
        %v3828 = vadd.f32 %v3779, %v3827
        %v3829 = vpop.f32.mrf.mxu0
        %v3830 = vadd.f32 %v3781, %v3829
        %3831 = vmatmul.bf16.gmra.mxu0 %v504
        %v3832 = vpop.f32.mrf.mxu0
        %v3833 = vadd.f32 %v3784, %v3832
        %v3834 = vpop.f32.mrf.mxu0
        %v3835 = vadd.f32 %v3786, %v3834
        %3836 = vmatmul.bf16.gmra.mxu0 %v514
        %v3837 = vpop.f32.mrf.mxu0
        %v3838 = vadd.f32 %v3789, %v3837
        %v3839 = vpop.f32.mrf.mxu0
        %v3840 = vadd.f32 %v3791, %v3839
        %3841 = vmatmul.bf16.gmra.mxu0 %v524
        %v3842 = vpop.f32.mrf.mxu0
        %v3843 = vadd.f32 %v3794, %v3842
        %v3844 = vpop.f32.mrf.mxu0
        %v3845 = vadd.f32 %v3796, %v3844
        %3846 = vmatmul.bf16.gmra.mxu0 %v534
        %v3847 = vpop.f32.mrf.mxu0
        %v3848 = vadd.f32 %v3799, %v3847
        %v3849 = vpop.f32.mrf.mxu0
        %v3850 = vadd.f32 %v3801, %v3849
        %3851 = vmatmul.bf16.gmra.mxu0 %v544
        %v3852 = vpop.f32.mrf.mxu0
        %v3853 = vadd.f32 %v3804, %v3852
        %v3854 = vpop.f32.mrf.mxu0
        %v3855 = vadd.f32 %v3806, %v3854
        %3856 = vdwg.mxu0
        %3857 = vmatpush.bf16.msra.mxu0 %v2558
        %3858 = vmatpush.bf16.msra.mxu0 %v2553
        %3859 = vmatpush.bf16.msra.mxu0 %v2548
        %3860 = vmatpush.bf16.msra.mxu0 %v2543
        %3861 = vmatpush.bf16.msra.mxu0 %v2538
        %3862 = vmatpush.bf16.msra.mxu0 %v2533
        %3863 = vmatpush.bf16.msra.mxu0 %v2528
        %3864 = vmatpush.bf16.msra.mxu0 %v2523
        %3865 = vmatmul.bf16.gmra.mxu0 %v475
        %v3866 = vpop.f32.mrf.mxu0
        %v3867 = vadd.f32 %v3818, %v3866
        %v3868 = vpop.f32.mrf.mxu0
        %v3869 = vadd.f32 %v3820, %v3868
        %3870 = vmatmul.bf16.gmra.mxu0 %v485
        %v3871 = vpop.f32.mrf.mxu0
        %v3872 = vadd.f32 %v3823, %v3871
        %v3873 = vpop.f32.mrf.mxu0
        %v3874 = vadd.f32 %v3825, %v3873
        %3875 = vmatmul.bf16.gmra.mxu0 %v495
        %v3876 = vpop.f32.mrf.mxu0
        %v3877 = vadd.f32 %v3828, %v3876
        %v3878 = vpop.f32.mrf.mxu0
        %v3879 = vadd.f32 %v3830, %v3878
        %3880 = vmatmul.bf16.gmra.mxu0 %v505
        %v3881 = vpop.f32.mrf.mxu0
        %v3882 = vadd.f32 %v3833, %v3881
        %v3883 = vpop.f32.mrf.mxu0
        %v3884 = vadd.f32 %v3835, %v3883
        %3885 = vmatmul.bf16.gmra.mxu0 %v515
        %v3886 = vpop.f32.mrf.mxu0
        %v3887 = vadd.f32 %v3838, %v3886
        %v3888 = vpop.f32.mrf.mxu0
        %v3889 = vadd.f32 %v3840, %v3888
        %3890 = vmatmul.bf16.gmra.mxu0 %v525
        %v3891 = vpop.f32.mrf.mxu0
        %v3892 = vadd.f32 %v3843, %v3891
        %v3893 = vpop.f32.mrf.mxu0
        %v3894 = vadd.f32 %v3845, %v3893
        %3895 = vmatmul.bf16.gmra.mxu0 %v535
        %v3896 = vpop.f32.mrf.mxu0
        %v3897 = vadd.f32 %v3848, %v3896
        %v3898 = vpop.f32.mrf.mxu0
        %v3899 = vadd.f32 %v3850, %v3898
        %3900 = vmatmul.bf16.gmra.mxu0 %v545
        %v3901 = vpop.f32.mrf.mxu0
        %v3902 = vadd.f32 %v3853, %v3901
        %v3903 = vpop.f32.mrf.mxu0
        %v3904 = vadd.f32 %v3855, %v3903
        %3905 = vdwg.mxu0
        %3906 = vmatpush.bf16.msra.mxu0 %v2598
        %3907 = vmatpush.bf16.msra.mxu0 %v2593
        %3908 = vmatpush.bf16.msra.mxu0 %v2588
        %3909 = vmatpush.bf16.msra.mxu0 %v2583
        %3910 = vmatpush.bf16.msra.mxu0 %v2578
        %3911 = vmatpush.bf16.msra.mxu0 %v2573
        %3912 = vmatpush.bf16.msra.mxu0 %v2568
        %3913 = vmatpush.bf16.msra.mxu0 %v2563
        %3914 = vmatmul.bf16.gmra.mxu0 %v476
        %v3915 = vpop.f32.mrf.mxu0
        %v3916 = vadd.f32 %v3867, %v3915
        %v3917 = vpop.f32.mrf.mxu0
        %v3918 = vadd.f32 %v3869, %v3917
        %3919 = vmatmul.bf16.gmra.mxu0 %v486
        %v3920 = vpop.f32.mrf.mxu0
        %v3921 = vadd.f32 %v3872, %v3920
        %v3922 = vpop.f32.mrf.mxu0
        %v3923 = vadd.f32 %v3874, %v3922
        %3924 = vmatmul.bf16.gmra.mxu0 %v496
        %v3925 = vpop.f32.mrf.mxu0
        %v3926 = vadd.f32 %v3877, %v3925
        %v3927 = vpop.f32.mrf.mxu0
        %v3928 = vadd.f32 %v3879, %v3927
        %3929 = vmatmul.bf16.gmra.mxu0 %v506
        %v3930 = vpop.f32.mrf.mxu0
        %v3931 = vadd.f32 %v3882, %v3930
        %v3932 = vpop.f32.mrf.mxu0
        %v3933 = vadd.f32 %v3884, %v3932
        %3934 = vmatmul.bf16.gmra.mxu0 %v516
        %v3935 = vpop.f32.mrf.mxu0
        %v3936 = vadd.f32 %v3887, %v3935
        %v3937 = vpop.f32.mrf.mxu0
        %v3938 = vadd.f32 %v3889, %v3937
        %3939 = vmatmul.bf16.gmra.mxu0 %v526
        %v3940 = vpop.f32.mrf.mxu0
        %v3941 = vadd.f32 %v3892, %v3940
        %v3942 = vpop.f32.mrf.mxu0
        %v3943 = vadd.f32 %v3894, %v3942
        %3944 = vmatmul.bf16.gmra.mxu0 %v536
        %v3945 = vpop.f32.mrf.mxu0
        %v3946 = vadd.f32 %v3897, %v3945
        %v3947 = vpop.f32.mrf.mxu0
        %v3948 = vadd.f32 %v3899, %v3947
        %3949 = vmatmul.bf16.gmra.mxu0 %v546
        %v3950 = vpop.f32.mrf.mxu0
        %v3951 = vadd.f32 %v3902, %v3950
        %v3952 = vpop.f32.mrf.mxu0
        %v3953 = vadd.f32 %v3904, %v3952
        %3954 = vdwg.mxu0
        %3955 = vmatpush.bf16.msra.mxu0 %v2638
        %3956 = vmatpush.bf16.msra.mxu0 %v2633
        %3957 = vmatpush.bf16.msra.mxu0 %v2628
        %3958 = vmatpush.bf16.msra.mxu0 %v2623
        %3959 = vmatpush.bf16.msra.mxu0 %v2618
        %3960 = vmatpush.bf16.msra.mxu0 %v2613
        %3961 = vmatpush.bf16.msra.mxu0 %v2608
        %3962 = vmatpush.bf16.msra.mxu0 %v2603
        %3963 = vmatmul.bf16.gmra.mxu0 %v477
        %v3964 = vpop.f32.mrf.mxu0
        %v3965 = vadd.f32 %v3916, %v3964
        %v3966 = vpop.f32.mrf.mxu0
        %v3967 = vadd.f32 %v3918, %v3966
        %3968 = vmatmul.bf16.gmra.mxu0 %v487
        %v3969 = vpop.f32.mrf.mxu0
        %v3970 = vadd.f32 %v3921, %v3969
        %v3971 = vpop.f32.mrf.mxu0
        %v3972 = vadd.f32 %v3923, %v3971
        %3973 = vmatmul.bf16.gmra.mxu0 %v497
        %v3974 = vpop.f32.mrf.mxu0
        %v3975 = vadd.f32 %v3926, %v3974
        %v3976 = vpop.f32.mrf.mxu0
        %v3977 = vadd.f32 %v3928, %v3976
        %3978 = vmatmul.bf16.gmra.mxu0 %v507
        %v3979 = vpop.f32.mrf.mxu0
        %v3980 = vadd.f32 %v3931, %v3979
        %v3981 = vpop.f32.mrf.mxu0
        %v3982 = vadd.f32 %v3933, %v3981
        %3983 = vmatmul.bf16.gmra.mxu0 %v517
        %v3984 = vpop.f32.mrf.mxu0
        %v3985 = vadd.f32 %v3936, %v3984
        %v3986 = vpop.f32.mrf.mxu0
        %v3987 = vadd.f32 %v3938, %v3986
        %3988 = vmatmul.bf16.gmra.mxu0 %v527
        %v3989 = vpop.f32.mrf.mxu0
        %v3990 = vadd.f32 %v3941, %v3989
        %v3991 = vpop.f32.mrf.mxu0
        %v3992 = vadd.f32 %v3943, %v3991
        %3993 = vmatmul.bf16.gmra.mxu0 %v537
        %v3994 = vpop.f32.mrf.mxu0
        %v3995 = vadd.f32 %v3946, %v3994
        %v3996 = vpop.f32.mrf.mxu0
        %v3997 = vadd.f32 %v3948, %v3996
        %3998 = vmatmul.bf16.gmra.mxu0 %v547
        %v3999 = vpop.f32.mrf.mxu0
        %v4000 = vadd.f32 %v3951, %v3999
        %v4001 = vpop.f32.mrf.mxu0
        %v4002 = vadd.f32 %v3953, %v4001
        %4003 = vdwg.mxu0
        %4004 = vmatpush.bf16.msra.mxu0 %v2678
        %4005 = vmatpush.bf16.msra.mxu0 %v2673
        %4006 = vmatpush.bf16.msra.mxu0 %v2668
        %4007 = vmatpush.bf16.msra.mxu0 %v2663
        %4008 = vmatpush.bf16.msra.mxu0 %v2658
        %4009 = vmatpush.bf16.msra.mxu0 %v2653
        %4010 = vmatpush.bf16.msra.mxu0 %v2648
        %4011 = vmatpush.bf16.msra.mxu0 %v2643
        %4012 = vmatmul.bf16.gmra.mxu0 %v478
        %v4013 = vpop.f32.mrf.mxu0
        %v4014 = vadd.f32 %v3965, %v4013
        %v4015 = vpop.f32.mrf.mxu0
        %v4016 = vadd.f32 %v3967, %v4015
        %4017 = vmatmul.bf16.gmra.mxu0 %v488
        %v4018 = vpop.f32.mrf.mxu0
        %v4019 = vadd.f32 %v3970, %v4018
        %v4020 = vpop.f32.mrf.mxu0
        %v4021 = vadd.f32 %v3972, %v4020
        %4022 = vmatmul.bf16.gmra.mxu0 %v498
        %v4023 = vpop.f32.mrf.mxu0
        %v4024 = vadd.f32 %v3975, %v4023
        %v4025 = vpop.f32.mrf.mxu0
        %v4026 = vadd.f32 %v3977, %v4025
        %4027 = vmatmul.bf16.gmra.mxu0 %v508
        %v4028 = vpop.f32.mrf.mxu0
        %v4029 = vadd.f32 %v3980, %v4028
        %v4030 = vpop.f32.mrf.mxu0
        %v4031 = vadd.f32 %v3982, %v4030
        %4032 = vmatmul.bf16.gmra.mxu0 %v518
        %v4033 = vpop.f32.mrf.mxu0
        %v4034 = vadd.f32 %v3985, %v4033
        %v4035 = vpop.f32.mrf.mxu0
        %v4036 = vadd.f32 %v3987, %v4035
        %4037 = vmatmul.bf16.gmra.mxu0 %v528
        %v4038 = vpop.f32.mrf.mxu0
        %v4039 = vadd.f32 %v3990, %v4038
        %v4040 = vpop.f32.mrf.mxu0
        %v4041 = vadd.f32 %v3992, %v4040
        %4042 = vmatmul.bf16.gmra.mxu0 %v538
        %v4043 = vpop.f32.mrf.mxu0
        %v4044 = vadd.f32 %v3995, %v4043
        %v4045 = vpop.f32.mrf.mxu0
        %v4046 = vadd.f32 %v3997, %v4045
        %4047 = vmatmul.bf16.gmra.mxu0 %v548
        %v4048 = vpop.f32.mrf.mxu0
        %v4049 = vadd.f32 %v4000, %v4048
        %v4050 = vpop.f32.mrf.mxu0
        %v4051 = vadd.f32 %v4002, %v4050
        %4052 = vdwg.mxu0
        %4053 = vmatpush.bf16.msra.mxu0 %v2718
        %4054 = vmatpush.bf16.msra.mxu0 %v2713
        %4055 = vmatpush.bf16.msra.mxu0 %v2708
        %4056 = vmatpush.bf16.msra.mxu0 %v2703
        %4057 = vmatpush.bf16.msra.mxu0 %v2698
        %4058 = vmatpush.bf16.msra.mxu0 %v2693
        %4059 = vmatpush.bf16.msra.mxu0 %v2688
        %4060 = vmatpush.bf16.msra.mxu0 %v2683
        %4061 = vmatmul.bf16.gmra.mxu0 %v479
        %v4062 = vpop.f32.mrf.mxu0
        %v4063 = vadd.f32 %v4014, %v4062
        %v4064 = vpop.f32.mrf.mxu0
        %v4065 = vadd.f32 %v4016, %v4064
        %4066 = vmatmul.bf16.gmra.mxu0 %v489
        %v4067 = vpop.f32.mrf.mxu0
        %v4068 = vadd.f32 %v4019, %v4067
        %v4069 = vpop.f32.mrf.mxu0
        %v4070 = vadd.f32 %v4021, %v4069
        %4071 = vmatmul.bf16.gmra.mxu0 %v499
        %v4072 = vpop.f32.mrf.mxu0
        %v4073 = vadd.f32 %v4024, %v4072
        %v4074 = vpop.f32.mrf.mxu0
        %v4075 = vadd.f32 %v4026, %v4074
        %4076 = vmatmul.bf16.gmra.mxu0 %v509
        %v4077 = vpop.f32.mrf.mxu0
        %v4078 = vadd.f32 %v4029, %v4077
        %v4079 = vpop.f32.mrf.mxu0
        %v4080 = vadd.f32 %v4031, %v4079
        %4081 = vmatmul.bf16.gmra.mxu0 %v519
        %v4082 = vpop.f32.mrf.mxu0
        %v4083 = vadd.f32 %v4034, %v4082
        %v4084 = vpop.f32.mrf.mxu0
        %v4085 = vadd.f32 %v4036, %v4084
        %4086 = vmatmul.bf16.gmra.mxu0 %v529
        %v4087 = vpop.f32.mrf.mxu0
        %v4088 = vadd.f32 %v4039, %v4087
        %v4089 = vpop.f32.mrf.mxu0
        %v4090 = vadd.f32 %v4041, %v4089
        %4091 = vmatmul.bf16.gmra.mxu0 %v539
        %v4092 = vpop.f32.mrf.mxu0
        %v4093 = vadd.f32 %v4044, %v4092
        %v4094 = vpop.f32.mrf.mxu0
        %v4095 = vadd.f32 %v4046, %v4094
        %4096 = vmatmul.bf16.gmra.mxu0 %v549
        %v4097 = vpop.f32.mrf.mxu0
        %v4098 = vadd.f32 %v4049, %v4097
        %v4099 = vpop.f32.mrf.mxu0
        %v4100 = vadd.f32 %v4051, %v4099
        %4101 = vdwg.mxu0
        %4102 = vmatpush.bf16.msra.mxu0 %v2359
        %4103 = vmatpush.bf16.msra.mxu0 %v2354
        %4104 = vmatpush.bf16.msra.mxu0 %v2349
        %4105 = vmatpush.bf16.msra.mxu0 %v2344
        %4106 = vmatpush.bf16.msra.mxu0 %v2339
        %4107 = vmatpush.bf16.msra.mxu0 %v2334
        %4108 = vmatpush.bf16.msra.mxu0 %v2329
        %4109 = vmatpush.bf16.msra.mxu0 %v2324
        %4110 = vmatmul.bf16.gmra.mxu0 %v470
        %v4111 = vpop.f32.mrf.mxu0
        %v4112 = vadd.f32 %v1034, %v4111
        %v4113 = vpop.f32.mrf.mxu0
        %v4114 = vadd.f32 %v1034, %v4113
        %4115 = vmatmul.bf16.gmra.mxu0 %v480
        %v4116 = vpop.f32.mrf.mxu0
        %v4117 = vadd.f32 %v1034, %v4116
        %v4118 = vpop.f32.mrf.mxu0
        %v4119 = vadd.f32 %v1034, %v4118
        %4120 = vmatmul.bf16.gmra.mxu0 %v490
        %v4121 = vpop.f32.mrf.mxu0
        %v4122 = vadd.f32 %v1034, %v4121
        %v4123 = vpop.f32.mrf.mxu0
        %v4124 = vadd.f32 %v1034, %v4123
        %4125 = vmatmul.bf16.gmra.mxu0 %v500
        %v4126 = vpop.f32.mrf.mxu0
        %v4127 = vadd.f32 %v1034, %v4126
        %v4128 = vpop.f32.mrf.mxu0
        %v4129 = vadd.f32 %v1034, %v4128
        %4130 = vmatmul.bf16.gmra.mxu0 %v510
        %v4131 = vpop.f32.mrf.mxu0
        %v4132 = vadd.f32 %v1034, %v4131
        %v4133 = vpop.f32.mrf.mxu0
        %v4134 = vadd.f32 %v1034, %v4133
        %4135 = vmatmul.bf16.gmra.mxu0 %v520
        %v4136 = vpop.f32.mrf.mxu0
        %v4137 = vadd.f32 %v1034, %v4136
        %v4138 = vpop.f32.mrf.mxu0
        %v4139 = vadd.f32 %v1034, %v4138
        %4140 = vmatmul.bf16.gmra.mxu0 %v530
        %v4141 = vpop.f32.mrf.mxu0
        %v4142 = vadd.f32 %v1034, %v4141
        %v4143 = vpop.f32.mrf.mxu0
        %v4144 = vadd.f32 %v1034, %v4143
        %4145 = vmatmul.bf16.gmra.mxu0 %v540
        %v4146 = vpop.f32.mrf.mxu0
        %v4147 = vadd.f32 %v1034, %v4146
        %v4148 = vpop.f32.mrf.mxu0
        %v4149 = vadd.f32 %v1034, %v4148
        %4150 = vdwg.mxu0
        %4151 = vmatpush.bf16.msra.mxu0 %v2399
        %4152 = vmatpush.bf16.msra.mxu0 %v2394
        %4153 = vmatpush.bf16.msra.mxu0 %v2389
        %4154 = vmatpush.bf16.msra.mxu0 %v2384
        %4155 = vmatpush.bf16.msra.mxu0 %v2379
        %4156 = vmatpush.bf16.msra.mxu0 %v2374
        %4157 = vmatpush.bf16.msra.mxu0 %v2369
        %4158 = vmatpush.bf16.msra.mxu0 %v2364
        %4159 = vmatmul.bf16.gmra.mxu0 %v471
        %v4160 = vpop.f32.mrf.mxu0
        %v4161 = vadd.f32 %v4112, %v4160
        %v4162 = vpop.f32.mrf.mxu0
        %v4163 = vadd.f32 %v4114, %v4162
        %4164 = vmatmul.bf16.gmra.mxu0 %v481
        %v4165 = vpop.f32.mrf.mxu0
        %v4166 = vadd.f32 %v4117, %v4165
        %v4167 = vpop.f32.mrf.mxu0
        %v4168 = vadd.f32 %v4119, %v4167
        %4169 = vmatmul.bf16.gmra.mxu0 %v491
        %v4170 = vpop.f32.mrf.mxu0
        %v4171 = vadd.f32 %v4122, %v4170
        %v4172 = vpop.f32.mrf.mxu0
        %v4173 = vadd.f32 %v4124, %v4172
        %4174 = vmatmul.bf16.gmra.mxu0 %v501
        %v4175 = vpop.f32.mrf.mxu0
        %v4176 = vadd.f32 %v4127, %v4175
        %v4177 = vpop.f32.mrf.mxu0
        %v4178 = vadd.f32 %v4129, %v4177
        %4179 = vmatmul.bf16.gmra.mxu0 %v511
        %v4180 = vpop.f32.mrf.mxu0
        %v4181 = vadd.f32 %v4132, %v4180
        %v4182 = vpop.f32.mrf.mxu0
        %v4183 = vadd.f32 %v4134, %v4182
        %4184 = vmatmul.bf16.gmra.mxu0 %v521
        %v4185 = vpop.f32.mrf.mxu0
        %v4186 = vadd.f32 %v4137, %v4185
        %v4187 = vpop.f32.mrf.mxu0
        %v4188 = vadd.f32 %v4139, %v4187
        %4189 = vmatmul.bf16.gmra.mxu0 %v531
        %v4190 = vpop.f32.mrf.mxu0
        %v4191 = vadd.f32 %v4142, %v4190
        %v4192 = vpop.f32.mrf.mxu0
        %v4193 = vadd.f32 %v4144, %v4192
        %4194 = vmatmul.bf16.gmra.mxu0 %v541
        %v4195 = vpop.f32.mrf.mxu0
        %v4196 = vadd.f32 %v4147, %v4195
        %v4197 = vpop.f32.mrf.mxu0
        %v4198 = vadd.f32 %v4149, %v4197
        %4199 = vdwg.mxu0
        %4200 = vmatpush.bf16.msra.mxu0 %v2439
        %4201 = vmatpush.bf16.msra.mxu0 %v2434
        %4202 = vmatpush.bf16.msra.mxu0 %v2429
        %4203 = vmatpush.bf16.msra.mxu0 %v2424
        %4204 = vmatpush.bf16.msra.mxu0 %v2419
        %4205 = vmatpush.bf16.msra.mxu0 %v2414
        %4206 = vmatpush.bf16.msra.mxu0 %v2409
        %4207 = vmatpush.bf16.msra.mxu0 %v2404
        %4208 = vmatmul.bf16.gmra.mxu0 %v472
        %v4209 = vpop.f32.mrf.mxu0
        %v4210 = vadd.f32 %v4161, %v4209
        %v4211 = vpop.f32.mrf.mxu0
        %v4212 = vadd.f32 %v4163, %v4211
        %4213 = vmatmul.bf16.gmra.mxu0 %v482
        %v4214 = vpop.f32.mrf.mxu0
        %v4215 = vadd.f32 %v4166, %v4214
        %v4216 = vpop.f32.mrf.mxu0
        %v4217 = vadd.f32 %v4168, %v4216
        %4218 = vmatmul.bf16.gmra.mxu0 %v492
        %v4219 = vpop.f32.mrf.mxu0
        %v4220 = vadd.f32 %v4171, %v4219
        %v4221 = vpop.f32.mrf.mxu0
        %v4222 = vadd.f32 %v4173, %v4221
        %4223 = vmatmul.bf16.gmra.mxu0 %v502
        %v4224 = vpop.f32.mrf.mxu0
        %v4225 = vadd.f32 %v4176, %v4224
        %v4226 = vpop.f32.mrf.mxu0
        %v4227 = vadd.f32 %v4178, %v4226
        %4228 = vmatmul.bf16.gmra.mxu0 %v512
        %v4229 = vpop.f32.mrf.mxu0
        %v4230 = vadd.f32 %v4181, %v4229
        %v4231 = vpop.f32.mrf.mxu0
        %v4232 = vadd.f32 %v4183, %v4231
        %4233 = vmatmul.bf16.gmra.mxu0 %v522
        %v4234 = vpop.f32.mrf.mxu0
        %v4235 = vadd.f32 %v4186, %v4234
        %v4236 = vpop.f32.mrf.mxu0
        %v4237 = vadd.f32 %v4188, %v4236
        %4238 = vmatmul.bf16.gmra.mxu0 %v532
        %v4239 = vpop.f32.mrf.mxu0
        %v4240 = vadd.f32 %v4191, %v4239
        %v4241 = vpop.f32.mrf.mxu0
        %v4242 = vadd.f32 %v4193, %v4241
        %4243 = vmatmul.bf16.gmra.mxu0 %v542
        %v4244 = vpop.f32.mrf.mxu0
        %v4245 = vadd.f32 %v4196, %v4244
        %v4246 = vpop.f32.mrf.mxu0
        %v4247 = vadd.f32 %v4198, %v4246
        %4248 = vdwg.mxu0
        %4249 = vmatpush.bf16.msra.mxu0 %v2479
        %4250 = vmatpush.bf16.msra.mxu0 %v2474
        %4251 = vmatpush.bf16.msra.mxu0 %v2469
        %4252 = vmatpush.bf16.msra.mxu0 %v2464
        %4253 = vmatpush.bf16.msra.mxu0 %v2459
        %4254 = vmatpush.bf16.msra.mxu0 %v2454
        %4255 = vmatpush.bf16.msra.mxu0 %v2449
        %4256 = vmatpush.bf16.msra.mxu0 %v2444
        %4257 = vmatmul.bf16.gmra.mxu0 %v473
        %v4258 = vpop.f32.mrf.mxu0
        %v4259 = vadd.f32 %v4210, %v4258
        %v4260 = vpop.f32.mrf.mxu0
        %v4261 = vadd.f32 %v4212, %v4260
        %4262 = vmatmul.bf16.gmra.mxu0 %v483
        %v4263 = vpop.f32.mrf.mxu0
        %v4264 = vadd.f32 %v4215, %v4263
        %v4265 = vpop.f32.mrf.mxu0
        %v4266 = vadd.f32 %v4217, %v4265
        %4267 = vmatmul.bf16.gmra.mxu0 %v493
        %v4268 = vpop.f32.mrf.mxu0
        %v4269 = vadd.f32 %v4220, %v4268
        %v4270 = vpop.f32.mrf.mxu0
        %v4271 = vadd.f32 %v4222, %v4270
        %4272 = vmatmul.bf16.gmra.mxu0 %v503
        %v4273 = vpop.f32.mrf.mxu0
        %v4274 = vadd.f32 %v4225, %v4273
        %v4275 = vpop.f32.mrf.mxu0
        %v4276 = vadd.f32 %v4227, %v4275
        %4277 = vmatmul.bf16.gmra.mxu0 %v513
        %v4278 = vpop.f32.mrf.mxu0
        %v4279 = vadd.f32 %v4230, %v4278
        %v4280 = vpop.f32.mrf.mxu0
        %v4281 = vadd.f32 %v4232, %v4280
        %4282 = vmatmul.bf16.gmra.mxu0 %v523
        %v4283 = vpop.f32.mrf.mxu0
        %v4284 = vadd.f32 %v4235, %v4283
        %v4285 = vpop.f32.mrf.mxu0
        %v4286 = vadd.f32 %v4237, %v4285
        %4287 = vmatmul.bf16.gmra.mxu0 %v533
        %v4288 = vpop.f32.mrf.mxu0
        %v4289 = vadd.f32 %v4240, %v4288
        %v4290 = vpop.f32.mrf.mxu0
        %v4291 = vadd.f32 %v4242, %v4290
        %4292 = vmatmul.bf16.gmra.mxu0 %v543
        %v4293 = vpop.f32.mrf.mxu0
        %v4294 = vadd.f32 %v4245, %v4293
        %v4295 = vpop.f32.mrf.mxu0
        %v4296 = vadd.f32 %v4247, %v4295
        %4297 = vdwg.mxu0
        %4298 = vmatpush.bf16.msra.mxu0 %v2519
        %4299 = vmatpush.bf16.msra.mxu0 %v2514
        %4300 = vmatpush.bf16.msra.mxu0 %v2509
        %4301 = vmatpush.bf16.msra.mxu0 %v2504
        %4302 = vmatpush.bf16.msra.mxu0 %v2499
        %4303 = vmatpush.bf16.msra.mxu0 %v2494
        %4304 = vmatpush.bf16.msra.mxu0 %v2489
        %4305 = vmatpush.bf16.msra.mxu0 %v2484
        %4306 = vmatmul.bf16.gmra.mxu0 %v474
        %v4307 = vpop.f32.mrf.mxu0
        %v4308 = vadd.f32 %v4259, %v4307
        %v4309 = vpop.f32.mrf.mxu0
        %v4310 = vadd.f32 %v4261, %v4309
        %4311 = vmatmul.bf16.gmra.mxu0 %v484
        %v4312 = vpop.f32.mrf.mxu0
        %v4313 = vadd.f32 %v4264, %v4312
        %v4314 = vpop.f32.mrf.mxu0
        %v4315 = vadd.f32 %v4266, %v4314
        %4316 = vmatmul.bf16.gmra.mxu0 %v494
        %v4317 = vpop.f32.mrf.mxu0
        %v4318 = vadd.f32 %v4269, %v4317
        %v4319 = vpop.f32.mrf.mxu0
        %v4320 = vadd.f32 %v4271, %v4319
        %4321 = vmatmul.bf16.gmra.mxu0 %v504
        %v4322 = vpop.f32.mrf.mxu0
        %v4323 = vadd.f32 %v4274, %v4322
        %v4324 = vpop.f32.mrf.mxu0
        %v4325 = vadd.f32 %v4276, %v4324
        %4326 = vmatmul.bf16.gmra.mxu0 %v514
        %v4327 = vpop.f32.mrf.mxu0
        %v4328 = vadd.f32 %v4279, %v4327
        %v4329 = vpop.f32.mrf.mxu0
        %v4330 = vadd.f32 %v4281, %v4329
        %4331 = vmatmul.bf16.gmra.mxu0 %v524
        %v4332 = vpop.f32.mrf.mxu0
        %v4333 = vadd.f32 %v4284, %v4332
        %v4334 = vpop.f32.mrf.mxu0
        %v4335 = vadd.f32 %v4286, %v4334
        %4336 = vmatmul.bf16.gmra.mxu0 %v534
        %v4337 = vpop.f32.mrf.mxu0
        %v4338 = vadd.f32 %v4289, %v4337
        %v4339 = vpop.f32.mrf.mxu0
        %v4340 = vadd.f32 %v4291, %v4339
        %4341 = vmatmul.bf16.gmra.mxu0 %v544
        %v4342 = vpop.f32.mrf.mxu0
        %v4343 = vadd.f32 %v4294, %v4342
        %v4344 = vpop.f32.mrf.mxu0
        %v4345 = vadd.f32 %v4296, %v4344
        %4346 = vdwg.mxu0
        %4347 = vmatpush.bf16.msra.mxu0 %v2559
        %4348 = vmatpush.bf16.msra.mxu0 %v2554
        %4349 = vmatpush.bf16.msra.mxu0 %v2549
        %4350 = vmatpush.bf16.msra.mxu0 %v2544
        %4351 = vmatpush.bf16.msra.mxu0 %v2539
        %4352 = vmatpush.bf16.msra.mxu0 %v2534
        %4353 = vmatpush.bf16.msra.mxu0 %v2529
        %4354 = vmatpush.bf16.msra.mxu0 %v2524
        %4355 = vmatmul.bf16.gmra.mxu0 %v475
        %v4356 = vpop.f32.mrf.mxu0
        %v4357 = vadd.f32 %v4308, %v4356
        %v4358 = vpop.f32.mrf.mxu0
        %v4359 = vadd.f32 %v4310, %v4358
        %4360 = vmatmul.bf16.gmra.mxu0 %v485
        %v4361 = vpop.f32.mrf.mxu0
        %v4362 = vadd.f32 %v4313, %v4361
        %v4363 = vpop.f32.mrf.mxu0
        %v4364 = vadd.f32 %v4315, %v4363
        %4365 = vmatmul.bf16.gmra.mxu0 %v495
        %v4366 = vpop.f32.mrf.mxu0
        %v4367 = vadd.f32 %v4318, %v4366
        %v4368 = vpop.f32.mrf.mxu0
        %v4369 = vadd.f32 %v4320, %v4368
        %4370 = vmatmul.bf16.gmra.mxu0 %v505
        %v4371 = vpop.f32.mrf.mxu0
        %v4372 = vadd.f32 %v4323, %v4371
        %v4373 = vpop.f32.mrf.mxu0
        %v4374 = vadd.f32 %v4325, %v4373
        %4375 = vmatmul.bf16.gmra.mxu0 %v515
        %v4376 = vpop.f32.mrf.mxu0
        %v4377 = vadd.f32 %v4328, %v4376
        %v4378 = vpop.f32.mrf.mxu0
        %v4379 = vadd.f32 %v4330, %v4378
        %4380 = vmatmul.bf16.gmra.mxu0 %v525
        %v4381 = vpop.f32.mrf.mxu0
        %v4382 = vadd.f32 %v4333, %v4381
        %v4383 = vpop.f32.mrf.mxu0
        %v4384 = vadd.f32 %v4335, %v4383
        %4385 = vmatmul.bf16.gmra.mxu0 %v535
        %v4386 = vpop.f32.mrf.mxu0
        %v4387 = vadd.f32 %v4338, %v4386
        %v4388 = vpop.f32.mrf.mxu0
        %v4389 = vadd.f32 %v4340, %v4388
        %4390 = vmatmul.bf16.gmra.mxu0 %v545
        %v4391 = vpop.f32.mrf.mxu0
        %v4392 = vadd.f32 %v4343, %v4391
        %v4393 = vpop.f32.mrf.mxu0
        %v4394 = vadd.f32 %v4345, %v4393
        %4395 = vdwg.mxu0
        %4396 = vmatpush.bf16.msra.mxu0 %v2599
        %4397 = vmatpush.bf16.msra.mxu0 %v2594
        %4398 = vmatpush.bf16.msra.mxu0 %v2589
        %4399 = vmatpush.bf16.msra.mxu0 %v2584
        %4400 = vmatpush.bf16.msra.mxu0 %v2579
        %4401 = vmatpush.bf16.msra.mxu0 %v2574
        %4402 = vmatpush.bf16.msra.mxu0 %v2569
        %4403 = vmatpush.bf16.msra.mxu0 %v2564
        %4404 = vmatmul.bf16.gmra.mxu0 %v476
        %v4405 = vpop.f32.mrf.mxu0
        %v4406 = vadd.f32 %v4357, %v4405
        %v4407 = vpop.f32.mrf.mxu0
        %v4408 = vadd.f32 %v4359, %v4407
        %4409 = vmatmul.bf16.gmra.mxu0 %v486
        %v4410 = vpop.f32.mrf.mxu0
        %v4411 = vadd.f32 %v4362, %v4410
        %v4412 = vpop.f32.mrf.mxu0
        %v4413 = vadd.f32 %v4364, %v4412
        %4414 = vmatmul.bf16.gmra.mxu0 %v496
        %v4415 = vpop.f32.mrf.mxu0
        %v4416 = vadd.f32 %v4367, %v4415
        %v4417 = vpop.f32.mrf.mxu0
        %v4418 = vadd.f32 %v4369, %v4417
        %4419 = vmatmul.bf16.gmra.mxu0 %v506
        %v4420 = vpop.f32.mrf.mxu0
        %v4421 = vadd.f32 %v4372, %v4420
        %v4422 = vpop.f32.mrf.mxu0
        %v4423 = vadd.f32 %v4374, %v4422
        %4424 = vmatmul.bf16.gmra.mxu0 %v516
        %v4425 = vpop.f32.mrf.mxu0
        %v4426 = vadd.f32 %v4377, %v4425
        %v4427 = vpop.f32.mrf.mxu0
        %v4428 = vadd.f32 %v4379, %v4427
        %4429 = vmatmul.bf16.gmra.mxu0 %v526
        %v4430 = vpop.f32.mrf.mxu0
        %v4431 = vadd.f32 %v4382, %v4430
        %v4432 = vpop.f32.mrf.mxu0
        %v4433 = vadd.f32 %v4384, %v4432
        %4434 = vmatmul.bf16.gmra.mxu0 %v536
        %v4435 = vpop.f32.mrf.mxu0
        %v4436 = vadd.f32 %v4387, %v4435
        %v4437 = vpop.f32.mrf.mxu0
        %v4438 = vadd.f32 %v4389, %v4437
        %4439 = vmatmul.bf16.gmra.mxu0 %v546
        %v4440 = vpop.f32.mrf.mxu0
        %v4441 = vadd.f32 %v4392, %v4440
        %v4442 = vpop.f32.mrf.mxu0
        %v4443 = vadd.f32 %v4394, %v4442
        %4444 = vdwg.mxu0
        %4445 = vmatpush.bf16.msra.mxu0 %v2639
        %4446 = vmatpush.bf16.msra.mxu0 %v2634
        %4447 = vmatpush.bf16.msra.mxu0 %v2629
        %4448 = vmatpush.bf16.msra.mxu0 %v2624
        %4449 = vmatpush.bf16.msra.mxu0 %v2619
        %4450 = vmatpush.bf16.msra.mxu0 %v2614
        %4451 = vmatpush.bf16.msra.mxu0 %v2609
        %4452 = vmatpush.bf16.msra.mxu0 %v2604
        %4453 = vmatmul.bf16.gmra.mxu0 %v477
        %v4454 = vpop.f32.mrf.mxu0
        %v4455 = vadd.f32 %v4406, %v4454
        %v4456 = vpop.f32.mrf.mxu0
        %v4457 = vadd.f32 %v4408, %v4456
        %4458 = vmatmul.bf16.gmra.mxu0 %v487
        %v4459 = vpop.f32.mrf.mxu0
        %v4460 = vadd.f32 %v4411, %v4459
        %v4461 = vpop.f32.mrf.mxu0
        %v4462 = vadd.f32 %v4413, %v4461
        %4463 = vmatmul.bf16.gmra.mxu0 %v497
        %v4464 = vpop.f32.mrf.mxu0
        %v4465 = vadd.f32 %v4416, %v4464
        %v4466 = vpop.f32.mrf.mxu0
        %v4467 = vadd.f32 %v4418, %v4466
        %4468 = vmatmul.bf16.gmra.mxu0 %v507
        %v4469 = vpop.f32.mrf.mxu0
        %v4470 = vadd.f32 %v4421, %v4469
        %v4471 = vpop.f32.mrf.mxu0
        %v4472 = vadd.f32 %v4423, %v4471
        %4473 = vmatmul.bf16.gmra.mxu0 %v517
        %v4474 = vpop.f32.mrf.mxu0
        %v4475 = vadd.f32 %v4426, %v4474
        %v4476 = vpop.f32.mrf.mxu0
        %v4477 = vadd.f32 %v4428, %v4476
        %4478 = vmatmul.bf16.gmra.mxu0 %v527
        %v4479 = vpop.f32.mrf.mxu0
        %v4480 = vadd.f32 %v4431, %v4479
        %v4481 = vpop.f32.mrf.mxu0
        %v4482 = vadd.f32 %v4433, %v4481
        %4483 = vmatmul.bf16.gmra.mxu0 %v537
        %v4484 = vpop.f32.mrf.mxu0
        %v4485 = vadd.f32 %v4436, %v4484
        %v4486 = vpop.f32.mrf.mxu0
        %v4487 = vadd.f32 %v4438, %v4486
        %4488 = vmatmul.bf16.gmra.mxu0 %v547
        %v4489 = vpop.f32.mrf.mxu0
        %v4490 = vadd.f32 %v4441, %v4489
        %v4491 = vpop.f32.mrf.mxu0
        %v4492 = vadd.f32 %v4443, %v4491
        %4493 = vdwg.mxu0
        %4494 = vmatpush.bf16.msra.mxu0 %v2679
        %4495 = vmatpush.bf16.msra.mxu0 %v2674
        %4496 = vmatpush.bf16.msra.mxu0 %v2669
        %4497 = vmatpush.bf16.msra.mxu0 %v2664
        %4498 = vmatpush.bf16.msra.mxu0 %v2659
        %4499 = vmatpush.bf16.msra.mxu0 %v2654
        %4500 = vmatpush.bf16.msra.mxu0 %v2649
        %4501 = vmatpush.bf16.msra.mxu0 %v2644
        %4502 = vmatmul.bf16.gmra.mxu0 %v478
        %v4503 = vpop.f32.mrf.mxu0
        %v4504 = vadd.f32 %v4455, %v4503
        %v4505 = vpop.f32.mrf.mxu0
        %v4506 = vadd.f32 %v4457, %v4505
        %4507 = vmatmul.bf16.gmra.mxu0 %v488
        %v4508 = vpop.f32.mrf.mxu0
        %v4509 = vadd.f32 %v4460, %v4508
        %v4510 = vpop.f32.mrf.mxu0
        %v4511 = vadd.f32 %v4462, %v4510
        %4512 = vmatmul.bf16.gmra.mxu0 %v498
        %v4513 = vpop.f32.mrf.mxu0
        %v4514 = vadd.f32 %v4465, %v4513
        %v4515 = vpop.f32.mrf.mxu0
        %v4516 = vadd.f32 %v4467, %v4515
        %4517 = vmatmul.bf16.gmra.mxu0 %v508
        %v4518 = vpop.f32.mrf.mxu0
        %v4519 = vadd.f32 %v4470, %v4518
        %v4520 = vpop.f32.mrf.mxu0
        %v4521 = vadd.f32 %v4472, %v4520
        %4522 = vmatmul.bf16.gmra.mxu0 %v518
        %v4523 = vpop.f32.mrf.mxu0
        %v4524 = vadd.f32 %v4475, %v4523
        %v4525 = vpop.f32.mrf.mxu0
        %v4526 = vadd.f32 %v4477, %v4525
        %4527 = vmatmul.bf16.gmra.mxu0 %v528
        %v4528 = vpop.f32.mrf.mxu0
        %v4529 = vadd.f32 %v4480, %v4528
        %v4530 = vpop.f32.mrf.mxu0
        %v4531 = vadd.f32 %v4482, %v4530
        %4532 = vmatmul.bf16.gmra.mxu0 %v538
        %v4533 = vpop.f32.mrf.mxu0
        %v4534 = vadd.f32 %v4485, %v4533
        %v4535 = vpop.f32.mrf.mxu0
        %v4536 = vadd.f32 %v4487, %v4535
        %4537 = vmatmul.bf16.gmra.mxu0 %v548
        %v4538 = vpop.f32.mrf.mxu0
        %v4539 = vadd.f32 %v4490, %v4538
        %v4540 = vpop.f32.mrf.mxu0
        %v4541 = vadd.f32 %v4492, %v4540
        %4542 = vdwg.mxu0
        %4543 = vmatpush.bf16.msra.mxu0 %v2719
        %4544 = vmatpush.bf16.msra.mxu0 %v2714
        %4545 = vmatpush.bf16.msra.mxu0 %v2709
        %4546 = vmatpush.bf16.msra.mxu0 %v2704
        %4547 = vmatpush.bf16.msra.mxu0 %v2699
        %4548 = vmatpush.bf16.msra.mxu0 %v2694
        %4549 = vmatpush.bf16.msra.mxu0 %v2689
        %4550 = vmatpush.bf16.msra.mxu0 %v2684
        %4551 = vmatmul.bf16.gmra.mxu0 %v479
        %v4552 = vpop.f32.mrf.mxu0
        %v4553 = vadd.f32 %v4504, %v4552
        %v4554 = vpop.f32.mrf.mxu0
        %v4555 = vadd.f32 %v4506, %v4554
        %4556 = vmatmul.bf16.gmra.mxu0 %v489
        %v4557 = vpop.f32.mrf.mxu0
        %v4558 = vadd.f32 %v4509, %v4557
        %v4559 = vpop.f32.mrf.mxu0
        %v4560 = vadd.f32 %v4511, %v4559
        %4561 = vmatmul.bf16.gmra.mxu0 %v499
        %v4562 = vpop.f32.mrf.mxu0
        %v4563 = vadd.f32 %v4514, %v4562
        %v4564 = vpop.f32.mrf.mxu0
        %v4565 = vadd.f32 %v4516, %v4564
        %4566 = vmatmul.bf16.gmra.mxu0 %v509
        %v4567 = vpop.f32.mrf.mxu0
        %v4568 = vadd.f32 %v4519, %v4567
        %v4569 = vpop.f32.mrf.mxu0
        %v4570 = vadd.f32 %v4521, %v4569
        %4571 = vmatmul.bf16.gmra.mxu0 %v519
        %v4572 = vpop.f32.mrf.mxu0
        %v4573 = vadd.f32 %v4524, %v4572
        %v4574 = vpop.f32.mrf.mxu0
        %v4575 = vadd.f32 %v4526, %v4574
        %4576 = vmatmul.bf16.gmra.mxu0 %v529
        %v4577 = vpop.f32.mrf.mxu0
        %v4578 = vadd.f32 %v4529, %v4577
        %v4579 = vpop.f32.mrf.mxu0
        %v4580 = vadd.f32 %v4531, %v4579
        %4581 = vmatmul.bf16.gmra.mxu0 %v539
        %v4582 = vpop.f32.mrf.mxu0
        %v4583 = vadd.f32 %v4534, %v4582
        %v4584 = vpop.f32.mrf.mxu0
        %v4585 = vadd.f32 %v4536, %v4584
        %4586 = vmatmul.bf16.gmra.mxu0 %v549
        %v4587 = vpop.f32.mrf.mxu0
        %v4588 = vadd.f32 %v4539, %v4587
        %v4589 = vpop.f32.mrf.mxu0
        %v4590 = vadd.f32 %v4541, %v4589
        %4591 = vdwg.mxu0
        %4592 = vmatpush.bf16.msra.mxu0 %v2360
        %4593 = vmatpush.bf16.msra.mxu0 %v2355
        %4594 = vmatpush.bf16.msra.mxu0 %v2350
        %4595 = vmatpush.bf16.msra.mxu0 %v2345
        %4596 = vmatpush.bf16.msra.mxu0 %v2340
        %4597 = vmatpush.bf16.msra.mxu0 %v2335
        %4598 = vmatpush.bf16.msra.mxu0 %v2330
        %4599 = vmatpush.bf16.msra.mxu0 %v2325
        %4600 = vmatmul.bf16.gmra.mxu0 %v470
        %v4601 = vpop.f32.mrf.mxu0
        %v4602 = vadd.f32 %v1035, %v4601
        %v4603 = vpop.f32.mrf.mxu0
        %v4604 = vadd.f32 %v1035, %v4603
        %4605 = vmatmul.bf16.gmra.mxu0 %v480
        %v4606 = vpop.f32.mrf.mxu0
        %v4607 = vadd.f32 %v1035, %v4606
        %v4608 = vpop.f32.mrf.mxu0
        %v4609 = vadd.f32 %v1035, %v4608
        %4610 = vmatmul.bf16.gmra.mxu0 %v490
        %v4611 = vpop.f32.mrf.mxu0
        %v4612 = vadd.f32 %v1035, %v4611
        %v4613 = vpop.f32.mrf.mxu0
        %v4614 = vadd.f32 %v1035, %v4613
        %4615 = vmatmul.bf16.gmra.mxu0 %v500
        %v4616 = vpop.f32.mrf.mxu0
        %v4617 = vadd.f32 %v1035, %v4616
        %v4618 = vpop.f32.mrf.mxu0
        %v4619 = vadd.f32 %v1035, %v4618
        %4620 = vmatmul.bf16.gmra.mxu0 %v510
        %v4621 = vpop.f32.mrf.mxu0
        %v4622 = vadd.f32 %v1035, %v4621
        %v4623 = vpop.f32.mrf.mxu0
        %v4624 = vadd.f32 %v1035, %v4623
        %4625 = vmatmul.bf16.gmra.mxu0 %v520
        %v4626 = vpop.f32.mrf.mxu0
        %v4627 = vadd.f32 %v1035, %v4626
        %v4628 = vpop.f32.mrf.mxu0
        %v4629 = vadd.f32 %v1035, %v4628
        %4630 = vmatmul.bf16.gmra.mxu0 %v530
        %v4631 = vpop.f32.mrf.mxu0
        %v4632 = vadd.f32 %v1035, %v4631
        %v4633 = vpop.f32.mrf.mxu0
        %v4634 = vadd.f32 %v1035, %v4633
        %4635 = vmatmul.bf16.gmra.mxu0 %v540
        %v4636 = vpop.f32.mrf.mxu0
        %v4637 = vadd.f32 %v1035, %v4636
        %v4638 = vpop.f32.mrf.mxu0
        %v4639 = vadd.f32 %v1035, %v4638
        %4640 = vdwg.mxu0
        %4641 = vmatpush.bf16.msra.mxu0 %v2400
        %4642 = vmatpush.bf16.msra.mxu0 %v2395
        %4643 = vmatpush.bf16.msra.mxu0 %v2390
        %4644 = vmatpush.bf16.msra.mxu0 %v2385
        %4645 = vmatpush.bf16.msra.mxu0 %v2380
        %4646 = vmatpush.bf16.msra.mxu0 %v2375
        %4647 = vmatpush.bf16.msra.mxu0 %v2370
        %4648 = vmatpush.bf16.msra.mxu0 %v2365
        %4649 = vmatmul.bf16.gmra.mxu0 %v471
        %v4650 = vpop.f32.mrf.mxu0
        %v4651 = vadd.f32 %v4602, %v4650
        %v4652 = vpop.f32.mrf.mxu0
        %v4653 = vadd.f32 %v4604, %v4652
        %4654 = vmatmul.bf16.gmra.mxu0 %v481
        %v4655 = vpop.f32.mrf.mxu0
        %v4656 = vadd.f32 %v4607, %v4655
        %v4657 = vpop.f32.mrf.mxu0
        %v4658 = vadd.f32 %v4609, %v4657
        %4659 = vmatmul.bf16.gmra.mxu0 %v491
        %v4660 = vpop.f32.mrf.mxu0
        %v4661 = vadd.f32 %v4612, %v4660
        %v4662 = vpop.f32.mrf.mxu0
        %v4663 = vadd.f32 %v4614, %v4662
        %4664 = vmatmul.bf16.gmra.mxu0 %v501
        %v4665 = vpop.f32.mrf.mxu0
        %v4666 = vadd.f32 %v4617, %v4665
        %v4667 = vpop.f32.mrf.mxu0
        %v4668 = vadd.f32 %v4619, %v4667
        %4669 = vmatmul.bf16.gmra.mxu0 %v511
        %v4670 = vpop.f32.mrf.mxu0
        %v4671 = vadd.f32 %v4622, %v4670
        %v4672 = vpop.f32.mrf.mxu0
        %v4673 = vadd.f32 %v4624, %v4672
        %4674 = vmatmul.bf16.gmra.mxu0 %v521
        %v4675 = vpop.f32.mrf.mxu0
        %v4676 = vadd.f32 %v4627, %v4675
        %v4677 = vpop.f32.mrf.mxu0
        %v4678 = vadd.f32 %v4629, %v4677
        %4679 = vmatmul.bf16.gmra.mxu0 %v531
        %v4680 = vpop.f32.mrf.mxu0
        %v4681 = vadd.f32 %v4632, %v4680
        %v4682 = vpop.f32.mrf.mxu0
        %v4683 = vadd.f32 %v4634, %v4682
        %4684 = vmatmul.bf16.gmra.mxu0 %v541
        %v4685 = vpop.f32.mrf.mxu0
        %v4686 = vadd.f32 %v4637, %v4685
        %v4687 = vpop.f32.mrf.mxu0
        %v4688 = vadd.f32 %v4639, %v4687
        %4689 = vdwg.mxu0
        %4690 = vmatpush.bf16.msra.mxu0 %v2440
        %4691 = vmatpush.bf16.msra.mxu0 %v2435
        %4692 = vmatpush.bf16.msra.mxu0 %v2430
        %4693 = vmatpush.bf16.msra.mxu0 %v2425
        %4694 = vmatpush.bf16.msra.mxu0 %v2420
        %4695 = vmatpush.bf16.msra.mxu0 %v2415
        %4696 = vmatpush.bf16.msra.mxu0 %v2410
        %4697 = vmatpush.bf16.msra.mxu0 %v2405
        %4698 = vmatmul.bf16.gmra.mxu0 %v472
        %v4699 = vpop.f32.mrf.mxu0
        %v4700 = vadd.f32 %v4651, %v4699
        %v4701 = vpop.f32.mrf.mxu0
        %v4702 = vadd.f32 %v4653, %v4701
        %4703 = vmatmul.bf16.gmra.mxu0 %v482
        %v4704 = vpop.f32.mrf.mxu0
        %v4705 = vadd.f32 %v4656, %v4704
        %v4706 = vpop.f32.mrf.mxu0
        %v4707 = vadd.f32 %v4658, %v4706
        %4708 = vmatmul.bf16.gmra.mxu0 %v492
        %v4709 = vpop.f32.mrf.mxu0
        %v4710 = vadd.f32 %v4661, %v4709
        %v4711 = vpop.f32.mrf.mxu0
        %v4712 = vadd.f32 %v4663, %v4711
        %4713 = vmatmul.bf16.gmra.mxu0 %v502
        %v4714 = vpop.f32.mrf.mxu0
        %v4715 = vadd.f32 %v4666, %v4714
        %v4716 = vpop.f32.mrf.mxu0
        %v4717 = vadd.f32 %v4668, %v4716
        %4718 = vmatmul.bf16.gmra.mxu0 %v512
        %v4719 = vpop.f32.mrf.mxu0
        %v4720 = vadd.f32 %v4671, %v4719
        %v4721 = vpop.f32.mrf.mxu0
        %v4722 = vadd.f32 %v4673, %v4721
        %4723 = vmatmul.bf16.gmra.mxu0 %v522
        %v4724 = vpop.f32.mrf.mxu0
        %v4725 = vadd.f32 %v4676, %v4724
        %v4726 = vpop.f32.mrf.mxu0
        %v4727 = vadd.f32 %v4678, %v4726
        %4728 = vmatmul.bf16.gmra.mxu0 %v532
        %v4729 = vpop.f32.mrf.mxu0
        %v4730 = vadd.f32 %v4681, %v4729
        %v4731 = vpop.f32.mrf.mxu0
        %v4732 = vadd.f32 %v4683, %v4731
        %4733 = vmatmul.bf16.gmra.mxu0 %v542
        %v4734 = vpop.f32.mrf.mxu0
        %v4735 = vadd.f32 %v4686, %v4734
        %v4736 = vpop.f32.mrf.mxu0
        %v4737 = vadd.f32 %v4688, %v4736
        %4738 = vdwg.mxu0
        %4739 = vmatpush.bf16.msra.mxu0 %v2480
        %4740 = vmatpush.bf16.msra.mxu0 %v2475
        %4741 = vmatpush.bf16.msra.mxu0 %v2470
        %4742 = vmatpush.bf16.msra.mxu0 %v2465
        %4743 = vmatpush.bf16.msra.mxu0 %v2460
        %4744 = vmatpush.bf16.msra.mxu0 %v2455
        %4745 = vmatpush.bf16.msra.mxu0 %v2450
        %4746 = vmatpush.bf16.msra.mxu0 %v2445
        %4747 = vmatmul.bf16.gmra.mxu0 %v473
        %v4748 = vpop.f32.mrf.mxu0
        %v4749 = vadd.f32 %v4700, %v4748
        %v4750 = vpop.f32.mrf.mxu0
        %v4751 = vadd.f32 %v4702, %v4750
        %4752 = vmatmul.bf16.gmra.mxu0 %v483
        %v4753 = vpop.f32.mrf.mxu0
        %v4754 = vadd.f32 %v4705, %v4753
        %v4755 = vpop.f32.mrf.mxu0
        %v4756 = vadd.f32 %v4707, %v4755
        %4757 = vmatmul.bf16.gmra.mxu0 %v493
        %v4758 = vpop.f32.mrf.mxu0
        %v4759 = vadd.f32 %v4710, %v4758
        %v4760 = vpop.f32.mrf.mxu0
        %v4761 = vadd.f32 %v4712, %v4760
        %4762 = vmatmul.bf16.gmra.mxu0 %v503
        %v4763 = vpop.f32.mrf.mxu0
        %v4764 = vadd.f32 %v4715, %v4763
        %v4765 = vpop.f32.mrf.mxu0
        %v4766 = vadd.f32 %v4717, %v4765
        %4767 = vmatmul.bf16.gmra.mxu0 %v513
        %v4768 = vpop.f32.mrf.mxu0
        %v4769 = vadd.f32 %v4720, %v4768
        %v4770 = vpop.f32.mrf.mxu0
        %v4771 = vadd.f32 %v4722, %v4770
        %4772 = vmatmul.bf16.gmra.mxu0 %v523
        %v4773 = vpop.f32.mrf.mxu0
        %v4774 = vadd.f32 %v4725, %v4773
        %v4775 = vpop.f32.mrf.mxu0
        %v4776 = vadd.f32 %v4727, %v4775
        %4777 = vmatmul.bf16.gmra.mxu0 %v533
        %v4778 = vpop.f32.mrf.mxu0
        %v4779 = vadd.f32 %v4730, %v4778
        %v4780 = vpop.f32.mrf.mxu0
        %v4781 = vadd.f32 %v4732, %v4780
        %4782 = vmatmul.bf16.gmra.mxu0 %v543
        %v4783 = vpop.f32.mrf.mxu0
        %v4784 = vadd.f32 %v4735, %v4783
        %v4785 = vpop.f32.mrf.mxu0
        %v4786 = vadd.f32 %v4737, %v4785
        %4787 = vdwg.mxu0
        %4788 = vmatpush.bf16.msra.mxu0 %v2520
        %4789 = vmatpush.bf16.msra.mxu0 %v2515
        %4790 = vmatpush.bf16.msra.mxu0 %v2510
        %4791 = vmatpush.bf16.msra.mxu0 %v2505
        %4792 = vmatpush.bf16.msra.mxu0 %v2500
        %4793 = vmatpush.bf16.msra.mxu0 %v2495
        %4794 = vmatpush.bf16.msra.mxu0 %v2490
        %4795 = vmatpush.bf16.msra.mxu0 %v2485
        %4796 = vmatmul.bf16.gmra.mxu0 %v474
        %v4797 = vpop.f32.mrf.mxu0
        %v4798 = vadd.f32 %v4749, %v4797
        %v4799 = vpop.f32.mrf.mxu0
        %v4800 = vadd.f32 %v4751, %v4799
        %4801 = vmatmul.bf16.gmra.mxu0 %v484
        %v4802 = vpop.f32.mrf.mxu0
        %v4803 = vadd.f32 %v4754, %v4802
        %v4804 = vpop.f32.mrf.mxu0
        %v4805 = vadd.f32 %v4756, %v4804
        %4806 = vmatmul.bf16.gmra.mxu0 %v494
        %v4807 = vpop.f32.mrf.mxu0
        %v4808 = vadd.f32 %v4759, %v4807
        %v4809 = vpop.f32.mrf.mxu0
        %v4810 = vadd.f32 %v4761, %v4809
        %4811 = vmatmul.bf16.gmra.mxu0 %v504
        %v4812 = vpop.f32.mrf.mxu0
        %v4813 = vadd.f32 %v4764, %v4812
        %v4814 = vpop.f32.mrf.mxu0
        %v4815 = vadd.f32 %v4766, %v4814
        %4816 = vmatmul.bf16.gmra.mxu0 %v514
        %v4817 = vpop.f32.mrf.mxu0
        %v4818 = vadd.f32 %v4769, %v4817
        %v4819 = vpop.f32.mrf.mxu0
        %v4820 = vadd.f32 %v4771, %v4819
        %4821 = vmatmul.bf16.gmra.mxu0 %v524
        %v4822 = vpop.f32.mrf.mxu0
        %v4823 = vadd.f32 %v4774, %v4822
        %v4824 = vpop.f32.mrf.mxu0
        %v4825 = vadd.f32 %v4776, %v4824
        %4826 = vmatmul.bf16.gmra.mxu0 %v534
        %v4827 = vpop.f32.mrf.mxu0
        %v4828 = vadd.f32 %v4779, %v4827
        %v4829 = vpop.f32.mrf.mxu0
        %v4830 = vadd.f32 %v4781, %v4829
        %4831 = vmatmul.bf16.gmra.mxu0 %v544
        %v4832 = vpop.f32.mrf.mxu0
        %v4833 = vadd.f32 %v4784, %v4832
        %v4834 = vpop.f32.mrf.mxu0
        %v4835 = vadd.f32 %v4786, %v4834
        %4836 = vdwg.mxu0
        %4837 = vmatpush.bf16.msra.mxu0 %v2560
        %4838 = vmatpush.bf16.msra.mxu0 %v2555
        %4839 = vmatpush.bf16.msra.mxu0 %v2550
        %4840 = vmatpush.bf16.msra.mxu0 %v2545
        %4841 = vmatpush.bf16.msra.mxu0 %v2540
        %4842 = vmatpush.bf16.msra.mxu0 %v2535
        %4843 = vmatpush.bf16.msra.mxu0 %v2530
        %4844 = vmatpush.bf16.msra.mxu0 %v2525
        %4845 = vmatmul.bf16.gmra.mxu0 %v475
        %v4846 = vpop.f32.mrf.mxu0
        %v4847 = vadd.f32 %v4798, %v4846
        %v4848 = vpop.f32.mrf.mxu0
        %v4849 = vadd.f32 %v4800, %v4848
        %4850 = vmatmul.bf16.gmra.mxu0 %v485
        %v4851 = vpop.f32.mrf.mxu0
        %v4852 = vadd.f32 %v4803, %v4851
        %v4853 = vpop.f32.mrf.mxu0
        %v4854 = vadd.f32 %v4805, %v4853
        %4855 = vmatmul.bf16.gmra.mxu0 %v495
        %v4856 = vpop.f32.mrf.mxu0
        %v4857 = vadd.f32 %v4808, %v4856
        %v4858 = vpop.f32.mrf.mxu0
        %v4859 = vadd.f32 %v4810, %v4858
        %4860 = vmatmul.bf16.gmra.mxu0 %v505
        %v4861 = vpop.f32.mrf.mxu0
        %v4862 = vadd.f32 %v4813, %v4861
        %v4863 = vpop.f32.mrf.mxu0
        %v4864 = vadd.f32 %v4815, %v4863
        %4865 = vmatmul.bf16.gmra.mxu0 %v515
        %v4866 = vpop.f32.mrf.mxu0
        %v4867 = vadd.f32 %v4818, %v4866
        %v4868 = vpop.f32.mrf.mxu0
        %v4869 = vadd.f32 %v4820, %v4868
        %4870 = vmatmul.bf16.gmra.mxu0 %v525
        %v4871 = vpop.f32.mrf.mxu0
        %v4872 = vadd.f32 %v4823, %v4871
        %v4873 = vpop.f32.mrf.mxu0
        %v4874 = vadd.f32 %v4825, %v4873
        %4875 = vmatmul.bf16.gmra.mxu0 %v535
        %v4876 = vpop.f32.mrf.mxu0
        %v4877 = vadd.f32 %v4828, %v4876
        %v4878 = vpop.f32.mrf.mxu0
        %v4879 = vadd.f32 %v4830, %v4878
        %4880 = vmatmul.bf16.gmra.mxu0 %v545
        %v4881 = vpop.f32.mrf.mxu0
        %v4882 = vadd.f32 %v4833, %v4881
        %v4883 = vpop.f32.mrf.mxu0
        %v4884 = vadd.f32 %v4835, %v4883
        %4885 = vdwg.mxu0
        %4886 = vmatpush.bf16.msra.mxu0 %v2600
        %4887 = vmatpush.bf16.msra.mxu0 %v2595
        %4888 = vmatpush.bf16.msra.mxu0 %v2590
        %4889 = vmatpush.bf16.msra.mxu0 %v2585
        %4890 = vmatpush.bf16.msra.mxu0 %v2580
        %4891 = vmatpush.bf16.msra.mxu0 %v2575
        %4892 = vmatpush.bf16.msra.mxu0 %v2570
        %4893 = vmatpush.bf16.msra.mxu0 %v2565
        %4894 = vmatmul.bf16.gmra.mxu0 %v476
        %v4895 = vpop.f32.mrf.mxu0
        %v4896 = vadd.f32 %v4847, %v4895
        %v4897 = vpop.f32.mrf.mxu0
        %v4898 = vadd.f32 %v4849, %v4897
        %4899 = vmatmul.bf16.gmra.mxu0 %v486
        %v4900 = vpop.f32.mrf.mxu0
        %v4901 = vadd.f32 %v4852, %v4900
        %v4902 = vpop.f32.mrf.mxu0
        %v4903 = vadd.f32 %v4854, %v4902
        %4904 = vmatmul.bf16.gmra.mxu0 %v496
        %v4905 = vpop.f32.mrf.mxu0
        %v4906 = vadd.f32 %v4857, %v4905
        %v4907 = vpop.f32.mrf.mxu0
        %v4908 = vadd.f32 %v4859, %v4907
        %4909 = vmatmul.bf16.gmra.mxu0 %v506
        %v4910 = vpop.f32.mrf.mxu0
        %v4911 = vadd.f32 %v4862, %v4910
        %v4912 = vpop.f32.mrf.mxu0
        %v4913 = vadd.f32 %v4864, %v4912
        %4914 = vmatmul.bf16.gmra.mxu0 %v516
        %v4915 = vpop.f32.mrf.mxu0
        %v4916 = vadd.f32 %v4867, %v4915
        %v4917 = vpop.f32.mrf.mxu0
        %v4918 = vadd.f32 %v4869, %v4917
        %4919 = vmatmul.bf16.gmra.mxu0 %v526
        %v4920 = vpop.f32.mrf.mxu0
        %v4921 = vadd.f32 %v4872, %v4920
        %v4922 = vpop.f32.mrf.mxu0
        %v4923 = vadd.f32 %v4874, %v4922
        %4924 = vmatmul.bf16.gmra.mxu0 %v536
        %v4925 = vpop.f32.mrf.mxu0
        %v4926 = vadd.f32 %v4877, %v4925
        %v4927 = vpop.f32.mrf.mxu0
        %v4928 = vadd.f32 %v4879, %v4927
        %4929 = vmatmul.bf16.gmra.mxu0 %v546
        %v4930 = vpop.f32.mrf.mxu0
        %v4931 = vadd.f32 %v4882, %v4930
        %v4932 = vpop.f32.mrf.mxu0
        %v4933 = vadd.f32 %v4884, %v4932
        %4934 = vdwg.mxu0
        %4935 = vmatpush.bf16.msra.mxu0 %v2640
        %4936 = vmatpush.bf16.msra.mxu0 %v2635
        %4937 = vmatpush.bf16.msra.mxu0 %v2630
        %4938 = vmatpush.bf16.msra.mxu0 %v2625
        %4939 = vmatpush.bf16.msra.mxu0 %v2620
        %4940 = vmatpush.bf16.msra.mxu0 %v2615
        %4941 = vmatpush.bf16.msra.mxu0 %v2610
        %4942 = vmatpush.bf16.msra.mxu0 %v2605
        %4943 = vmatmul.bf16.gmra.mxu0 %v477
        %v4944 = vpop.f32.mrf.mxu0
        %v4945 = vadd.f32 %v4896, %v4944
        %v4946 = vpop.f32.mrf.mxu0
        %v4947 = vadd.f32 %v4898, %v4946
        %4948 = vmatmul.bf16.gmra.mxu0 %v487
        %v4949 = vpop.f32.mrf.mxu0
        %v4950 = vadd.f32 %v4901, %v4949
        %v4951 = vpop.f32.mrf.mxu0
        %v4952 = vadd.f32 %v4903, %v4951
        %4953 = vmatmul.bf16.gmra.mxu0 %v497
        %v4954 = vpop.f32.mrf.mxu0
        %v4955 = vadd.f32 %v4906, %v4954
        %v4956 = vpop.f32.mrf.mxu0
        %v4957 = vadd.f32 %v4908, %v4956
        %4958 = vmatmul.bf16.gmra.mxu0 %v507
        %v4959 = vpop.f32.mrf.mxu0
        %v4960 = vadd.f32 %v4911, %v4959
        %v4961 = vpop.f32.mrf.mxu0
        %v4962 = vadd.f32 %v4913, %v4961
        %4963 = vmatmul.bf16.gmra.mxu0 %v517
        %v4964 = vpop.f32.mrf.mxu0
        %v4965 = vadd.f32 %v4916, %v4964
        %v4966 = vpop.f32.mrf.mxu0
        %v4967 = vadd.f32 %v4918, %v4966
        %4968 = vmatmul.bf16.gmra.mxu0 %v527
        %v4969 = vpop.f32.mrf.mxu0
        %v4970 = vadd.f32 %v4921, %v4969
        %v4971 = vpop.f32.mrf.mxu0
        %v4972 = vadd.f32 %v4923, %v4971
        %4973 = vmatmul.bf16.gmra.mxu0 %v537
        %v4974 = vpop.f32.mrf.mxu0
        %v4975 = vadd.f32 %v4926, %v4974
        %v4976 = vpop.f32.mrf.mxu0
        %v4977 = vadd.f32 %v4928, %v4976
        %4978 = vmatmul.bf16.gmra.mxu0 %v547
        %v4979 = vpop.f32.mrf.mxu0
        %v4980 = vadd.f32 %v4931, %v4979
        %v4981 = vpop.f32.mrf.mxu0
        %v4982 = vadd.f32 %v4933, %v4981
        %4983 = vdwg.mxu0
        %4984 = vmatpush.bf16.msra.mxu0 %v2680
        %4985 = vmatpush.bf16.msra.mxu0 %v2675
        %4986 = vmatpush.bf16.msra.mxu0 %v2670
        %4987 = vmatpush.bf16.msra.mxu0 %v2665
        %4988 = vmatpush.bf16.msra.mxu0 %v2660
        %4989 = vmatpush.bf16.msra.mxu0 %v2655
        %4990 = vmatpush.bf16.msra.mxu0 %v2650
        %4991 = vmatpush.bf16.msra.mxu0 %v2645
        %4992 = vmatmul.bf16.gmra.mxu0 %v478
        %v4993 = vpop.f32.mrf.mxu0
        %v4994 = vadd.f32 %v4945, %v4993
        %v4995 = vpop.f32.mrf.mxu0
        %v4996 = vadd.f32 %v4947, %v4995
        %4997 = vmatmul.bf16.gmra.mxu0 %v488
        %v4998 = vpop.f32.mrf.mxu0
        %v4999 = vadd.f32 %v4950, %v4998
        %v5000 = vpop.f32.mrf.mxu0
        %v5001 = vadd.f32 %v4952, %v5000
        %5002 = vmatmul.bf16.gmra.mxu0 %v498
        %v5003 = vpop.f32.mrf.mxu0
        %v5004 = vadd.f32 %v4955, %v5003
        %v5005 = vpop.f32.mrf.mxu0
        %v5006 = vadd.f32 %v4957, %v5005
        %5007 = vmatmul.bf16.gmra.mxu0 %v508
        %v5008 = vpop.f32.mrf.mxu0
        %v5009 = vadd.f32 %v4960, %v5008
        %v5010 = vpop.f32.mrf.mxu0
        %v5011 = vadd.f32 %v4962, %v5010
        %5012 = vmatmul.bf16.gmra.mxu0 %v518
        %v5013 = vpop.f32.mrf.mxu0
        %v5014 = vadd.f32 %v4965, %v5013
        %v5015 = vpop.f32.mrf.mxu0
        %v5016 = vadd.f32 %v4967, %v5015
        %5017 = vmatmul.bf16.gmra.mxu0 %v528
        %v5018 = vpop.f32.mrf.mxu0
        %v5019 = vadd.f32 %v4970, %v5018
        %v5020 = vpop.f32.mrf.mxu0
        %v5021 = vadd.f32 %v4972, %v5020
        %5022 = vmatmul.bf16.gmra.mxu0 %v538
        %v5023 = vpop.f32.mrf.mxu0
        %v5024 = vadd.f32 %v4975, %v5023
        %v5025 = vpop.f32.mrf.mxu0
        %v5026 = vadd.f32 %v4977, %v5025
        %5027 = vmatmul.bf16.gmra.mxu0 %v548
        %v5028 = vpop.f32.mrf.mxu0
        %v5029 = vadd.f32 %v4980, %v5028
        %v5030 = vpop.f32.mrf.mxu0
        %v5031 = vadd.f32 %v4982, %v5030
        %5032 = vdwg.mxu0
        %5033 = vmatpush.bf16.msra.mxu0 %v2720
        %5034 = vmatpush.bf16.msra.mxu0 %v2715
        %5035 = vmatpush.bf16.msra.mxu0 %v2710
        %5036 = vmatpush.bf16.msra.mxu0 %v2705
        %5037 = vmatpush.bf16.msra.mxu0 %v2700
        %5038 = vmatpush.bf16.msra.mxu0 %v2695
        %5039 = vmatpush.bf16.msra.mxu0 %v2690
        %5040 = vmatpush.bf16.msra.mxu0 %v2685
        %5041 = vmatmul.bf16.gmra.mxu0 %v479
        %v5042 = vpop.f32.mrf.mxu0
        %v5043 = vadd.f32 %v4994, %v5042
        %v5044 = vpop.f32.mrf.mxu0
        %v5045 = vadd.f32 %v4996, %v5044
        %5046 = vmatmul.bf16.gmra.mxu0 %v489
        %v5047 = vpop.f32.mrf.mxu0
        %v5048 = vadd.f32 %v4999, %v5047
        %v5049 = vpop.f32.mrf.mxu0
        %v5050 = vadd.f32 %v5001, %v5049
        %5051 = vmatmul.bf16.gmra.mxu0 %v499
        %v5052 = vpop.f32.mrf.mxu0
        %v5053 = vadd.f32 %v5004, %v5052
        %v5054 = vpop.f32.mrf.mxu0
        %v5055 = vadd.f32 %v5006, %v5054
        %5056 = vmatmul.bf16.gmra.mxu0 %v509
        %v5057 = vpop.f32.mrf.mxu0
        %v5058 = vadd.f32 %v5009, %v5057
        %v5059 = vpop.f32.mrf.mxu0
        %v5060 = vadd.f32 %v5011, %v5059
        %5061 = vmatmul.bf16.gmra.mxu0 %v519
        %v5062 = vpop.f32.mrf.mxu0
        %v5063 = vadd.f32 %v5014, %v5062
        %v5064 = vpop.f32.mrf.mxu0
        %v5065 = vadd.f32 %v5016, %v5064
        %5066 = vmatmul.bf16.gmra.mxu0 %v529
        %v5067 = vpop.f32.mrf.mxu0
        %v5068 = vadd.f32 %v5019, %v5067
        %v5069 = vpop.f32.mrf.mxu0
        %v5070 = vadd.f32 %v5021, %v5069
        %5071 = vmatmul.bf16.gmra.mxu0 %v539
        %v5072 = vpop.f32.mrf.mxu0
        %v5073 = vadd.f32 %v5024, %v5072
        %v5074 = vpop.f32.mrf.mxu0
        %v5075 = vadd.f32 %v5026, %v5074
        %5076 = vmatmul.bf16.gmra.mxu0 %v549
        %v5077 = vpop.f32.mrf.mxu0
        %v5078 = vadd.f32 %v5029, %v5077
        %v5079 = vpop.f32.mrf.mxu0
        %v5080 = vadd.f32 %v5031, %v5079
        %5081 = vdwg.mxu0
        %5082 = vmatpush.bf16.msra.mxu0 %v2361
        %5083 = vmatpush.bf16.msra.mxu0 %v2356
        %5084 = vmatpush.bf16.msra.mxu0 %v2351
        %5085 = vmatpush.bf16.msra.mxu0 %v2346
        %5086 = vmatpush.bf16.msra.mxu0 %v2341
        %5087 = vmatpush.bf16.msra.mxu0 %v2336
        %5088 = vmatpush.bf16.msra.mxu0 %v2331
        %5089 = vmatpush.bf16.msra.mxu0 %v2326
        %5090 = vmatmul.bf16.gmra.mxu0 %v470
        %v5091 = vpop.f32.mrf.mxu0
        %v5092 = vadd.f32 %v1036, %v5091
        %v5093 = vpop.f32.mrf.mxu0
        %v5094 = vadd.f32 %v1036, %v5093
        %5095 = vmatmul.bf16.gmra.mxu0 %v480
        %v5096 = vpop.f32.mrf.mxu0
        %v5097 = vadd.f32 %v1036, %v5096
        %v5098 = vpop.f32.mrf.mxu0
        %v5099 = vadd.f32 %v1036, %v5098
        %5100 = vmatmul.bf16.gmra.mxu0 %v490
        %v5101 = vpop.f32.mrf.mxu0
        %v5102 = vadd.f32 %v1036, %v5101
        %v5103 = vpop.f32.mrf.mxu0
        %v5104 = vadd.f32 %v1036, %v5103
        %5105 = vmatmul.bf16.gmra.mxu0 %v500
        %v5106 = vpop.f32.mrf.mxu0
        %v5107 = vadd.f32 %v1036, %v5106
        %v5108 = vpop.f32.mrf.mxu0
        %v5109 = vadd.f32 %v1036, %v5108
        %5110 = vmatmul.bf16.gmra.mxu0 %v510
        %v5111 = vpop.f32.mrf.mxu0
        %v5112 = vadd.f32 %v1036, %v5111
        %v5113 = vpop.f32.mrf.mxu0
        %v5114 = vadd.f32 %v1036, %v5113
        %5115 = vmatmul.bf16.gmra.mxu0 %v520
        %v5116 = vpop.f32.mrf.mxu0
        %v5117 = vadd.f32 %v1036, %v5116
        %v5118 = vpop.f32.mrf.mxu0
        %v5119 = vadd.f32 %v1036, %v5118
        %5120 = vmatmul.bf16.gmra.mxu0 %v530
        %v5121 = vpop.f32.mrf.mxu0
        %v5122 = vadd.f32 %v1036, %v5121
        %v5123 = vpop.f32.mrf.mxu0
        %v5124 = vadd.f32 %v1036, %v5123
        %5125 = vmatmul.bf16.gmra.mxu0 %v540
        %v5126 = vpop.f32.mrf.mxu0
        %v5127 = vadd.f32 %v1036, %v5126
        %v5128 = vpop.f32.mrf.mxu0
        %v5129 = vadd.f32 %v1036, %v5128
        %5130 = vdwg.mxu0
        %5131 = vmatpush.bf16.msra.mxu0 %v2401
        %5132 = vmatpush.bf16.msra.mxu0 %v2396
        %5133 = vmatpush.bf16.msra.mxu0 %v2391
        %5134 = vmatpush.bf16.msra.mxu0 %v2386
        %5135 = vmatpush.bf16.msra.mxu0 %v2381
        %5136 = vmatpush.bf16.msra.mxu0 %v2376
        %5137 = vmatpush.bf16.msra.mxu0 %v2371
        %5138 = vmatpush.bf16.msra.mxu0 %v2366
        %5139 = vmatmul.bf16.gmra.mxu0 %v471
        %v5140 = vpop.f32.mrf.mxu0
        %v5141 = vadd.f32 %v5092, %v5140
        %v5142 = vpop.f32.mrf.mxu0
        %v5143 = vadd.f32 %v5094, %v5142
        %5144 = vmatmul.bf16.gmra.mxu0 %v481
        %v5145 = vpop.f32.mrf.mxu0
        %v5146 = vadd.f32 %v5097, %v5145
        %v5147 = vpop.f32.mrf.mxu0
        %v5148 = vadd.f32 %v5099, %v5147
        %5149 = vmatmul.bf16.gmra.mxu0 %v491
        %v5150 = vpop.f32.mrf.mxu0
        %v5151 = vadd.f32 %v5102, %v5150
        %v5152 = vpop.f32.mrf.mxu0
        %v5153 = vadd.f32 %v5104, %v5152
        %5154 = vmatmul.bf16.gmra.mxu0 %v501
        %v5155 = vpop.f32.mrf.mxu0
        %v5156 = vadd.f32 %v5107, %v5155
        %v5157 = vpop.f32.mrf.mxu0
        %v5158 = vadd.f32 %v5109, %v5157
        %5159 = vmatmul.bf16.gmra.mxu0 %v511
        %v5160 = vpop.f32.mrf.mxu0
        %v5161 = vadd.f32 %v5112, %v5160
        %v5162 = vpop.f32.mrf.mxu0
        %v5163 = vadd.f32 %v5114, %v5162
        %5164 = vmatmul.bf16.gmra.mxu0 %v521
        %v5165 = vpop.f32.mrf.mxu0
        %v5166 = vadd.f32 %v5117, %v5165
        %v5167 = vpop.f32.mrf.mxu0
        %v5168 = vadd.f32 %v5119, %v5167
        %5169 = vmatmul.bf16.gmra.mxu0 %v531
        %v5170 = vpop.f32.mrf.mxu0
        %v5171 = vadd.f32 %v5122, %v5170
        %v5172 = vpop.f32.mrf.mxu0
        %v5173 = vadd.f32 %v5124, %v5172
        %5174 = vmatmul.bf16.gmra.mxu0 %v541
        %v5175 = vpop.f32.mrf.mxu0
        %v5176 = vadd.f32 %v5127, %v5175
        %v5177 = vpop.f32.mrf.mxu0
        %v5178 = vadd.f32 %v5129, %v5177
        %5179 = vdwg.mxu0
        %5180 = vmatpush.bf16.msra.mxu0 %v2441
        %5181 = vmatpush.bf16.msra.mxu0 %v2436
        %5182 = vmatpush.bf16.msra.mxu0 %v2431
        %5183 = vmatpush.bf16.msra.mxu0 %v2426
        %5184 = vmatpush.bf16.msra.mxu0 %v2421
        %5185 = vmatpush.bf16.msra.mxu0 %v2416
        %5186 = vmatpush.bf16.msra.mxu0 %v2411
        %5187 = vmatpush.bf16.msra.mxu0 %v2406
        %5188 = vmatmul.bf16.gmra.mxu0 %v472
        %v5189 = vpop.f32.mrf.mxu0
        %v5190 = vadd.f32 %v5141, %v5189
        %v5191 = vpop.f32.mrf.mxu0
        %v5192 = vadd.f32 %v5143, %v5191
        %5193 = vmatmul.bf16.gmra.mxu0 %v482
        %v5194 = vpop.f32.mrf.mxu0
        %v5195 = vadd.f32 %v5146, %v5194
        %v5196 = vpop.f32.mrf.mxu0
        %v5197 = vadd.f32 %v5148, %v5196
        %5198 = vmatmul.bf16.gmra.mxu0 %v492
        %v5199 = vpop.f32.mrf.mxu0
        %v5200 = vadd.f32 %v5151, %v5199
        %v5201 = vpop.f32.mrf.mxu0
        %v5202 = vadd.f32 %v5153, %v5201
        %5203 = vmatmul.bf16.gmra.mxu0 %v502
        %v5204 = vpop.f32.mrf.mxu0
        %v5205 = vadd.f32 %v5156, %v5204
        %v5206 = vpop.f32.mrf.mxu0
        %v5207 = vadd.f32 %v5158, %v5206
        %5208 = vmatmul.bf16.gmra.mxu0 %v512
        %v5209 = vpop.f32.mrf.mxu0
        %v5210 = vadd.f32 %v5161, %v5209
        %v5211 = vpop.f32.mrf.mxu0
        %v5212 = vadd.f32 %v5163, %v5211
        %5213 = vmatmul.bf16.gmra.mxu0 %v522
        %v5214 = vpop.f32.mrf.mxu0
        %v5215 = vadd.f32 %v5166, %v5214
        %v5216 = vpop.f32.mrf.mxu0
        %v5217 = vadd.f32 %v5168, %v5216
        %5218 = vmatmul.bf16.gmra.mxu0 %v532
        %v5219 = vpop.f32.mrf.mxu0
        %v5220 = vadd.f32 %v5171, %v5219
        %v5221 = vpop.f32.mrf.mxu0
        %v5222 = vadd.f32 %v5173, %v5221
        %5223 = vmatmul.bf16.gmra.mxu0 %v542
        %v5224 = vpop.f32.mrf.mxu0
        %v5225 = vadd.f32 %v5176, %v5224
        %v5226 = vpop.f32.mrf.mxu0
        %v5227 = vadd.f32 %v5178, %v5226
        %5228 = vdwg.mxu0
        %5229 = vmatpush.bf16.msra.mxu0 %v2481
        %5230 = vmatpush.bf16.msra.mxu0 %v2476
        %5231 = vmatpush.bf16.msra.mxu0 %v2471
        %5232 = vmatpush.bf16.msra.mxu0 %v2466
        %5233 = vmatpush.bf16.msra.mxu0 %v2461
        %5234 = vmatpush.bf16.msra.mxu0 %v2456
        %5235 = vmatpush.bf16.msra.mxu0 %v2451
        %5236 = vmatpush.bf16.msra.mxu0 %v2446
        %5237 = vmatmul.bf16.gmra.mxu0 %v473
        %v5238 = vpop.f32.mrf.mxu0
        %v5239 = vadd.f32 %v5190, %v5238
        %v5240 = vpop.f32.mrf.mxu0
        %v5241 = vadd.f32 %v5192, %v5240
        %5242 = vmatmul.bf16.gmra.mxu0 %v483
        %v5243 = vpop.f32.mrf.mxu0
        %v5244 = vadd.f32 %v5195, %v5243
        %v5245 = vpop.f32.mrf.mxu0
        %v5246 = vadd.f32 %v5197, %v5245
        %5247 = vmatmul.bf16.gmra.mxu0 %v493
        %v5248 = vpop.f32.mrf.mxu0
        %v5249 = vadd.f32 %v5200, %v5248
        %v5250 = vpop.f32.mrf.mxu0
        %v5251 = vadd.f32 %v5202, %v5250
        %5252 = vmatmul.bf16.gmra.mxu0 %v503
        %v5253 = vpop.f32.mrf.mxu0
        %v5254 = vadd.f32 %v5205, %v5253
        %v5255 = vpop.f32.mrf.mxu0
        %v5256 = vadd.f32 %v5207, %v5255
        %5257 = vmatmul.bf16.gmra.mxu0 %v513
        %v5258 = vpop.f32.mrf.mxu0
        %v5259 = vadd.f32 %v5210, %v5258
        %v5260 = vpop.f32.mrf.mxu0
        %v5261 = vadd.f32 %v5212, %v5260
        %5262 = vmatmul.bf16.gmra.mxu0 %v523
        %v5263 = vpop.f32.mrf.mxu0
        %v5264 = vadd.f32 %v5215, %v5263
        %v5265 = vpop.f32.mrf.mxu0
        %v5266 = vadd.f32 %v5217, %v5265
        %5267 = vmatmul.bf16.gmra.mxu0 %v533
        %v5268 = vpop.f32.mrf.mxu0
        %v5269 = vadd.f32 %v5220, %v5268
        %v5270 = vpop.f32.mrf.mxu0
        %v5271 = vadd.f32 %v5222, %v5270
        %5272 = vmatmul.bf16.gmra.mxu0 %v543
        %v5273 = vpop.f32.mrf.mxu0
        %v5274 = vadd.f32 %v5225, %v5273
        %v5275 = vpop.f32.mrf.mxu0
        %v5276 = vadd.f32 %v5227, %v5275
        %5277 = vdwg.mxu0
        %5278 = vmatpush.bf16.msra.mxu0 %v2521
        %5279 = vmatpush.bf16.msra.mxu0 %v2516
        %5280 = vmatpush.bf16.msra.mxu0 %v2511
        %5281 = vmatpush.bf16.msra.mxu0 %v2506
        %5282 = vmatpush.bf16.msra.mxu0 %v2501
        %5283 = vmatpush.bf16.msra.mxu0 %v2496
        %5284 = vmatpush.bf16.msra.mxu0 %v2491
        %5285 = vmatpush.bf16.msra.mxu0 %v2486
        %5286 = vmatmul.bf16.gmra.mxu0 %v474
        %v5287 = vpop.f32.mrf.mxu0
        %v5288 = vadd.f32 %v5239, %v5287
        %v5289 = vpop.f32.mrf.mxu0
        %v5290 = vadd.f32 %v5241, %v5289
        %5291 = vmatmul.bf16.gmra.mxu0 %v484
        %v5292 = vpop.f32.mrf.mxu0
        %v5293 = vadd.f32 %v5244, %v5292
        %v5294 = vpop.f32.mrf.mxu0
        %v5295 = vadd.f32 %v5246, %v5294
        %5296 = vmatmul.bf16.gmra.mxu0 %v494
        %v5297 = vpop.f32.mrf.mxu0
        %v5298 = vadd.f32 %v5249, %v5297
        %v5299 = vpop.f32.mrf.mxu0
        %v5300 = vadd.f32 %v5251, %v5299
        %5301 = vmatmul.bf16.gmra.mxu0 %v504
        %v5302 = vpop.f32.mrf.mxu0
        %v5303 = vadd.f32 %v5254, %v5302
        %v5304 = vpop.f32.mrf.mxu0
        %v5305 = vadd.f32 %v5256, %v5304
        %5306 = vmatmul.bf16.gmra.mxu0 %v514
        %v5307 = vpop.f32.mrf.mxu0
        %v5308 = vadd.f32 %v5259, %v5307
        %v5309 = vpop.f32.mrf.mxu0
        %v5310 = vadd.f32 %v5261, %v5309
        %5311 = vmatmul.bf16.gmra.mxu0 %v524
        %v5312 = vpop.f32.mrf.mxu0
        %v5313 = vadd.f32 %v5264, %v5312
        %v5314 = vpop.f32.mrf.mxu0
        %v5315 = vadd.f32 %v5266, %v5314
        %5316 = vmatmul.bf16.gmra.mxu0 %v534
        %v5317 = vpop.f32.mrf.mxu0
        %v5318 = vadd.f32 %v5269, %v5317
        %v5319 = vpop.f32.mrf.mxu0
        %v5320 = vadd.f32 %v5271, %v5319
        %5321 = vmatmul.bf16.gmra.mxu0 %v544
        %v5322 = vpop.f32.mrf.mxu0
        %v5323 = vadd.f32 %v5274, %v5322
        %v5324 = vpop.f32.mrf.mxu0
        %v5325 = vadd.f32 %v5276, %v5324
        %5326 = vdwg.mxu0
        %5327 = vmatpush.bf16.msra.mxu0 %v2561
        %5328 = vmatpush.bf16.msra.mxu0 %v2556
        %5329 = vmatpush.bf16.msra.mxu0 %v2551
        %5330 = vmatpush.bf16.msra.mxu0 %v2546
        %5331 = vmatpush.bf16.msra.mxu0 %v2541
        %5332 = vmatpush.bf16.msra.mxu0 %v2536
        %5333 = vmatpush.bf16.msra.mxu0 %v2531
        %5334 = vmatpush.bf16.msra.mxu0 %v2526
        %5335 = vmatmul.bf16.gmra.mxu0 %v475
        %v5336 = vpop.f32.mrf.mxu0
        %v5337 = vadd.f32 %v5288, %v5336
        %v5338 = vpop.f32.mrf.mxu0
        %v5339 = vadd.f32 %v5290, %v5338
        %5340 = vmatmul.bf16.gmra.mxu0 %v485
        %v5341 = vpop.f32.mrf.mxu0
        %v5342 = vadd.f32 %v5293, %v5341
        %v5343 = vpop.f32.mrf.mxu0
        %v5344 = vadd.f32 %v5295, %v5343
        %5345 = vmatmul.bf16.gmra.mxu0 %v495
        %v5346 = vpop.f32.mrf.mxu0
        %v5347 = vadd.f32 %v5298, %v5346
        %v5348 = vpop.f32.mrf.mxu0
        %v5349 = vadd.f32 %v5300, %v5348
        %5350 = vmatmul.bf16.gmra.mxu0 %v505
        %v5351 = vpop.f32.mrf.mxu0
        %v5352 = vadd.f32 %v5303, %v5351
        %v5353 = vpop.f32.mrf.mxu0
        %v5354 = vadd.f32 %v5305, %v5353
        %5355 = vmatmul.bf16.gmra.mxu0 %v515
        %v5356 = vpop.f32.mrf.mxu0
        %v5357 = vadd.f32 %v5308, %v5356
        %v5358 = vpop.f32.mrf.mxu0
        %v5359 = vadd.f32 %v5310, %v5358
        %5360 = vmatmul.bf16.gmra.mxu0 %v525
        %v5361 = vpop.f32.mrf.mxu0
        %v5362 = vadd.f32 %v5313, %v5361
        %v5363 = vpop.f32.mrf.mxu0
        %v5364 = vadd.f32 %v5315, %v5363
        %5365 = vmatmul.bf16.gmra.mxu0 %v535
        %v5366 = vpop.f32.mrf.mxu0
        %v5367 = vadd.f32 %v5318, %v5366
        %v5368 = vpop.f32.mrf.mxu0
        %v5369 = vadd.f32 %v5320, %v5368
        %5370 = vmatmul.bf16.gmra.mxu0 %v545
        %v5371 = vpop.f32.mrf.mxu0
        %v5372 = vadd.f32 %v5323, %v5371
        %v5373 = vpop.f32.mrf.mxu0
        %v5374 = vadd.f32 %v5325, %v5373
        %5375 = vdwg.mxu0
        %5376 = vmatpush.bf16.msra.mxu0 %v2601
        %5377 = vmatpush.bf16.msra.mxu0 %v2596
        %5378 = vmatpush.bf16.msra.mxu0 %v2591
        %5379 = vmatpush.bf16.msra.mxu0 %v2586
        %5380 = vmatpush.bf16.msra.mxu0 %v2581
        %5381 = vmatpush.bf16.msra.mxu0 %v2576
        %5382 = vmatpush.bf16.msra.mxu0 %v2571
        %5383 = vmatpush.bf16.msra.mxu0 %v2566
        %5384 = vmatmul.bf16.gmra.mxu0 %v476
        %v5385 = vpop.f32.mrf.mxu0
        %v5386 = vadd.f32 %v5337, %v5385
        %v5387 = vpop.f32.mrf.mxu0
        %v5388 = vadd.f32 %v5339, %v5387
        %5389 = vmatmul.bf16.gmra.mxu0 %v486
        %v5390 = vpop.f32.mrf.mxu0
        %v5391 = vadd.f32 %v5342, %v5390
        %v5392 = vpop.f32.mrf.mxu0
        %v5393 = vadd.f32 %v5344, %v5392
        %5394 = vmatmul.bf16.gmra.mxu0 %v496
        %v5395 = vpop.f32.mrf.mxu0
        %v5396 = vadd.f32 %v5347, %v5395
        %v5397 = vpop.f32.mrf.mxu0
        %v5398 = vadd.f32 %v5349, %v5397
        %5399 = vmatmul.bf16.gmra.mxu0 %v506
        %v5400 = vpop.f32.mrf.mxu0
        %v5401 = vadd.f32 %v5352, %v5400
        %v5402 = vpop.f32.mrf.mxu0
        %v5403 = vadd.f32 %v5354, %v5402
        %5404 = vmatmul.bf16.gmra.mxu0 %v516
        %v5405 = vpop.f32.mrf.mxu0
        %v5406 = vadd.f32 %v5357, %v5405
        %v5407 = vpop.f32.mrf.mxu0
        %v5408 = vadd.f32 %v5359, %v5407
        %5409 = vmatmul.bf16.gmra.mxu0 %v526
        %v5410 = vpop.f32.mrf.mxu0
        %v5411 = vadd.f32 %v5362, %v5410
        %v5412 = vpop.f32.mrf.mxu0
        %v5413 = vadd.f32 %v5364, %v5412
        %5414 = vmatmul.bf16.gmra.mxu0 %v536
        %v5415 = vpop.f32.mrf.mxu0
        %v5416 = vadd.f32 %v5367, %v5415
        %v5417 = vpop.f32.mrf.mxu0
        %v5418 = vadd.f32 %v5369, %v5417
        %5419 = vmatmul.bf16.gmra.mxu0 %v546
        %v5420 = vpop.f32.mrf.mxu0
        %v5421 = vadd.f32 %v5372, %v5420
        %v5422 = vpop.f32.mrf.mxu0
        %v5423 = vadd.f32 %v5374, %v5422
        %5424 = vdwg.mxu0
        %5425 = vmatpush.bf16.msra.mxu0 %v2641
        %5426 = vmatpush.bf16.msra.mxu0 %v2636
        %5427 = vmatpush.bf16.msra.mxu0 %v2631
        %5428 = vmatpush.bf16.msra.mxu0 %v2626
        %5429 = vmatpush.bf16.msra.mxu0 %v2621
        %5430 = vmatpush.bf16.msra.mxu0 %v2616
        %5431 = vmatpush.bf16.msra.mxu0 %v2611
        %5432 = vmatpush.bf16.msra.mxu0 %v2606
        %5433 = vmatmul.bf16.gmra.mxu0 %v477
        %v5434 = vpop.f32.mrf.mxu0
        %v5435 = vadd.f32 %v5386, %v5434
        %v5436 = vpop.f32.mrf.mxu0
        %v5437 = vadd.f32 %v5388, %v5436
        %5438 = vmatmul.bf16.gmra.mxu0 %v487
        %v5439 = vpop.f32.mrf.mxu0
        %v5440 = vadd.f32 %v5391, %v5439
        %v5441 = vpop.f32.mrf.mxu0
        %v5442 = vadd.f32 %v5393, %v5441
        %5443 = vmatmul.bf16.gmra.mxu0 %v497
        %v5444 = vpop.f32.mrf.mxu0
        %v5445 = vadd.f32 %v5396, %v5444
        %v5446 = vpop.f32.mrf.mxu0
        %v5447 = vadd.f32 %v5398, %v5446
        %5448 = vmatmul.bf16.gmra.mxu0 %v507
        %v5449 = vpop.f32.mrf.mxu0
        %v5450 = vadd.f32 %v5401, %v5449
        %v5451 = vpop.f32.mrf.mxu0
        %v5452 = vadd.f32 %v5403, %v5451
        %5453 = vmatmul.bf16.gmra.mxu0 %v517
        %v5454 = vpop.f32.mrf.mxu0
        %v5455 = vadd.f32 %v5406, %v5454
        %v5456 = vpop.f32.mrf.mxu0
        %v5457 = vadd.f32 %v5408, %v5456
        %5458 = vmatmul.bf16.gmra.mxu0 %v527
        %v5459 = vpop.f32.mrf.mxu0
        %v5460 = vadd.f32 %v5411, %v5459
        %v5461 = vpop.f32.mrf.mxu0
        %v5462 = vadd.f32 %v5413, %v5461
        %5463 = vmatmul.bf16.gmra.mxu0 %v537
        %v5464 = vpop.f32.mrf.mxu0
        %v5465 = vadd.f32 %v5416, %v5464
        %v5466 = vpop.f32.mrf.mxu0
        %v5467 = vadd.f32 %v5418, %v5466
        %5468 = vmatmul.bf16.gmra.mxu0 %v547
        %v5469 = vpop.f32.mrf.mxu0
        %v5470 = vadd.f32 %v5421, %v5469
        %v5471 = vpop.f32.mrf.mxu0
        %v5472 = vadd.f32 %v5423, %v5471
        %5473 = vdwg.mxu0
        %5474 = vmatpush.bf16.msra.mxu0 %v2681
        %5475 = vmatpush.bf16.msra.mxu0 %v2676
        %5476 = vmatpush.bf16.msra.mxu0 %v2671
        %5477 = vmatpush.bf16.msra.mxu0 %v2666
        %5478 = vmatpush.bf16.msra.mxu0 %v2661
        %5479 = vmatpush.bf16.msra.mxu0 %v2656
        %5480 = vmatpush.bf16.msra.mxu0 %v2651
        %5481 = vmatpush.bf16.msra.mxu0 %v2646
        %5482 = vmatmul.bf16.gmra.mxu0 %v478
        %v5483 = vpop.f32.mrf.mxu0
        %v5484 = vadd.f32 %v5435, %v5483
        %v5485 = vpop.f32.mrf.mxu0
        %v5486 = vadd.f32 %v5437, %v5485
        %5487 = vmatmul.bf16.gmra.mxu0 %v488
        %v5488 = vpop.f32.mrf.mxu0
        %v5489 = vadd.f32 %v5440, %v5488
        %v5490 = vpop.f32.mrf.mxu0
        %v5491 = vadd.f32 %v5442, %v5490
        %5492 = vmatmul.bf16.gmra.mxu0 %v498
        %v5493 = vpop.f32.mrf.mxu0
        %v5494 = vadd.f32 %v5445, %v5493
        %v5495 = vpop.f32.mrf.mxu0
        %v5496 = vadd.f32 %v5447, %v5495
        %5497 = vmatmul.bf16.gmra.mxu0 %v508
        %v5498 = vpop.f32.mrf.mxu0
        %v5499 = vadd.f32 %v5450, %v5498
        %v5500 = vpop.f32.mrf.mxu0
        %v5501 = vadd.f32 %v5452, %v5500
        %5502 = vmatmul.bf16.gmra.mxu0 %v518
        %v5503 = vpop.f32.mrf.mxu0
        %v5504 = vadd.f32 %v5455, %v5503
        %v5505 = vpop.f32.mrf.mxu0
        %v5506 = vadd.f32 %v5457, %v5505
        %5507 = vmatmul.bf16.gmra.mxu0 %v528
        %v5508 = vpop.f32.mrf.mxu0
        %v5509 = vadd.f32 %v5460, %v5508
        %v5510 = vpop.f32.mrf.mxu0
        %v5511 = vadd.f32 %v5462, %v5510
        %5512 = vmatmul.bf16.gmra.mxu0 %v538
        %v5513 = vpop.f32.mrf.mxu0
        %v5514 = vadd.f32 %v5465, %v5513
        %v5515 = vpop.f32.mrf.mxu0
        %v5516 = vadd.f32 %v5467, %v5515
        %5517 = vmatmul.bf16.gmra.mxu0 %v548
        %v5518 = vpop.f32.mrf.mxu0
        %v5519 = vadd.f32 %v5470, %v5518
        %v5520 = vpop.f32.mrf.mxu0
        %v5521 = vadd.f32 %v5472, %v5520
        %5522 = vdwg.mxu0
        %5523 = vmatpush.bf16.msra.mxu0 %v2721
        %5524 = vmatpush.bf16.msra.mxu0 %v2716
        %5525 = vmatpush.bf16.msra.mxu0 %v2711
        %5526 = vmatpush.bf16.msra.mxu0 %v2706
        %5527 = vmatpush.bf16.msra.mxu0 %v2701
        %5528 = vmatpush.bf16.msra.mxu0 %v2696
        %5529 = vmatpush.bf16.msra.mxu0 %v2691
        %5530 = vmatpush.bf16.msra.mxu0 %v2686
        %5531 = vmatmul.bf16.gmra.mxu0 %v479
        %v5532 = vpop.f32.mrf.mxu0
        %v5533 = vadd.f32 %v5484, %v5532
        %v5534 = vpop.f32.mrf.mxu0
        %v5535 = vadd.f32 %v5486, %v5534
        %5536 = vmatmul.bf16.gmra.mxu0 %v489
        %v5537 = vpop.f32.mrf.mxu0
        %v5538 = vadd.f32 %v5489, %v5537
        %v5539 = vpop.f32.mrf.mxu0
        %v5540 = vadd.f32 %v5491, %v5539
        %5541 = vmatmul.bf16.gmra.mxu0 %v499
        %v5542 = vpop.f32.mrf.mxu0
        %v5543 = vadd.f32 %v5494, %v5542
        %v5544 = vpop.f32.mrf.mxu0
        %v5545 = vadd.f32 %v5496, %v5544
        %5546 = vmatmul.bf16.gmra.mxu0 %v509
        %v5547 = vpop.f32.mrf.mxu0
        %v5548 = vadd.f32 %v5499, %v5547
        %v5549 = vpop.f32.mrf.mxu0
        %v5550 = vadd.f32 %v5501, %v5549
        %5551 = vmatmul.bf16.gmra.mxu0 %v519
        %v5552 = vpop.f32.mrf.mxu0
        %v5553 = vadd.f32 %v5504, %v5552
        %v5554 = vpop.f32.mrf.mxu0
        %v5555 = vadd.f32 %v5506, %v5554
        %5556 = vmatmul.bf16.gmra.mxu0 %v529
        %v5557 = vpop.f32.mrf.mxu0
        %v5558 = vadd.f32 %v5509, %v5557
        %v5559 = vpop.f32.mrf.mxu0
        %v5560 = vadd.f32 %v5511, %v5559
        %5561 = vmatmul.bf16.gmra.mxu0 %v539
        %v5562 = vpop.f32.mrf.mxu0
        %v5563 = vadd.f32 %v5514, %v5562
        %v5564 = vpop.f32.mrf.mxu0
        %v5565 = vadd.f32 %v5516, %v5564
        %5566 = vmatmul.bf16.gmra.mxu0 %v549
        %v5567 = vpop.f32.mrf.mxu0
        %v5568 = vadd.f32 %v5519, %v5567
        %v5569 = vpop.f32.mrf.mxu0
        %v5570 = vadd.f32 %v5521, %v5569
        %5571 = vdwg.mxu0
        %v5572 = vmax.f32 %v3573, 0.0
        %v5573 = vmax.f32 %v4063, 0.0
        %v5574 = vmax.f32 %v4553, 0.0
        %v5575 = vmax.f32 %v5043, 0.0
        %v5576 = vmax.f32 %v5533, 0.0
        %v5577 = vmax.f32 %v3575, 0.0
        %v5578 = vmax.f32 %v4065, 0.0
        %v5579 = vmax.f32 %v4555, 0.0
        %v5580 = vmax.f32 %v5045, 0.0
        %v5581 = vmax.f32 %v5535, 0.0
        %v5582 = vmax.f32 %v3578, 0.0
        %v5583 = vmax.f32 %v4068, 0.0
        %v5584 = vmax.f32 %v4558, 0.0
        %v5585 = vmax.f32 %v5048, 0.0
        %v5586 = vmax.f32 %v5538, 0.0
        %v5587 = vmax.f32 %v3580, 0.0
        %v5588 = vmax.f32 %v4070, 0.0
        %v5589 = vmax.f32 %v4560, 0.0
        %v5590 = vmax.f32 %v5050, 0.0
        %v5591 = vmax.f32 %v5540, 0.0
        %v5592 = vmax.f32 %v3583, 0.0
        %v5593 = vmax.f32 %v4073, 0.0
        %v5594 = vmax.f32 %v4563, 0.0
        %v5595 = vmax.f32 %v5053, 0.0
        %v5596 = vmax.f32 %v5543, 0.0
        %v5597 = vmax.f32 %v3585, 0.0
        %v5598 = vmax.f32 %v4075, 0.0
        %v5599 = vmax.f32 %v4565, 0.0
        %v5600 = vmax.f32 %v5055, 0.0
        %v5601 = vmax.f32 %v5545, 0.0
        %v5602 = vmax.f32 %v3588, 0.0
        %v5603 = vmax.f32 %v4078, 0.0
        %v5604 = vmax.f32 %v4568, 0.0
        %v5605 = vmax.f32 %v5058, 0.0
        %v5606 = vmax.f32 %v5548, 0.0
        %v5607 = vmax.f32 %v3590, 0.0
        %v5608 = vmax.f32 %v4080, 0.0
        %v5609 = vmax.f32 %v4570, 0.0
        %v5610 = vmax.f32 %v5060, 0.0
        %v5611 = vmax.f32 %v5550, 0.0
        %v5612 = vmax.f32 %v3593, 0.0
        %v5613 = vmax.f32 %v4083, 0.0
        %v5614 = vmax.f32 %v4573, 0.0
        %v5615 = vmax.f32 %v5063, 0.0
        %v5616 = vmax.f32 %v5553, 0.0
        %v5617 = vmax.f32 %v3595, 0.0
        %v5618 = vmax.f32 %v4085, 0.0
        %v5619 = vmax.f32 %v4575, 0.0
        %v5620 = vmax.f32 %v5065, 0.0
        %v5621 = vmax.f32 %v5555, 0.0
        %v5622 = vmax.f32 %v3598, 0.0
        %v5623 = vmax.f32 %v4088, 0.0
        %v5624 = vmax.f32 %v4578, 0.0
        %v5625 = vmax.f32 %v5068, 0.0
        %v5626 = vmax.f32 %v5558, 0.0
        %v5627 = vmax.f32 %v3600, 0.0
        %v5628 = vmax.f32 %v4090, 0.0
        %v5629 = vmax.f32 %v4580, 0.0
        %v5630 = vmax.f32 %v5070, 0.0
        %v5631 = vmax.f32 %v5560, 0.0
        %v5632 = vmax.f32 %v3603, 0.0
        %v5633 = vmax.f32 %v4093, 0.0
        %v5634 = vmax.f32 %v4583, 0.0
        %v5635 = vmax.f32 %v5073, 0.0
        %v5636 = vmax.f32 %v5563, 0.0
        %v5637 = vmax.f32 %v3605, 0.0
        %v5638 = vmax.f32 %v4095, 0.0
        %v5639 = vmax.f32 %v4585, 0.0
        %v5640 = vmax.f32 %v5075, 0.0
        %v5641 = vmax.f32 %v5565, 0.0
        %v5642 = vmax.f32 %v3608, 0.0
        %v5643 = vmax.f32 %v4098, 0.0
        %v5644 = vmax.f32 %v4588, 0.0
        %v5645 = vmax.f32 %v5078, 0.0
        %v5646 = vmax.f32 %v5568, 0.0
        %v5647 = vmax.f32 %v3610, 0.0
        %v5648 = vmax.f32 %v4100, 0.0
        %v5649 = vmax.f32 %v4590, 0.0
        %v5650 = vmax.f32 %v5080, 0.0
        %v5651 = vmax.f32 %v5570, 0.0
        %v5652 = vld [vmem:[#allocation8] sm:$0xff]
        %v5653 = vld [vmem:[#allocation8 + $0x8] sm:$0xff]
        %v5654 = vld [vmem:[#allocation8 + $0x10] sm:$0xff]
        %v5655 = vld [vmem:[#allocation8 + $0x18] sm:$0xff]
        %v5656 = vld [vmem:[#allocation8 + $0x20] sm:$0xff]
        %v5657 = vld [vmem:[#allocation8 + $0x28] sm:$0xff]
        %v5658 = vld [vmem:[#allocation8 + $0x30] sm:$0xff]
        %v5659 = vld [vmem:[#allocation8 + $0x38] sm:$0xff]
        %v5660 = vld [vmem:[#allocation8 + $0x40] sm:$0xff]
        %v5661 = vld [vmem:[#allocation8 + $0x48] sm:$0xff]
        %v5662 = vld [vmem:[#allocation8 + $0x50] sm:$0xff]
        %v5663 = vld [vmem:[#allocation8 + $0x58] sm:$0xff]
        %v5664 = vld [vmem:[#allocation8 + $0x60] sm:$0xff]
        %v5665 = vld [vmem:[#allocation8 + $0x68] sm:$0xff]
        %v5666 = vld [vmem:[#allocation8 + $0x70] sm:$0xff]
        %v5667 = vld [vmem:[#allocation8 + $0x78] sm:$0xff]
        %v5668 = vld [vmem:[#allocation8 + $0x80] sm:$0xff]
        %v5669 = vld [vmem:[#allocation8 + $0x88] sm:$0xff]
        %v5670 = vld [vmem:[#allocation8 + $0x90] sm:$0xff]
        %v5671 = vld [vmem:[#allocation8 + $0x98] sm:$0xff]
        %v5672 = vld [vmem:[#allocation8 + $0xa0] sm:$0xff]
        %v5673 = vld [vmem:[#allocation8 + $0xa8] sm:$0xff]
        %v5674 = vld [vmem:[#allocation8 + $0xb0] sm:$0xff]
        %v5675 = vld [vmem:[#allocation8 + $0xb8] sm:$0xff]
        %v5676 = vld [vmem:[#allocation8 + $0xc0] sm:$0xff]
        %v5677 = vld [vmem:[#allocation8 + $0xc8] sm:$0xff]
        %v5678 = vld [vmem:[#allocation8 + $0xd0] sm:$0xff]
        %v5679 = vld [vmem:[#allocation8 + $0xd8] sm:$0xff]
        %v5680 = vld [vmem:[#allocation8 + $0xe0] sm:$0xff]
        %v5681 = vld [vmem:[#allocation8 + $0xe8] sm:$0xff]
        %v5682 = vld [vmem:[#allocation8 + $0xf0] sm:$0xff]
        %v5683 = vld [vmem:[#allocation8 + $0xf8] sm:$0xff]
        %v5684 = vld [vmem:[#allocation8 + $0x100] sm:$0xff]
        %v5685 = vld [vmem:[#allocation8 + $0x108] sm:$0xff]
        %v5686 = vld [vmem:[#allocation8 + $0x110] sm:$0xff]
        %v5687 = vld [vmem:[#allocation8 + $0x118] sm:$0xff]
        %v5688 = vld [vmem:[#allocation8 + $0x120] sm:$0xff]
        %v5689 = vld [vmem:[#allocation8 + $0x128] sm:$0xff]
        %v5690 = vld [vmem:[#allocation8 + $0x130] sm:$0xff]
        %v5691 = vld [vmem:[#allocation8 + $0x138] sm:$0xff]
        %v5692 = vld [vmem:[#allocation8 + $0x140] sm:$0xff]
        %v5693 = vld [vmem:[#allocation8 + $0x148] sm:$0xff]
        %v5694 = vld [vmem:[#allocation8 + $0x150] sm:$0xff]
        %v5695 = vld [vmem:[#allocation8 + $0x158] sm:$0xff]
        %v5696 = vld [vmem:[#allocation8 + $0x160] sm:$0xff]
        %v5697 = vld [vmem:[#allocation8 + $0x168] sm:$0xff]
        %v5698 = vld [vmem:[#allocation8 + $0x170] sm:$0xff]
        %v5699 = vld [vmem:[#allocation8 + $0x178] sm:$0xff]
        %v5700 = vld [vmem:[#allocation8 + $0x180] sm:$0xff]
        %v5701 = vld [vmem:[#allocation8 + $0x188] sm:$0xff]
        %v5702 = vld [vmem:[#allocation8 + $0x190] sm:$0xff]
        %v5703 = vld [vmem:[#allocation8 + $0x198] sm:$0xff]
        %v5704 = vld [vmem:[#allocation8 + $0x1a0] sm:$0xff]
        %v5705 = vld [vmem:[#allocation8 + $0x1a8] sm:$0xff]
        %v5706 = vld [vmem:[#allocation8 + $0x1b0] sm:$0xff]
        %v5707 = vld [vmem:[#allocation8 + $0x1b8] sm:$0xff]
        %v5708 = vld [vmem:[#allocation8 + $0x1c0] sm:$0xff]
        %v5709 = vld [vmem:[#allocation8 + $0x1c8] sm:$0xff]
        %v5710 = vld [vmem:[#allocation8 + $0x1d0] sm:$0xff]
        %v5711 = vld [vmem:[#allocation8 + $0x1d8] sm:$0xff]
        %v5712 = vld [vmem:[#allocation8 + $0x1e0] sm:$0xff]
        %v5713 = vld [vmem:[#allocation8 + $0x1e8] sm:$0xff]
        %v5714 = vld [vmem:[#allocation8 + $0x1f0] sm:$0xff]
        %v5715 = vld [vmem:[#allocation8 + $0x1f8] sm:$0xff]
        %v5716 = vld [vmem:[#allocation8 + $0x200] sm:$0xff]
        %v5717 = vld [vmem:[#allocation8 + $0x208] sm:$0xff]
        %v5718 = vld [vmem:[#allocation8 + $0x210] sm:$0xff]
        %v5719 = vld [vmem:[#allocation8 + $0x218] sm:$0xff]
        %v5720 = vld [vmem:[#allocation8 + $0x220] sm:$0xff]
        %v5721 = vld [vmem:[#allocation8 + $0x228] sm:$0xff]
        %v5722 = vld [vmem:[#allocation8 + $0x230] sm:$0xff]
        %v5723 = vld [vmem:[#allocation8 + $0x238] sm:$0xff]
        %v5724 = vld [vmem:[#allocation8 + $0x240] sm:$0xff]
        %v5725 = vld [vmem:[#allocation8 + $0x248] sm:$0xff]
        %v5726 = vld [vmem:[#allocation8 + $0x250] sm:$0xff]
        %v5727 = vld [vmem:[#allocation8 + $0x258] sm:$0xff]
        %v5728 = vld [vmem:[#allocation8 + $0x260] sm:$0xff]
        %v5729 = vld [vmem:[#allocation8 + $0x268] sm:$0xff]
        %v5730 = vld [vmem:[#allocation8 + $0x270] sm:$0xff]
        %v5731 = vld [vmem:[#allocation8 + $0x278] sm:$0xff]
        %v5732 = vld [vmem:[#allocation10] sm:$0x1]
        %v5734 = vperm.slane %v5732, 0
        %5736 = vmatpush.msra.mxu0 %v5667
        %5737 = vmatpush.msra.mxu0 %v5666
        %5738 = vmatpush.msra.mxu0 %v5665
        %5739 = vmatpush.msra.mxu0 %v5664
        %5740 = vmatpush.msra.mxu0 %v5663
        %5741 = vmatpush.msra.mxu0 %v5662
        %5742 = vmatpush.msra.mxu0 %v5661
        %5743 = vmatpush.msra.mxu0 %v5660
        %5744 = vmatpush.msra.mxu0 %v5659
        %5745 = vmatpush.msra.mxu0 %v5658
        %5746 = vmatpush.msra.mxu0 %v5657
        %5747 = vmatpush.msra.mxu0 %v5656
        %5748 = vmatpush.msra.mxu0 %v5655
        %5749 = vmatpush.msra.mxu0 %v5654
        %5750 = vmatpush.msra.mxu0 %v5653
        %5751 = vmatpush.msra.mxu0 %v5652
        %5752 = vmatmul.f32.gmra.mxu0 %v5572
        %v5753 = vpop.f32.mrf.mxu0
        %v5754 = vadd.f32 %v5734, %v5753
        %5755 = vmatmul.f32.gmra.mxu0 %v5577
        %v5756 = vpop.f32.mrf.mxu0
        %v5757 = vadd.f32 %v5734, %v5756
        %5758 = vmatmul.f32.gmra.mxu0 %v5582
        %v5759 = vpop.f32.mrf.mxu0
        %v5760 = vadd.f32 %v5734, %v5759
        %5761 = vmatmul.f32.gmra.mxu0 %v5587
        %v5762 = vpop.f32.mrf.mxu0
        %v5763 = vadd.f32 %v5734, %v5762
        %5764 = vmatmul.f32.gmra.mxu0 %v5592
        %v5765 = vpop.f32.mrf.mxu0
        %v5766 = vadd.f32 %v5734, %v5765
        %5767 = vmatmul.f32.gmra.mxu0 %v5597
        %v5768 = vpop.f32.mrf.mxu0
        %v5769 = vadd.f32 %v5734, %v5768
        %5770 = vmatmul.f32.gmra.mxu0 %v5602
        %v5771 = vpop.f32.mrf.mxu0
        %v5772 = vadd.f32 %v5734, %v5771
        %5773 = vmatmul.f32.gmra.mxu0 %v5607
        %v5774 = vpop.f32.mrf.mxu0
        %v5775 = vadd.f32 %v5734, %v5774
        %5776 = vmatmul.f32.gmra.mxu0 %v5612
        %v5777 = vpop.f32.mrf.mxu0
        %v5778 = vadd.f32 %v5734, %v5777
        %5779 = vmatmul.f32.gmra.mxu0 %v5617
        %v5780 = vpop.f32.mrf.mxu0
        %v5781 = vadd.f32 %v5734, %v5780
        %5782 = vmatmul.f32.gmra.mxu0 %v5622
        %v5783 = vpop.f32.mrf.mxu0
        %v5784 = vadd.f32 %v5734, %v5783
        %5785 = vmatmul.f32.gmra.mxu0 %v5627
        %v5786 = vpop.f32.mrf.mxu0
        %v5787 = vadd.f32 %v5734, %v5786
        %5788 = vmatmul.f32.gmra.mxu0 %v5632
        %v5789 = vpop.f32.mrf.mxu0
        %v5790 = vadd.f32 %v5734, %v5789
        %5791 = vmatmul.f32.gmra.mxu0 %v5637
        %v5792 = vpop.f32.mrf.mxu0
        %v5793 = vadd.f32 %v5734, %v5792
        %5794 = vmatmul.f32.gmra.mxu0 %v5642
        %v5795 = vpop.f32.mrf.mxu0
        %v5796 = vadd.f32 %v5734, %v5795
        %5797 = vmatmul.f32.gmra.mxu0 %v5647
        %v5798 = vpop.f32.mrf.mxu0
        %v5799 = vadd.f32 %v5734, %v5798
        %5800 = vdwg.mxu0
        %5801 = vmatpush.msra.mxu0 %v5683
        %5802 = vmatpush.msra.mxu0 %v5682
        %5803 = vmatpush.msra.mxu0 %v5681
        %5804 = vmatpush.msra.mxu0 %v5680
        %5805 = vmatpush.msra.mxu0 %v5679
        %5806 = vmatpush.msra.mxu0 %v5678
        %5807 = vmatpush.msra.mxu0 %v5677
        %5808 = vmatpush.msra.mxu0 %v5676
        %5809 = vmatpush.msra.mxu0 %v5675
        %5810 = vmatpush.msra.mxu0 %v5674
        %5811 = vmatpush.msra.mxu0 %v5673
        %5812 = vmatpush.msra.mxu0 %v5672
        %5813 = vmatpush.msra.mxu0 %v5671
        %5814 = vmatpush.msra.mxu0 %v5670
        %5815 = vmatpush.msra.mxu0 %v5669
        %5816 = vmatpush.msra.mxu0 %v5668
        %5817 = vmatmul.f32.gmra.mxu0 %v5573
        %v5818 = vpop.f32.mrf.mxu0
        %v5819 = vadd.f32 %v5754, %v5818
        %5820 = vmatmul.f32.gmra.mxu0 %v5578
        %v5821 = vpop.f32.mrf.mxu0
        %v5822 = vadd.f32 %v5757, %v5821
        %5823 = vmatmul.f32.gmra.mxu0 %v5583
        %v5824 = vpop.f32.mrf.mxu0
        %v5825 = vadd.f32 %v5760, %v5824
        %5826 = vmatmul.f32.gmra.mxu0 %v5588
        %v5827 = vpop.f32.mrf.mxu0
        %v5828 = vadd.f32 %v5763, %v5827
        %5829 = vmatmul.f32.gmra.mxu0 %v5593
        %v5830 = vpop.f32.mrf.mxu0
        %v5831 = vadd.f32 %v5766, %v5830
        %5832 = vmatmul.f32.gmra.mxu0 %v5598
        %v5833 = vpop.f32.mrf.mxu0
        %v5834 = vadd.f32 %v5769, %v5833
        %5835 = vmatmul.f32.gmra.mxu0 %v5603
        %v5836 = vpop.f32.mrf.mxu0
        %v5837 = vadd.f32 %v5772, %v5836
        %5838 = vmatmul.f32.gmra.mxu0 %v5608
        %v5839 = vpop.f32.mrf.mxu0
        %v5840 = vadd.f32 %v5775, %v5839
        %5841 = vmatmul.f32.gmra.mxu0 %v5613
        %v5842 = vpop.f32.mrf.mxu0
        %v5843 = vadd.f32 %v5778, %v5842
        %5844 = vmatmul.f32.gmra.mxu0 %v5618
        %v5845 = vpop.f32.mrf.mxu0
        %v5846 = vadd.f32 %v5781, %v5845
        %5847 = vmatmul.f32.gmra.mxu0 %v5623
        %v5848 = vpop.f32.mrf.mxu0
        %v5849 = vadd.f32 %v5784, %v5848
        %5850 = vmatmul.f32.gmra.mxu0 %v5628
        %v5851 = vpop.f32.mrf.mxu0
        %v5852 = vadd.f32 %v5787, %v5851
        %5853 = vmatmul.f32.gmra.mxu0 %v5633
        %v5854 = vpop.f32.mrf.mxu0
        %v5855 = vadd.f32 %v5790, %v5854
        %5856 = vmatmul.f32.gmra.mxu0 %v5638
        %v5857 = vpop.f32.mrf.mxu0
        %v5858 = vadd.f32 %v5793, %v5857
        %5859 = vmatmul.f32.gmra.mxu0 %v5643
        %v5860 = vpop.f32.mrf.mxu0
        %v5861 = vadd.f32 %v5796, %v5860
        %5862 = vmatmul.f32.gmra.mxu0 %v5648
        %v5863 = vpop.f32.mrf.mxu0
        %v5864 = vadd.f32 %v5799, %v5863
        %5865 = vdwg.mxu0
        %5866 = vmatpush.msra.mxu0 %v5699
        %5867 = vmatpush.msra.mxu0 %v5698
        %5868 = vmatpush.msra.mxu0 %v5697
        %5869 = vmatpush.msra.mxu0 %v5696
        %5870 = vmatpush.msra.mxu0 %v5695
        %5871 = vmatpush.msra.mxu0 %v5694
        %5872 = vmatpush.msra.mxu0 %v5693
        %5873 = vmatpush.msra.mxu0 %v5692
        %5874 = vmatpush.msra.mxu0 %v5691
        %5875 = vmatpush.msra.mxu0 %v5690
        %5876 = vmatpush.msra.mxu0 %v5689
        %5877 = vmatpush.msra.mxu0 %v5688
        %5878 = vmatpush.msra.mxu0 %v5687
        %5879 = vmatpush.msra.mxu0 %v5686
        %5880 = vmatpush.msra.mxu0 %v5685
        %5881 = vmatpush.msra.mxu0 %v5684
        %5882 = vmatmul.f32.gmra.mxu0 %v5574
        %v5883 = vpop.f32.mrf.mxu0
        %v5884 = vadd.f32 %v5819, %v5883
        %5885 = vmatmul.f32.gmra.mxu0 %v5579
        %v5886 = vpop.f32.mrf.mxu0
        %v5887 = vadd.f32 %v5822, %v5886
        %5888 = vmatmul.f32.gmra.mxu0 %v5584
        %v5889 = vpop.f32.mrf.mxu0
        %v5890 = vadd.f32 %v5825, %v5889
        %5891 = vmatmul.f32.gmra.mxu0 %v5589
        %v5892 = vpop.f32.mrf.mxu0
        %v5893 = vadd.f32 %v5828, %v5892
        %5894 = vmatmul.f32.gmra.mxu0 %v5594
        %v5895 = vpop.f32.mrf.mxu0
        %v5896 = vadd.f32 %v5831, %v5895
        %5897 = vmatmul.f32.gmra.mxu0 %v5599
        %v5898 = vpop.f32.mrf.mxu0
        %v5899 = vadd.f32 %v5834, %v5898
        %5900 = vmatmul.f32.gmra.mxu0 %v5604
        %v5901 = vpop.f32.mrf.mxu0
        %v5902 = vadd.f32 %v5837, %v5901
        %5903 = vmatmul.f32.gmra.mxu0 %v5609
        %v5904 = vpop.f32.mrf.mxu0
        %v5905 = vadd.f32 %v5840, %v5904
        %5906 = vmatmul.f32.gmra.mxu0 %v5614
        %v5907 = vpop.f32.mrf.mxu0
        %v5908 = vadd.f32 %v5843, %v5907
        %5909 = vmatmul.f32.gmra.mxu0 %v5619
        %v5910 = vpop.f32.mrf.mxu0
        %v5911 = vadd.f32 %v5846, %v5910
        %5912 = vmatmul.f32.gmra.mxu0 %v5624
        %v5913 = vpop.f32.mrf.mxu0
        %v5914 = vadd.f32 %v5849, %v5913
        %5915 = vmatmul.f32.gmra.mxu0 %v5629
        %v5916 = vpop.f32.mrf.mxu0
        %v5917 = vadd.f32 %v5852, %v5916
        %5918 = vmatmul.f32.gmra.mxu0 %v5634
        %v5919 = vpop.f32.mrf.mxu0
        %v5920 = vadd.f32 %v5855, %v5919
        %5921 = vmatmul.f32.gmra.mxu0 %v5639
        %v5922 = vpop.f32.mrf.mxu0
        %v5923 = vadd.f32 %v5858, %v5922
        %5924 = vmatmul.f32.gmra.mxu0 %v5644
        %v5925 = vpop.f32.mrf.mxu0
        %v5926 = vadd.f32 %v5861, %v5925
        %5927 = vmatmul.f32.gmra.mxu0 %v5649
        %v5928 = vpop.f32.mrf.mxu0
        %v5929 = vadd.f32 %v5864, %v5928
        %5930 = vdwg.mxu0
        %5931 = vmatpush.msra.mxu0 %v5715
        %5932 = vmatpush.msra.mxu0 %v5714
        %5933 = vmatpush.msra.mxu0 %v5713
        %5934 = vmatpush.msra.mxu0 %v5712
        %5935 = vmatpush.msra.mxu0 %v5711
        %5936 = vmatpush.msra.mxu0 %v5710
        %5937 = vmatpush.msra.mxu0 %v5709
        %5938 = vmatpush.msra.mxu0 %v5708
        %5939 = vmatpush.msra.mxu0 %v5707
        %5940 = vmatpush.msra.mxu0 %v5706
        %5941 = vmatpush.msra.mxu0 %v5705
        %5942 = vmatpush.msra.mxu0 %v5704
        %5943 = vmatpush.msra.mxu0 %v5703
        %5944 = vmatpush.msra.mxu0 %v5702
        %5945 = vmatpush.msra.mxu0 %v5701
        %5946 = vmatpush.msra.mxu0 %v5700
        %5947 = vmatmul.f32.gmra.mxu0 %v5575
        %v5948 = vpop.f32.mrf.mxu0
        %v5949 = vadd.f32 %v5884, %v5948
        %5950 = vmatmul.f32.gmra.mxu0 %v5580
        %v5951 = vpop.f32.mrf.mxu0
        %v5952 = vadd.f32 %v5887, %v5951
        %5953 = vmatmul.f32.gmra.mxu0 %v5585
        %v5954 = vpop.f32.mrf.mxu0
        %v5955 = vadd.f32 %v5890, %v5954
        %5956 = vmatmul.f32.gmra.mxu0 %v5590
        %v5957 = vpop.f32.mrf.mxu0
        %v5958 = vadd.f32 %v5893, %v5957
        %5959 = vmatmul.f32.gmra.mxu0 %v5595
        %v5960 = vpop.f32.mrf.mxu0
        %v5961 = vadd.f32 %v5896, %v5960
        %5962 = vmatmul.f32.gmra.mxu0 %v5600
        %v5963 = vpop.f32.mrf.mxu0
        %v5964 = vadd.f32 %v5899, %v5963
        %5965 = vmatmul.f32.gmra.mxu0 %v5605
        %v5966 = vpop.f32.mrf.mxu0
        %v5967 = vadd.f32 %v5902, %v5966
        %5968 = vmatmul.f32.gmra.mxu0 %v5610
        %v5969 = vpop.f32.mrf.mxu0
        %v5970 = vadd.f32 %v5905, %v5969
        %5971 = vmatmul.f32.gmra.mxu0 %v5615
        %v5972 = vpop.f32.mrf.mxu0
        %v5973 = vadd.f32 %v5908, %v5972
        %5974 = vmatmul.f32.gmra.mxu0 %v5620
        %v5975 = vpop.f32.mrf.mxu0
        %v5976 = vadd.f32 %v5911, %v5975
        %5977 = vmatmul.f32.gmra.mxu0 %v5625
        %v5978 = vpop.f32.mrf.mxu0
        %v5979 = vadd.f32 %v5914, %v5978
        %5980 = vmatmul.f32.gmra.mxu0 %v5630
        %v5981 = vpop.f32.mrf.mxu0
        %v5982 = vadd.f32 %v5917, %v5981
        %5983 = vmatmul.f32.gmra.mxu0 %v5635
        %v5984 = vpop.f32.mrf.mxu0
        %v5985 = vadd.f32 %v5920, %v5984
        %5986 = vmatmul.f32.gmra.mxu0 %v5640
        %v5987 = vpop.f32.mrf.mxu0
        %v5988 = vadd.f32 %v5923, %v5987
        %5989 = vmatmul.f32.gmra.mxu0 %v5645
        %v5990 = vpop.f32.mrf.mxu0
        %v5991 = vadd.f32 %v5926, %v5990
        %5992 = vmatmul.f32.gmra.mxu0 %v5650
        %v5993 = vpop.f32.mrf.mxu0
        %v5994 = vadd.f32 %v5929, %v5993
        %5995 = vdwg.mxu0
        %5996 = vmatpush.msra.mxu0 %v5731
        %5997 = vmatpush.msra.mxu0 %v5730
        %5998 = vmatpush.msra.mxu0 %v5729
        %5999 = vmatpush.msra.mxu0 %v5728
        %6000 = vmatpush.msra.mxu0 %v5727
        %6001 = vmatpush.msra.mxu0 %v5726
        %6002 = vmatpush.msra.mxu0 %v5725
        %6003 = vmatpush.msra.mxu0 %v5724
        %6004 = vmatpush.msra.mxu0 %v5723
        %6005 = vmatpush.msra.mxu0 %v5722
        %6006 = vmatpush.msra.mxu0 %v5721
        %6007 = vmatpush.msra.mxu0 %v5720
        %6008 = vmatpush.msra.mxu0 %v5719
        %6009 = vmatpush.msra.mxu0 %v5718
        %6010 = vmatpush.msra.mxu0 %v5717
        %6011 = vmatpush.msra.mxu0 %v5716
        %6012 = vmatmul.f32.gmra.mxu0 %v5576
        %v6013 = vpop.f32.mrf.mxu0
        %v6014 = vadd.f32 %v5949, %v6013
        %6015 = vmatmul.f32.gmra.mxu0 %v5581
        %v6016 = vpop.f32.mrf.mxu0
        %v6017 = vadd.f32 %v5952, %v6016
        %6018 = vmatmul.f32.gmra.mxu0 %v5586
        %v6019 = vpop.f32.mrf.mxu0
        %v6020 = vadd.f32 %v5955, %v6019
        %6021 = vmatmul.f32.gmra.mxu0 %v5591
        %v6022 = vpop.f32.mrf.mxu0
        %v6023 = vadd.f32 %v5958, %v6022
        %6024 = vmatmul.f32.gmra.mxu0 %v5596
        %v6025 = vpop.f32.mrf.mxu0
        %v6026 = vadd.f32 %v5961, %v6025
        %6027 = vmatmul.f32.gmra.mxu0 %v5601
        %v6028 = vpop.f32.mrf.mxu0
        %v6029 = vadd.f32 %v5964, %v6028
        %6030 = vmatmul.f32.gmra.mxu0 %v5606
        %v6031 = vpop.f32.mrf.mxu0
        %v6032 = vadd.f32 %v5967, %v6031
        %6033 = vmatmul.f32.gmra.mxu0 %v5611
        %v6034 = vpop.f32.mrf.mxu0
        %v6035 = vadd.f32 %v5970, %v6034
        %6036 = vmatmul.f32.gmra.mxu0 %v5616
        %v6037 = vpop.f32.mrf.mxu0
        %v6038 = vadd.f32 %v5973, %v6037
        %6039 = vmatmul.f32.gmra.mxu0 %v5621
        %v6040 = vpop.f32.mrf.mxu0
        %v6041 = vadd.f32 %v5976, %v6040
        %6042 = vmatmul.f32.gmra.mxu0 %v5626
        %v6043 = vpop.f32.mrf.mxu0
        %v6044 = vadd.f32 %v5979, %v6043
        %6045 = vmatmul.f32.gmra.mxu0 %v5631
        %v6046 = vpop.f32.mrf.mxu0
        %v6047 = vadd.f32 %v5982, %v6046
        %6048 = vmatmul.f32.gmra.mxu0 %v5636
        %v6049 = vpop.f32.mrf.mxu0
        %v6050 = vadd.f32 %v5985, %v6049
        %6051 = vmatmul.f32.gmra.mxu0 %v5641
        %v6052 = vpop.f32.mrf.mxu0
        %v6053 = vadd.f32 %v5988, %v6052
        %6054 = vmatmul.f32.gmra.mxu0 %v5646
        %v6055 = vpop.f32.mrf.mxu0
        %v6056 = vadd.f32 %v5991, %v6055
        %6057 = vmatmul.f32.gmra.mxu0 %v5651
        %v6058 = vpop.f32.mrf.mxu0
        %v6059 = vadd.f32 %v5994, %v6058
        %6060 = vdwg.mxu0
        %6061 = vst [vmem:[%s307] sm:$0xff] %v6014
        %6062 = vst [vmem:[%s307 + $0x8] sm:$0xff] %v6017
        %6063 = vst [vmem:[%s307 + $0x10] sm:$0xff] %v6020
        %6064 = vst [vmem:[%s307 + $0x18] sm:$0xff] %v6023
        %6065 = vst [vmem:[%s307 + $0x20] sm:$0xff] %v6026
        %6066 = vst [vmem:[%s307 + $0x28] sm:$0xff] %v6029
        %6067 = vst [vmem:[%s307 + $0x30] sm:$0xff] %v6032
        %6068 = vst [vmem:[%s307 + $0x38] sm:$0xff] %v6035
        %6069 = vst [vmem:[%s307 + $0x40] sm:$0xff] %v6038
        %6070 = vst [vmem:[%s307 + $0x48] sm:$0xff] %v6041
        %6071 = vst [vmem:[%s307 + $0x50] sm:$0xff] %v6044
        %6072 = vst [vmem:[%s307 + $0x58] sm:$0xff] %v6047
        %6073 = vst [vmem:[%s307 + $0x60] sm:$0xff] %v6050
        %6074 = vst [vmem:[%s307 + $0x68] sm:$0xff] %v6053
        %6075 = vst [vmem:[%s307 + $0x70] sm:$0xff] %v6056
        %6076 = vst [vmem:[%s307 + $0x78] sm:$0xff] %v6059
        %s6077 = sand.u32 %s142, 1
        %s6078 = scalar_lea.sflag [#allocation4], %s6077
        %s6079 = sand.u32 %s142, 1
        %s6080 = smul.addr %s6079, 128
        %s6081 = scalar_lea.vmem [#allocation11], %s6080
        // Predicated region
        $region61: #{tpu_custom_call.1} parent=39 // pred_check
          %p6082 = pneg %p152
        $region62: #{tpu_custom_call.1} parent=39 // pred_check_branch
          %6084 = sbr.rel (%p6082) target = $region64
        $region63: #{tpu_custom_call.1} parent=39 // pred_region
          %s6085 = smul.u32 16, %s24
          %6087 = vsyncadd %s6078, 0
          %s6088 = smul.addr %s6085, 8
          %s6089 = scalar_lea.hbm %s5, %s6088
          %s6090 = sshll.u32 %s6081, 4
          %s6091 = int_to_ptr.vmem [resolvable:$true] %s6090
          %s6092 = sshll.u32 %s6089, 4
          %s6093 = int_to_ptr.hbm [resolvable:$true] %s6092
          %6098 = dma.vmem_to_hbm [thread:$0]  %s6091, 2048, %s6093, %s6078, 128, 128, 8
        $region64: #{tpu_custom_call.1} parent=39 // pred_fallthru
          _
      $region40: #{tpu_custom_call.1} parent=5 // pred_fallthru
        _
      %p6099 = scmp.le.s32.totalorder 2, %s19
      // Predicated region
      $region65: #{tpu_custom_call.1} parent=5 // pred_check
        %p6100 = pneg %p6099
      $region66: #{tpu_custom_call.1} parent=5 // pred_check_branch
        %6102 = sbr.rel (%p6100) target = $region68
      $region67: #{tpu_custom_call.1} parent=5 // pred_region
        %s6103 = ssub.s32 %s19, 2
        // Predicated region
        $region69: #{tpu_custom_call.1} parent=67 // pred_check
          %p6104 = pneg %p158
        $region70: #{tpu_custom_call.1} parent=67 // pred_check_branch
          %6106 = sbr.rel (%p6104) target = $region72
        $region71: #{tpu_custom_call.1} parent=67 // pred_region
          %s6107 = sand.u32 %s143, 1
          %s6108 = scalar_lea.sflag [#allocation4], %s6107
          %s6109 = sand.u32 %s143, 1
          %s6110 = smul.addr %s6109, 128
          %s6111 = scalar_lea.vmem [#allocation11], %s6110
          %6113 = dma.done %s6108, 2048
        $region72: #{tpu_custom_call.1} parent=67 // pred_fallthru
          _
      $region68: #{tpu_custom_call.1} parent=5 // pred_fallthru
        _
    $region6: #{tpu_custom_call.1} parent=1 // loop_footer
      %s23 = sadd.s32 1, %s19
    $region7: #{tpu_custom_call.1} parent=1 // loop_footer_branch
      %18 = sbr.rel target = $region3
    $region8: #{tpu_custom_call.1} parent=1 // loop_exit
      _
    %6114 = vsyncpa [#allocation3], 1
    %s6115 = scalar_lea.sflag [#allocation3], 1
    %6116 = vsyncpa %s6115, 1
    %6117 = vsyncpa [#allocation6], 1
    %6118 = vsyncpa [#allocation9], 1
    %6119 = vsyncpa [#allocation4], 1
    %s6120 = scalar_lea.sflag [#allocation4], 1
    %6121 = vsyncpa %s6120, 1

</llo_original>
